<compile_context>
chip_gen: v6e
topology: v6e:2x2x1
jax: 0.10.0
libtpu: 0.0.40
codegen_flags: <defaults>
</compile_context>

<pallas_src>
import functools

import jax
import jax.numpy as jnp
from jax.experimental import pallas as pl
from jax.experimental.pallas import tpu as pltpu

BN_EPS = 1e-5
_BN_SCALE = 1.0 / (1.0 + BN_EPS) ** 0.5
_HI = jax.lax.Precision.HIGHEST
_LANE = 128


def _round_up(x, m):
    return ((x + m - 1) // m) * m


# ---------------------------------------------------------------------------
# Kernel helpers (run on loaded VMEM values inside the kernels)
# ---------------------------------------------------------------------------
def _bn_relu(h):
    # eval-mode BatchNorm1d (fresh stats -> pure eps rescale) + ReLU; dropout no-op.
    return jnp.maximum(h * _BN_SCALE, 0.0)


def _linear(x, w_ref, b_ref):
    # f32 operands, f32 accumulate.  (bf16 cast of x / w_ref[...] here is the
    # v6e/v7x throughput option; kept f32 for exact parity with the reference.)
    return jnp.dot(x, w_ref[...], preferred_element_type=jnp.float32) + b_ref[...]


# ---------------------------------------------------------------------------
# Pass 1: spurious encoder (encoder2).  Runs first so the z2 batch mean needed
# by the alpha path is a true full-batch mean even when the batch is tiled.
# Output slab layout (lane-packed, zero-padded to a multiple of 128 lanes):
#   [ qz2_m | qz2_v | z2 | 0...0 ]
# ---------------------------------------------------------------------------
def _encoder2_kernel(ns, x_ref, eps2_ref, fw_ref, we2, be2, wmv2, bmv2, out_ref):
    tb = x_ref.shape[0]
    x2 = x_ref[...] * (1.0 - fw_ref[...])
    h2 = _bn_relu(_linear(x2, we2, be2))
    mv = _linear(h2, wmv2, bmv2)                 # fused mean|logvar head
    qz2_m = mv[:, :ns]
    std2 = jnp.exp(0.5 * mv[:, ns:])             # == sqrt(exp(raw)), no overflow
    qz2_v = std2 * std2
    z2 = qz2_m + std2 * eps2_ref[...]
    pieces = [qz2_m, qz2_v, z2]
    pad = out_ref.shape[1] - 3 * ns
    if pad:
        pieces.append(jnp.zeros((tb, pad), jnp.float32))
    out_ref[...] = jnp.concatenate(pieces, axis=1)


# ---------------------------------------------------------------------------
# Pass 2: everything else.  Output slab layout (lane-packed, padded to 128):
#   [ qz1_m | qz1_v | z1 | x_up_rec1 | x_up_rec2 | x_down_rec |
#     x_down_rec_alpha | org_logit | org_prob | alpha_logit | alpha_prob | 0.. ]
# ---------------------------------------------------------------------------
def _main_kernel(nc,
                 x_ref, eps1_ref, z2_ref, fw_ref, ca_ref,
                 we1, be1, wmv1, bmv1,
                 wd1, bd1, wo1, bo1,
                 wd2, bd2, wo2, bo2,
                 wddc, wdds, bdd, wod, bod, wdn,
                 wp1, bp1, wp2, bp2,
                 out_ref):
    tb = x_ref.shape[0]
    x = x_ref[...]
    fw = fw_ref[...]

    # ----- causal branch: encoder1 (fused mean/logvar head) + decoder1_up -----
    h1 = _bn_relu(_linear(x * fw, we1, be1))
    mv = _linear(h1, wmv1, bmv1)
    qz1_m = mv[:, :nc]
    std1 = jnp.exp(0.5 * mv[:, nc:])
    qz1_v = std1 * std1
    z1 = qz1_m + std1 * eps1_ref[...]
    x_rec1 = _linear(_bn_relu(_linear(z1, wd1, bd1)), wo1, bo1)

    # ----- spurious branch: decoder2_up on z2 from pass 1 -----
    z2 = z2_ref[...]
    x_rec2 = _linear(_bn_relu(_linear(z2, wd2, bd2)), wo2, bo2)

    # ----- decoder_down + DPD -----
    # z1 @ Wdd_causal is reused by both the main and the alpha path; the shared
    # tail (wod/bod + DPD) runs once on a (2*tb, .) batch-stacked input.
    z1c = jnp.dot(z1, wddc[...], preferred_element_type=jnp.float32)
    pre_main = (z1c + jnp.dot(z2, wdds[...], preferred_element_type=jnp.float32)
                + bdd[...])
    pre_alpha = z1c + ca_ref[...]        # ca = mean_batch(z2) @ Wdd_spur + bdd

    def _tail(pre):
        x_down = _linear(_bn_relu(pre), wod, bod)
        hp = _bn_relu(_linear(x_down * wdn[...], wp1, bp1))
        logit = _linear(hp, wp2, bp2)
        return x_down, logit, jax.nn.sigmoid(logit)

    if tb % 8 == 0:
        xd2, lg2, pr2 = _tail(jnp.concatenate([pre_main, pre_alpha], axis=0))
        x_down, x_down_a = xd2[:tb], xd2[tb:]
        logit, logit_a = lg2[:tb], lg2[tb:]
        prob, prob_a = pr2[:tb], pr2[tb:]
    else:                                # tiny / ragged batch-tile fallback
        x_down, logit, prob = _tail(pre_main)
        x_down_a, logit_a, prob_a = _tail(pre_alpha)

    pieces = [qz1_m, qz1_v, z1, x_rec1, x_rec2, x_down, x_down_a,
              logit, prob, logit_a, prob_a]
    used = sum(p.shape[1] for p in pieces)
    pad = out_ref.shape[1] - used
    if pad:
        pieces.append(jnp.zeros((tb, pad), jnp.float32))
    out_ref[...] = jnp.concatenate(pieces, axis=1)


# ---------------------------------------------------------------------------
# Wrapper: batch-tiled grid, resident weights, lane-packed output slabs
# ---------------------------------------------------------------------------
def _pick_batch_tile(b, target):
    """Largest multiple-of-8 divisor of b that is <= target (else b itself)."""
    if b <= target:
        return b
    for tb in range(min(target, b), 7, -1):
        if b % tb == 0 and tb % 8 == 0:
            return tb
    return b


def _resident(a):
    # Full-array block with a constant index_map -> stays VMEM-resident.
    return pl.BlockSpec(a.shape, lambda i, _n=a.ndim: (0,) * _n)


def _split_slab(slab, widths):
    out, o = [], 0
    for w in widths:
        out.append(slab[:, o:o + w])
        o += w
    return out


def dualvae_forward(params, x_up, eps1, eps2, *, batch_tile=256):
    B, Du = x_up.shape
    NC = eps1.shape[1]
    NS = eps2.shape[1]
    Dd = params["wod"].shape[1]

    TB = _pick_batch_tile(B, batch_tile)
    nb = B // TB
    cparams = pltpu.CompilerParams(
        dimension_semantics=("parallel",),       # megacore batch sharding (v7x)
        vmem_limit_bytes=32 * 1024 * 1024,
    )

    def tiled(d):
        return pl.BlockSpec((TB, d), lambda i: (i, 0))

    # Feature masks computed once in the wrapper (not kernel outputs).
    feat_w_up = jax.nn.sigmoid(params["w_up"])   # (1, Du) soft causal mask
    feat_w_down = params["w_down"]               # (1, Dd) fixed ones

    # Fused mean|logvar encoder heads (one matmul per encoder).
    wmv1 = jnp.concatenate([params["wm1"], params["wv1"]], axis=1)
    bmv1 = jnp.concatenate([params["bm1"], params["bv1"]], axis=1)
    wmv2 = jnp.concatenate([params["wm2"], params["wv2"]], axis=1)
    bmv2 = jnp.concatenate([params["bm2"], params["bv2"]], axis=1)

    # -------- pass 1: encoder2 --------
    w1p = _round_up(3 * NS, _LANE)
    enc2_consts = [feat_w_up, params["we2"], params["be2"], wmv2, bmv2]
    enc2 = pl.pallas_call(
        functools.partial(_encoder2_kernel, NS),
        grid=(nb,),
        in_specs=[tiled(Du), tiled(NS)] + [_resident(a) for a in enc2_consts],
        out_specs=tiled(w1p),
        out_shape=jax.ShapeDtypeStruct((B, w1p), jnp.float32),
        compiler_params=cparams,
    )(x_up, eps2, *enc2_consts)
    qz2_m, qz2_v, z2 = _split_slab(enc2, [NS, NS, NS])

    # Full-batch z2 mean for the alpha path (stays correct under batch tiling);
    # the (1,NS) x (NS,H) row-vector work is negligible and stays in XLA.
    z2_mean = jnp.mean(z2, axis=0, keepdims=True)
    c_alpha = jnp.dot(z2_mean, params["wdd_s"], precision=_HI) + params["bdd"]

    # -------- pass 2: everything else --------
    main_consts = [
        feat_w_up, c_alpha,
        params["we1"], params["be1"], wmv1, bmv1,
        params["wd1"], params["bd1"], params["wo1"], params["bo1"],
        params["wd2"], params["bd2"], params["wo2"], params["bo2"],
        params["wdd_c"], params["wdd_s"], params["bdd"],
        params["wod"], params["bod"], feat_w_down,
        params["wp1"], params["bp1"], params["wp2"], params["bp2"],
    ]
    widths2 = [NC, NC, NC, Du, Du, Dd, Dd, 1, 1, 1, 1]
    w2p = _round_up(sum(widths2), _LANE)
    main = pl.pallas_call(
        functools.partial(_main_kernel, NC),
        grid=(nb,),
        in_specs=[tiled(Du), tiled(NC), tiled(NS)]
                 + [_resident(a) for a in main_consts],
        out_specs=tiled(w2p),
        out_shape=jax.ShapeDtypeStruct((B, w2p), jnp.float32),
        compiler_params=cparams,
    )(x_up, eps1, z2, *main_consts)

    (qz1_m, qz1_v, z1, x_up_rec1, x_up_rec2, x_down_rec, x_down_rec_alpha,
     org_logit, org_prob, alpha_logit, alpha_prob) = _split_slab(main, widths2)

    return dict(
        feat_w_up=feat_w_up, qz1_m=qz1_m, qz1_v=qz1_v, z1=z1,
        x_up_rec1=x_up_rec1, qz2_m=qz2_m, qz2_v=qz2_v, z2=z2,
        x_up_rec2=x_up_rec2, x_down_rec=x_down_rec,
        x_down_rec_alpha=x_down_rec_alpha, feat_w_down=feat_w_down,
        org_logit=org_logit, org_prob=org_prob,
        alpha_logit=alpha_logit, alpha_prob=alpha_prob,
    )


# ---------------------------------------------------------------------------
# Pure-JAX reference (same math, HIGHEST-precision matmuls) for the check
# ---------------------------------------------------------------------------
def dualvae_forward_ref(p, x, eps1, eps2):
    def lin(h, w, b):
        return jnp.dot(h, w, precision=_HI) + b

    def bnr(h):
        return jnp.maximum(h * _BN_SCALE, 0.0)

    fw = jax.nn.sigmoid(p["w_up"])
    h1 = bnr(lin(x * fw, p["we1"], p["be1"]))
    qz1m = lin(h1, p["wm1"], p["bm1"])
    qz1v = jnp.exp(lin(h1, p["wv1"], p["bv1"]))
    z1 = qz1m + jnp.sqrt(qz1v) * eps1
    xr1 = lin(bnr(lin(z1, p["wd1"], p["bd1"])), p["wo1"], p["bo1"])

    h2 = bnr(lin(x * (1.0 - fw), p["we2"], p["be2"]))
    qz2m = lin(h2, p["wm2"], p["bm2"])
    qz2v = jnp.exp(lin(h2, p["wv2"], p["bv2"]))
    z2 = qz2m + jnp.sqrt(qz2v) * eps2
    xr2 = lin(bnr(lin(z2, p["wd2"], p["bd2"])), p["wo2"], p["bo2"])

    pre = (jnp.dot(z1, p["wdd_c"], precision=_HI)
           + jnp.dot(z2, p["wdd_s"], precision=_HI) + p["bdd"])
    xd = lin(bnr(pre), p["wod"], p["bod"])
    fwd = p["w_down"]
    logit = lin(bnr(lin(xd * fwd, p["wp1"], p["bp1"])), p["wp2"], p["bp2"])

    z2m = jnp.mean(z2, axis=0, keepdims=True)
    pre_a = (jnp.dot(z1, p["wdd_c"], precision=_HI)
             + jnp.dot(z2m, p["wdd_s"], precision=_HI) + p["bdd"])
    xda = lin(bnr(pre_a), p["wod"], p["bod"])
    logit_a = lin(bnr(lin(xda * fwd, p["wp1"], p["bp1"])), p["wp2"], p["bp2"])

    return dict(feat_w_up=fw, qz1_m=qz1m, qz1_v=qz1v, z1=z1, x_up_rec1=xr1,
                qz2_m=qz2m, qz2_v=qz2v, z2=z2, x_up_rec2=xr2,
                x_down_rec=xd, x_down_rec_alpha=xda, feat_w_down=fwd,
                org_logit=logit, org_prob=jax.nn.sigmoid(logit),
                alpha_logit=logit_a, alpha_prob=jax.nn.sigmoid(logit_a))


# ---------------------------------------------------------------------------
# Deterministic parameter init (PyTorch-Linear-style uniform bounds)
# ---------------------------------------------------------------------------
def linear_init(key, fan_in, fan_out):
    kw, kb = jax.random.split(key)
    bound = 1.0 / (fan_in ** 0.5)
    W = jax.random.uniform(kw, (fan_in, fan_out), jnp.float32, -bound, bound)
    b = jax.random.uniform(kb, (1, fan_out), jnp.float32, -bound, bound)
    return W, b


def make_params(key, Du, Dd, H, NC, NS):
    keys = jax.random.split(key, 16)
    p = {}
    p["w_up"] = jax.random.uniform(keys[0], (1, Du), jnp.float32, -0.5, 0.5)
    p["we1"], p["be1"] = linear_init(keys[1], Du, H)
    p["wm1"], p["bm1"] = linear_init(keys[2], H, NC)
    p["wv1"], p["bv1"] = linear_init(keys[3], H, NC)
    p["wd1"], p["bd1"] = linear_init(keys[4], NC, H)
    p["wo1"], p["bo1"] = linear_init(keys[5], H, Du)
    p["we2"], p["be2"] = linear_init(keys[6], Du, H)
    p["wm2"], p["bm2"] = linear_init(keys[7], H, NS)
    p["wv2"], p["bv2"] = linear_init(keys[8], H, NS)
    p["wd2"], p["bd2"] = linear_init(keys[9], NS, H)
    p["wo2"], p["bo2"] = linear_init(keys[10], H, Du)
    wdd, p["bdd"] = linear_init(keys[11], NC + NS, H)
    p["wdd_c"], p["wdd_s"] = wdd[:NC, :], wdd[NC:, :]
    p["wod"], p["bod"] = linear_init(keys[12], H, Dd)
    p["w_down"] = jnp.ones((1, Dd), jnp.float32)   # FeatureWeight (not updated)
    p["wp1"], p["bp1"] = linear_init(keys[13], Dd, H)
    p["wp2"], p["bp2"] = linear_init(keys[14], H, 1)
    return p


if __name__ == "__main__":
    # Shapes consistent with DualVAE(n_input_up=32, n_input_down=16,
    # n_hidden=32, n_latent=8, n_causal=4); batch 64 tiled as 4 x 16.
    B, Du, Dd, H, NL, NC = 64, 32, 16, 32, 8, 4
    NS = NL - NC

    root = jax.random.PRNGKey(0)
    kp, kx, ke1, ke2 = jax.random.split(root, 4)
    params = make_params(kp, Du, Dd, H, NC, NS)
    x_up = jax.random.normal(kx, (B, Du), jnp.float32)
    eps1 = jax.random.normal(ke1, (B, NC), jnp.float32)
    eps2 = jax.random.normal(ke2, (B, NS), jnp.float32)

    fwd = jax.jit(dualvae_forward, static_argnames=("batch_tile",))
    out = fwd(params, x_up, eps1, eps2, batch_tile=16)
    jax.block_until_ready(out)

    ref = dualvae_forward_ref(params, x_up, eps1, eps2)
    for name, v in out.items():
        r = ref[name]
        assert v.shape == r.shape, (name, v.shape, r.shape)
        assert jnp.allclose(v, r, rtol=1e-4, atol=1e-4), (
            name, float(jnp.max(jnp.abs(v - r))))
    print("KERNEL_OK")
</pallas_src>

<mosaic_0001>
module attributes {stable_mosaic.version = 11 : i64} {
  func.func @_encoder2_kernel(%arg0: i32, %arg1: memref<16x32xf32, #tpu.memory_space<vmem>>, %arg2: memref<16x4xf32, #tpu.memory_space<vmem>>, %arg3: memref<1x32xf32, #tpu.memory_space<vmem>>, %arg4: memref<32x32xf32, #tpu.memory_space<vmem>>, %arg5: memref<1x32xf32, #tpu.memory_space<vmem>>, %arg6: memref<32x8xf32, #tpu.memory_space<vmem>>, %arg7: memref<1x8xf32, #tpu.memory_space<vmem>>, %arg8: memref<16x128xf32, #tpu.memory_space<vmem>>) attributes {dimension_semantics = [#tpu.dimension_semantics<parallel>], iteration_bounds = array<i64: 4>, scalar_prefetch = 0 : i64, scratch_operands = 0 : i64, tpu.core_type = #tpu.core_type<tc>, window_params = [{transform_indices = @transform_0, window_bounds = array<i64: 16, 32>}, {transform_indices = @transform_1, window_bounds = array<i64: 16, 4>}, {pipeline_mode = #tpu.pipeline_mode<synchronous>, transform_indices = @transform_2, window_bounds = array<i64: 1, 32>}, {pipeline_mode = #tpu.pipeline_mode<synchronous>, transform_indices = @transform_3, window_bounds = array<i64: 32, 32>}, {pipeline_mode = #tpu.pipeline_mode<synchronous>, transform_indices = @transform_4, window_bounds = array<i64: 1, 32>}, {pipeline_mode = #tpu.pipeline_mode<synchronous>, transform_indices = @transform_5, window_bounds = array<i64: 32, 8>}, {pipeline_mode = #tpu.pipeline_mode<synchronous>, transform_indices = @transform_6, window_bounds = array<i64: 1, 8>}, {transform_indices = @transform_7, window_bounds = array<i64: 16, 128>}]} {
    %c0 = arith.constant 0 : index
    %c0_0 = arith.constant 0 : index
    %0 = vector.load %arg1[%c0, %c0_0] : memref<16x32xf32, #tpu.memory_space<vmem>>, vector<16x32xf32>
    %c0_1 = arith.constant 0 : index
    %c0_2 = arith.constant 0 : index
    %1 = vector.load %arg3[%c0_1, %c0_2] : memref<1x32xf32, #tpu.memory_space<vmem>>, vector<1x32xf32>
    %cst = arith.constant 1.000000e+00 : f32
    %2 = vector.broadcast %cst : f32 to vector<1x32xf32>
    %3 = arith.subf %2, %1 : vector<1x32xf32>
    %4 = vector.broadcast %3 : vector<1x32xf32> to vector<16x32xf32>
    %5 = arith.mulf %0, %4 : vector<16x32xf32>
    %c0_3 = arith.constant 0 : index
    %c0_4 = arith.constant 0 : index
    %6 = vector.load %arg4[%c0_3, %c0_4] : memref<32x32xf32, #tpu.memory_space<vmem>>, vector<32x32xf32>
    %cst_5 = arith.constant dense<0.000000e+00> : vector<16x32xf32>
    %7 = tpu.matmul %5, %6, %cst_5 {dimension_numbers = #tpu.dot_dimension_numbers<[1], [0], [0], [1], [0, 0, 1, 1], [], []>} : vector<16x32xf32>, vector<32x32xf32>, vector<16x32xf32> -> vector<16x32xf32>
    %c0_6 = arith.constant 0 : index
    %c0_7 = arith.constant 0 : index
    %8 = vector.load %arg5[%c0_6, %c0_7] : memref<1x32xf32, #tpu.memory_space<vmem>>, vector<1x32xf32>
    %9 = vector.broadcast %8 : vector<1x32xf32> to vector<16x32xf32>
    %10 = arith.addf %7, %9 : vector<16x32xf32>
    %cst_8 = arith.constant 0.999994993 : f32
    %11 = vector.broadcast %cst_8 : f32 to vector<16x32xf32>
    %12 = arith.mulf %10, %11 : vector<16x32xf32>
    %cst_9 = arith.constant 0.000000e+00 : f32
    %13 = vector.broadcast %cst_9 : f32 to vector<16x32xf32>
    %14 = arith.maximumf %12, %13 : vector<16x32xf32>
    %c0_10 = arith.constant 0 : index
    %c0_11 = arith.constant 0 : index
    %15 = vector.load %arg6[%c0_10, %c0_11] : memref<32x8xf32, #tpu.memory_space<vmem>>, vector<32x8xf32>
    %cst_12 = arith.constant dense<0.000000e+00> : vector<16x8xf32>
    %16 = tpu.matmul %14, %15, %cst_12 {dimension_numbers = #tpu.dot_dimension_numbers<[1], [0], [0], [1], [0, 0, 1, 1], [], []>} : vector<16x32xf32>, vector<32x8xf32>, vector<16x8xf32> -> vector<16x8xf32>
    %c0_13 = arith.constant 0 : index
    %c0_14 = arith.constant 0 : index
    %17 = vector.load %arg7[%c0_13, %c0_14] : memref<1x8xf32, #tpu.memory_space<vmem>>, vector<1x8xf32>
    %18 = vector.broadcast %17 : vector<1x8xf32> to vector<16x8xf32>
    %19 = arith.addf %16, %18 : vector<16x8xf32>
    %20 = vector.extract_strided_slice %19 {offsets = [0, 0], sizes = [16, 4], strides = [1, 1]} : vector<16x8xf32> to vector<16x4xf32>
    %21 = vector.extract_strided_slice %19 {offsets = [0, 4], sizes = [16, 4], strides = [1, 1]} : vector<16x8xf32> to vector<16x4xf32>
    %cst_15 = arith.constant 5.000000e-01 : f32
    %22 = vector.broadcast %cst_15 : f32 to vector<16x4xf32>
    %23 = arith.mulf %22, %21 : vector<16x4xf32>
    %24 = math.exp %23 : vector<16x4xf32>
    %25 = arith.mulf %24, %24 : vector<16x4xf32>
    %c0_16 = arith.constant 0 : index
    %c0_17 = arith.constant 0 : index
    %26 = vector.load %arg2[%c0_16, %c0_17] : memref<16x4xf32, #tpu.memory_space<vmem>>, vector<16x4xf32>
    %27 = arith.mulf %24, %26 : vector<16x4xf32>
    %28 = arith.addf %20, %27 : vector<16x4xf32>
    %cst_18 = arith.constant 0.000000e+00 : f32
    %29 = vector.broadcast %cst_18 : f32 to vector<16x116xf32>
    %30 = tpu.concatenate %20, %25, %28, %29 in 1 : vector<16x4xf32>, vector<16x4xf32>, vector<16x4xf32>, vector<16x116xf32> -> vector<16x128xf32>
    %c0_19 = arith.constant 0 : index
    %c0_20 = arith.constant 0 : index
    %31 = vector.load %arg8[%c0_19, %c0_20] : memref<16x128xf32, #tpu.memory_space<vmem>>, vector<16x128xf32>
    tpu.vector_store %arg8[%c0_19, %c0_20], %30 {strides = array<i32>} : memref<16x128xf32, #tpu.memory_space<vmem>>, vector<16x128xf32>,
    return
  }
  func.func @transform_0(%arg0: i32) -> (i32, i32) {
    %c0_i32 = arith.constant 0 : i32
    %c0_i32_0 = arith.constant 0 : i32
    return %arg0, %c0_i32 : i32, i32
  }
  func.func @transform_1(%arg0: i32) -> (i32, i32) {
    %c0_i32 = arith.constant 0 : i32
    %c0_i32_0 = arith.constant 0 : i32
    return %arg0, %c0_i32 : i32, i32
  }
  func.func @transform_2(%arg0: i32) -> (i32, i32) {
    %c0_i32 = arith.constant 0 : i32
    %c0_i32_0 = arith.constant 0 : i32
    %c0_i32_1 = arith.constant 0 : i32
    return %c0_i32, %c0_i32_0 : i32, i32
  }
  func.func @transform_3(%arg0: i32) -> (i32, i32) {
    %c0_i32 = arith.constant 0 : i32
    %c0_i32_0 = arith.constant 0 : i32
    %c0_i32_1 = arith.constant 0 : i32
    return %c0_i32, %c0_i32_0 : i32, i32
  }
  func.func @transform_4(%arg0: i32) -> (i32, i32) {
    %c0_i32 = arith.constant 0 : i32
    %c0_i32_0 = arith.constant 0 : i32
    %c0_i32_1 = arith.constant 0 : i32
    return %c0_i32, %c0_i32_0 : i32, i32
  }
  func.func @transform_5(%arg0: i32) -> (i32, i32) {
    %c0_i32 = arith.constant 0 : i32
    %c0_i32_0 = arith.constant 0 : i32
    %c0_i32_1 = arith.constant 0 : i32
    return %c0_i32, %c0_i32_0 : i32, i32
  }
  func.func @transform_6(%arg0: i32) -> (i32, i32) {
    %c0_i32 = arith.constant 0 : i32
    %c0_i32_0 = arith.constant 0 : i32
    %c0_i32_1 = arith.constant 0 : i32
    return %c0_i32, %c0_i32_0 : i32, i32
  }
  func.func @transform_7(%arg0: i32) -> (i32, i32) {
    %c0_i32 = arith.constant 0 : i32
    %c0_i32_0 = arith.constant 0 : i32
    return %arg0, %c0_i32 : i32, i32
  }
}

module attributes {stable_mosaic.version = 11 : i64} {
  func.func @_main_kernel(%arg0: i32, %arg1: memref<16x32xf32, #tpu.memory_space<vmem>>, %arg2: memref<16x4xf32, #tpu.memory_space<vmem>>, %arg3: memref<16x4xf32, #tpu.memory_space<vmem>>, %arg4: memref<1x32xf32, #tpu.memory_space<vmem>>, %arg5: memref<1x32xf32, #tpu.memory_space<vmem>>, %arg6: memref<32x32xf32, #tpu.memory_space<vmem>>, %arg7: memref<1x32xf32, #tpu.memory_space<vmem>>, %arg8: memref<32x8xf32, #tpu.memory_space<vmem>>, %arg9: memref<1x8xf32, #tpu.memory_space<vmem>>, %arg10: memref<4x32xf32, #tpu.memory_space<vmem>>, %arg11: memref<1x32xf32, #tpu.memory_space<vmem>>, %arg12: memref<32x32xf32, #tpu.memory_space<vmem>>, %arg13: memref<1x32xf32, #tpu.memory_space<vmem>>, %arg14: memref<4x32xf32, #tpu.memory_space<vmem>>, %arg15: memref<1x32xf32, #tpu.memory_space<vmem>>, %arg16: memref<32x32xf32, #tpu.memory_space<vmem>>, %arg17: memref<1x32xf32, #tpu.memory_space<vmem>>, %arg18: memref<4x32xf32, #tpu.memory_space<vmem>>, %arg19: memref<4x32xf32, #tpu.memory_space<vmem>>, %arg20: memref<1x32xf32, #tpu.memory_space<vmem>>, %arg21: memref<32x16xf32, #tpu.memory_space<vmem>>, %arg22: memref<1x16xf32, #tpu.memory_space<vmem>>, %arg23: memref<1x16xf32, #tpu.memory_space<vmem>>, %arg24: memref<16x32xf32, #tpu.memory_space<vmem>>, %arg25: memref<1x32xf32, #tpu.memory_space<vmem>>, %arg26: memref<32x1xf32, #tpu.memory_space<vmem>>, %arg27: memref<1x1xf32, #tpu.memory_space<vmem>>, %arg28: memref<16x128xf32, #tpu.memory_space<vmem>>) attributes {dimension_semantics = [#tpu.dimension_semantics<parallel>], iteration_bounds = array<i64: 4>, scalar_prefetch = 0 : i64, scratch_operands = 0 : i64, tpu.core_type = #tpu.core_type<tc>, window_params = [{transform_indices = @transform_0, window_bounds = array<i64: 16, 32>}, {transform_indices = @transform_1, window_bounds = array<i64: 16, 4>}, {transform_indices = @transform_2, window_bounds = array<i64: 16, 4>}, {pipeline_mode = #tpu.pipeline_mode<synchronous>, transform_indices = @transform_3, window_bounds = array<i64: 1, 32>}, {pipeline_mode = #tpu.pipeline_mode<synchronous>, transform_indices = @transform_4, window_bounds = array<i64: 1, 32>}, {pipeline_mode = #tpu.pipeline_mode<synchronous>, transform_indices = @transform_5, window_bounds = array<i64: 32, 32>}, {pipeline_mode = #tpu.pipeline_mode<synchronous>, transform_indices = @transform_6, window_bounds = array<i64: 1, 32>}, {pipeline_mode = #tpu.pipeline_mode<synchronous>, transform_indices = @transform_7, window_bounds = array<i64: 32, 8>}, {pipeline_mode = #tpu.pipeline_mode<synchronous>, transform_indices = @transform_8, window_bounds = array<i64: 1, 8>}, {pipeline_mode = #tpu.pipeline_mode<synchronous>, transform_indices = @transform_9, window_bounds = array<i64: 4, 32>}, {pipeline_mode = #tpu.pipeline_mode<synchronous>, transform_indices = @transform_10, window_bounds = array<i64: 1, 32>}, {pipeline_mode = #tpu.pipeline_mode<synchronous>, transform_indices = @transform_11, window_bounds = array<i64: 32, 32>}, {pipeline_mode = #tpu.pipeline_mode<synchronous>, transform_indices = @transform_12, window_bounds = array<i64: 1, 32>}, {pipeline_mode = #tpu.pipeline_mode<synchronous>, transform_indices = @transform_13, window_bounds = array<i64: 4, 32>}, {pipeline_mode = #tpu.pipeline_mode<synchronous>, transform_indices = @transform_14, window_bounds = array<i64: 1, 32>}, {pipeline_mode = #tpu.pipeline_mode<synchronous>, transform_indices = @transform_15, window_bounds = array<i64: 32, 32>}, {pipeline_mode = #tpu.pipeline_mode<synchronous>, transform_indices = @transform_16, window_bounds = array<i64: 1, 32>}, {pipeline_mode = #tpu.pipeline_mode<synchronous>, transform_indices = @transform_17, window_bounds = array<i64: 4, 32>}, {pipeline_mode = #tpu.pipeline_mode<synchronous>, transform_indices = @transform_18, window_bounds = array<i64: 4, 32>}, {pipeline_mode = #tpu.pipeline_mode<synchronous>, transform_indices = @transform_19, window_bounds = array<i64: 1, 32>}, {pipeline_mode = #tpu.pipeline_mode<synchronous>, transform_indices = @transform_20, window_bounds = array<i64: 32, 16>}, {pipeline_mode = #tpu.pipeline_mode<synchronous>, transform_indices = @transform_21, window_bounds = array<i64: 1, 16>}, {pipeline_mode = #tpu.pipeline_mode<synchronous>, transform_indices = @transform_22, window_bounds = array<i64: 1, 16>}, {pipeline_mode = #tpu.pipeline_mode<synchronous>, transform_indices = @transform_23, window_bounds = array<i64: 16, 32>}, {pipeline_mode = #tpu.pipeline_mode<synchronous>, transform_indices = @transform_24, window_bounds = array<i64: 1, 32>}, {pipeline_mode = #tpu.pipeline_mode<synchronous>, transform_indices = @transform_25, window_bounds = array<i64: 32, 1>}, {pipeline_mode = #tpu.pipeline_mode<synchronous>, transform_indices = @transform_26, window_bounds = array<i64: 1, 1>}, {transform_indices = @transform_27, window_bounds = array<i64: 16, 128>}]} {
    %c0 = arith.constant 0 : index
    %c0_0 = arith.constant 0 : index
    %0 = vector.load %arg1[%c0, %c0_0] : memref<16x32xf32, #tpu.memory_space<vmem>>, vector<16x32xf32>
    %c0_1 = arith.constant 0 : index
    %c0_2 = arith.constant 0 : index
    %1 = vector.load %arg4[%c0_1, %c0_2] : memref<1x32xf32, #tpu.memory_space<vmem>>, vector<1x32xf32>
    %2 = vector.broadcast %1 : vector<1x32xf32> to vector<16x32xf32>
    %3 = arith.mulf %0, %2 : vector<16x32xf32>
    %c0_3 = arith.constant 0 : index
    %c0_4 = arith.constant 0 : index
    %4 = vector.load %arg6[%c0_3, %c0_4] : memref<32x32xf32, #tpu.memory_space<vmem>>, vector<32x32xf32>
    %cst = arith.constant dense<0.000000e+00> : vector<16x32xf32>
    %5 = tpu.matmul %3, %4, %cst {dimension_numbers = #tpu.dot_dimension_numbers<[1], [0], [0], [1], [0, 0, 1, 1], [], []>} : vector<16x32xf32>, vector<32x32xf32>, vector<16x32xf32> -> vector<16x32xf32>
    %c0_5 = arith.constant 0 : index
    %c0_6 = arith.constant 0 : index
    %6 = vector.load %arg7[%c0_5, %c0_6] : memref<1x32xf32, #tpu.memory_space<vmem>>, vector<1x32xf32>
    %7 = vector.broadcast %6 : vector<1x32xf32> to vector<16x32xf32>
    %8 = arith.addf %5, %7 : vector<16x32xf32>
    %cst_7 = arith.constant 0.999994993 : f32
    %9 = vector.broadcast %cst_7 : f32 to vector<16x32xf32>
    %10 = arith.mulf %8, %9 : vector<16x32xf32>
    %cst_8 = arith.constant 0.000000e+00 : f32
    %11 = vector.broadcast %cst_8 : f32 to vector<16x32xf32>
    %12 = arith.maximumf %10, %11 : vector<16x32xf32>
    %c0_9 = arith.constant 0 : index
    %c0_10 = arith.constant 0 : index
    %13 = vector.load %arg8[%c0_9, %c0_10] : memref<32x8xf32, #tpu.memory_space<vmem>>, vector<32x8xf32>
    %cst_11 = arith.constant dense<0.000000e+00> : vector<16x8xf32>
    %14 = tpu.matmul %12, %13, %cst_11 {dimension_numbers = #tpu.dot_dimension_numbers<[1], [0], [0], [1], [0, 0, 1, 1], [], []>} : vector<16x32xf32>, vector<32x8xf32>, vector<16x8xf32> -> vector<16x8xf32>
    %c0_12 = arith.constant 0 : index
    %c0_13 = arith.constant 0 : index
    %15 = vector.load %arg9[%c0_12, %c0_13] : memref<1x8xf32, #tpu.memory_space<vmem>>, vector<1x8xf32>
    %16 = vector.broadcast %15 : vector<1x8xf32> to vector<16x8xf32>
    %17 = arith.addf %14, %16 : vector<16x8xf32>
    %18 = vector.extract_strided_slice %17 {offsets = [0, 0], sizes = [16, 4], strides = [1, 1]} : vector<16x8xf32> to vector<16x4xf32>
    %19 = vector.extract_strided_slice %17 {offsets = [0, 4], sizes = [16, 4], strides = [1, 1]} : vector<16x8xf32> to vector<16x4xf32>
    %cst_14 = arith.constant 5.000000e-01 : f32
    %20 = vector.broadcast %cst_14 : f32 to vector<16x4xf32>
    %21 = arith.mulf %20, %19 : vector<16x4xf32>
    %22 = math.exp %21 : vector<16x4xf32>
    %23 = arith.mulf %22, %22 : vector<16x4xf32>
    %c0_15 = arith.constant 0 : index
    %c0_16 = arith.constant 0 : index
    %24 = vector.load %arg2[%c0_15, %c0_16] : memref<16x4xf32, #tpu.memory_space<vmem>>, vector<16x4xf32>
    %25 = arith.mulf %22, %24 : vector<16x4xf32>
    %26 = arith.addf %18, %25 : vector<16x4xf32>
    %c0_17 = arith.constant 0 : index
    %c0_18 = arith.constant 0 : index
    %27 = vector.load %arg10[%c0_17, %c0_18] : memref<4x32xf32, #tpu.memory_space<vmem>>, vector<4x32xf32>
    %cst_19 = arith.constant dense<0.000000e+00> : vector<16x32xf32>
    %28 = tpu.matmul %26, %27, %cst_19 {dimension_numbers = #tpu.dot_dimension_numbers<[1], [0], [0], [1], [0, 0, 1, 1], [], []>} : vector<16x4xf32>, vector<4x32xf32>, vector<16x32xf32> -> vector<16x32xf32>
    %c0_20 = arith.constant 0 : index
    %c0_21 = arith.constant 0 : index
    %29 = vector.load %arg11[%c0_20, %c0_21] : memref<1x32xf32, #tpu.memory_space<vmem>>, vector<1x32xf32>
    %30 = vector.broadcast %29 : vector<1x32xf32> to vector<16x32xf32>
    %31 = arith.addf %28, %30 : vector<16x32xf32>
    %cst_22 = arith.constant 0.999994993 : f32
    %32 = vector.broadcast %cst_22 : f32 to vector<16x32xf32>
    %33 = arith.mulf %31, %32 : vector<16x32xf32>
    %cst_23 = arith.constant 0.000000e+00 : f32
    %34 = vector.broadcast %cst_23 : f32 to vector<16x32xf32>
    %35 = arith.maximumf %33, %34 : vector<16x32xf32>
    %c0_24 = arith.constant 0 : index
    %c0_25 = arith.constant 0 : index
    %36 = vector.load %arg12[%c0_24, %c0_25] : memref<32x32xf32, #tpu.memory_space<vmem>>, vector<32x32xf32>
    %cst_26 = arith.constant dense<0.000000e+00> : vector<16x32xf32>
    %37 = tpu.matmul %35, %36, %cst_26 {dimension_numbers = #tpu.dot_dimension_numbers<[1], [0], [0], [1], [0, 0, 1, 1], [], []>} : vector<16x32xf32>, vector<32x32xf32>, vector<16x32xf32> -> vector<16x32xf32>
    %c0_27 = arith.constant 0 : index
    %c0_28 = arith.constant 0 : index
    %38 = vector.load %arg13[%c0_27, %c0_28] : memref<1x32xf32, #tpu.memory_space<vmem>>, vector<1x32xf32>
    %39 = vector.broadcast %38 : vector<1x32xf32> to vector<16x32xf32>
    %40 = arith.addf %37, %39 : vector<16x32xf32>
    %c0_29 = arith.constant 0 : index
    %c0_30 = arith.constant 0 : index
    %41 = vector.load %arg3[%c0_29, %c0_30] : memref<16x4xf32, #tpu.memory_space<vmem>>, vector<16x4xf32>
    %c0_31 = arith.constant 0 : index
    %c0_32 = arith.constant 0 : index
    %42 = vector.load %arg14[%c0_31, %c0_32] : memref<4x32xf32, #tpu.memory_space<vmem>>, vector<4x32xf32>
    %cst_33 = arith.constant dense<0.000000e+00> : vector<16x32xf32>
    %43 = tpu.matmul %41, %42, %cst_33 {dimension_numbers = #tpu.dot_dimension_numbers<[1], [0], [0], [1], [0, 0, 1, 1], [], []>} : vector<16x4xf32>, vector<4x32xf32>, vector<16x32xf32> -> vector<16x32xf32>
    %c0_34 = arith.constant 0 : index
    %c0_35 = arith.constant 0 : index
    %44 = vector.load %arg15[%c0_34, %c0_35] : memref<1x32xf32, #tpu.memory_space<vmem>>, vector<1x32xf32>
    %45 = vector.broadcast %44 : vector<1x32xf32> to vector<16x32xf32>
    %46 = arith.addf %43, %45 : vector<16x32xf32>
    %cst_36 = arith.constant 0.999994993 : f32
    %47 = vector.broadcast %cst_36 : f32 to vector<16x32xf32>
    %48 = arith.mulf %46, %47 : vector<16x32xf32>
    %cst_37 = arith.constant 0.000000e+00 : f32
    %49 = vector.broadcast %cst_37 : f32 to vector<16x32xf32>
    %50 = arith.maximumf %48, %49 : vector<16x32xf32>
    %c0_38 = arith.constant 0 : index
    %c0_39 = arith.constant 0 : index
    %51 = vector.load %arg16[%c0_38, %c0_39] : memref<32x32xf32, #tpu.memory_space<vmem>>, vector<32x32xf32>
    %cst_40 = arith.constant dense<0.000000e+00> : vector<16x32xf32>
    %52 = tpu.matmul %50, %51, %cst_40 {dimension_numbers = #tpu.dot_dimension_numbers<[1], [0], [0], [1], [0, 0, 1, 1], [], []>} : vector<16x32xf32>, vector<32x32xf32>, vector<16x32xf32> -> vector<16x32xf32>
    %c0_41 = arith.constant 0 : index
    %c0_42 = arith.constant 0 : index
    %53 = vector.load %arg17[%c0_41, %c0_42] : memref<1x32xf32, #tpu.memory_space<vmem>>, vector<1x32xf32>
    %54 = vector.broadcast %53 : vector<1x32xf32> to vector<16x32xf32>
    %55 = arith.addf %52, %54 : vector<16x32xf32>
    %c0_43 = arith.constant 0 : index
    %c0_44 = arith.constant 0 : index
    %56 = vector.load %arg18[%c0_43, %c0_44] : memref<4x32xf32, #tpu.memory_space<vmem>>, vector<4x32xf32>
    %cst_45 = arith.constant dense<0.000000e+00> : vector<16x32xf32>
    %57 = tpu.matmul %26, %56, %cst_45 {dimension_numbers = #tpu.dot_dimension_numbers<[1], [0], [0], [1], [0, 0, 1, 1], [], []>} : vector<16x4xf32>, vector<4x32xf32>, vector<16x32xf32> -> vector<16x32xf32>
    %c0_46 = arith.constant 0 : index
    %c0_47 = arith.constant 0 : index
    %58 = vector.load %arg19[%c0_46, %c0_47] : memref<4x32xf32, #tpu.memory_space<vmem>>, vector<4x32xf32>
    %cst_48 = arith.constant dense<0.000000e+00> : vector<16x32xf32>
    %59 = tpu.matmul %41, %58, %cst_48 {dimension_numbers = #tpu.dot_dimension_numbers<[1], [0], [0], [1], [0, 0, 1, 1], [], []>} : vector<16x4xf32>, vector<4x32xf32>, vector<16x32xf32> -> vector<16x32xf32>
    %60 = arith.addf %57, %59 : vector<16x32xf32>
    %c0_49 = arith.constant 0 : index
    %c0_50 = arith.constant 0 : index
    %61 = vector.load %arg20[%c0_49, %c0_50] : memref<1x32xf32, #tpu.memory_space<vmem>>, vector<1x32xf32>
    %62 = vector.broadcast %61 : vector<1x32xf32> to vector<16x32xf32>
    %63 = arith.addf %60, %62 : vector<16x32xf32>
    %c0_51 = arith.constant 0 : index
    %c0_52 = arith.constant 0 : index
    %64 = vector.load %arg5[%c0_51, %c0_52] : memref<1x32xf32, #tpu.memory_space<vmem>>, vector<1x32xf32>
    %65 = vector.broadcast %64 : vector<1x32xf32> to vector<16x32xf32>
    %66 = arith.addf %57, %65 : vector<16x32xf32>
    %67 = tpu.concatenate %63, %66 in 0 : vector<16x32xf32>, vector<16x32xf32> -> vector<32x32xf32>
    %cst_53 = arith.constant 0.999994993 : f32
    %68 = vector.broadcast %cst_53 : f32 to vector<32x32xf32>
    %69 = arith.mulf %67, %68 : vector<32x32xf32>
    %cst_54 = arith.constant 0.000000e+00 : f32
    %70 = vector.broadcast %cst_54 : f32 to vector<32x32xf32>
    %71 = arith.maximumf %69, %70 : vector<32x32xf32>
    %c0_55 = arith.constant 0 : index
    %c0_56 = arith.constant 0 : index
    %72 = vector.load %arg21[%c0_55, %c0_56] : memref<32x16xf32, #tpu.memory_space<vmem>>, vector<32x16xf32>
    %cst_57 = arith.constant dense<0.000000e+00> : vector<32x16xf32>
    %73 = tpu.matmul %71, %72, %cst_57 {dimension_numbers = #tpu.dot_dimension_numbers<[1], [0], [0], [1], [0, 0, 1, 1], [], []>} : vector<32x32xf32>, vector<32x16xf32>, vector<32x16xf32> -> vector<32x16xf32>
    %c0_58 = arith.constant 0 : index
    %c0_59 = arith.constant 0 : index
    %74 = vector.load %arg22[%c0_58, %c0_59] : memref<1x16xf32, #tpu.memory_space<vmem>>, vector<1x16xf32>
    %75 = vector.broadcast %74 : vector<1x16xf32> to vector<32x16xf32>
    %76 = arith.addf %73, %75 : vector<32x16xf32>
    %c0_60 = arith.constant 0 : index
    %c0_61 = arith.constant 0 : index
    %77 = vector.load %arg23[%c0_60, %c0_61] : memref<1x16xf32, #tpu.memory_space<vmem>>, vector<1x16xf32>
    %78 = vector.broadcast %77 : vector<1x16xf32> to vector<32x16xf32>
    %79 = arith.mulf %76, %78 : vector<32x16xf32>
    %c0_62 = arith.constant 0 : index
    %c0_63 = arith.constant 0 : index
    %80 = vector.load %arg24[%c0_62, %c0_63] : memref<16x32xf32, #tpu.memory_space<vmem>>, vector<16x32xf32>
    %cst_64 = arith.constant dense<0.000000e+00> : vector<32x32xf32>
    %81 = tpu.matmul %79, %80, %cst_64 {dimension_numbers = #tpu.dot_dimension_numbers<[1], [0], [0], [1], [0, 0, 1, 1], [], []>} : vector<32x16xf32>, vector<16x32xf32>, vector<32x32xf32> -> vector<32x32xf32>
    %c0_65 = arith.constant 0 : index
    %c0_66 = arith.constant 0 : index
    %82 = vector.load %arg25[%c0_65, %c0_66] : memref<1x32xf32, #tpu.memory_space<vmem>>, vector<1x32xf32>
    %83 = vector.broadcast %82 : vector<1x32xf32> to vector<32x32xf32>
    %84 = arith.addf %81, %83 : vector<32x32xf32>
    %cst_67 = arith.constant 0.999994993 : f32
    %85 = vector.broadcast %cst_67 : f32 to vector<32x32xf32>
    %86 = arith.mulf %84, %85 : vector<32x32xf32>
    %cst_68 = arith.constant 0.000000e+00 : f32
    %87 = vector.broadcast %cst_68 : f32 to vector<32x32xf32>
    %88 = arith.maximumf %86, %87 : vector<32x32xf32>
    %c0_69 = arith.constant 0 : index
    %c0_70 = arith.constant 0 : index
    %89 = vector.load %arg26[%c0_69, %c0_70] : memref<32x1xf32, #tpu.memory_space<vmem>>, vector<32x1xf32>
    %cst_71 = arith.constant dense<0.000000e+00> : vector<32x1xf32>
    %90 = tpu.matmul %88, %89, %cst_71 {dimension_numbers = #tpu.dot_dimension_numbers<[1], [0], [0], [1], [0, 0, 1, 1], [], []>} : vector<32x32xf32>, vector<32x1xf32>, vector<32x1xf32> -> vector<32x1xf32>
    %c0_72 = arith.constant 0 : index
    %c0_73 = arith.constant 0 : index
    %91 = vector.load %arg27[%c0_72, %c0_73] : memref<1x1xf32, #tpu.memory_space<vmem>>, vector<1x1xf32>
    %92 = vector.broadcast %91 : vector<1x1xf32> to vector<32x1xf32>
    %93 = arith.addf %90, %92 : vector<32x1xf32>
    %94 = arith.negf %93 : vector<32x1xf32>
    %95 = math.exp %94 : vector<32x1xf32>
    %cst_74 = arith.constant 1.000000e+00 : f32
    %96 = vector.broadcast %cst_74 : f32 to vector<32x1xf32>
    %97 = arith.addf %96, %95 : vector<32x1xf32>
    %98 = arith.divf %96, %97 : vector<32x1xf32>
    %99 = vector.extract_strided_slice %76 {offsets = [0, 0], sizes = [16, 16], strides = [1, 1]} : vector<32x16xf32> to vector<16x16xf32>
    %100 = vector.extract_strided_slice %76 {offsets = [16, 0], sizes = [16, 16], strides = [1, 1]} : vector<32x16xf32> to vector<16x16xf32>
    %101 = vector.extract_strided_slice %93 {offsets = [0, 0], sizes = [16, 1], strides = [1, 1]} : vector<32x1xf32> to vector<16x1xf32>
    %102 = vector.extract_strided_slice %93 {offsets = [16, 0], sizes = [16, 1], strides = [1, 1]} : vector<32x1xf32> to vector<16x1xf32>
    %103 = vector.extract_strided_slice %98 {offsets = [0, 0], sizes = [16, 1], strides = [1, 1]} : vector<32x1xf32> to vector<16x1xf32>
    %104 = vector.extract_strided_slice %98 {offsets = [16, 0], sizes = [16, 1], strides = [1, 1]} : vector<32x1xf32> to vector<16x1xf32>
    %cst_75 = arith.constant 0.000000e+00 : f32
    %105 = vector.broadcast %cst_75 : f32 to vector<16x16xf32>
    %106 = tpu.concatenate %18, %23, %26, %40, %55, %99, %100, %101, %103, %102, %104, %105 in 1 : vector<16x4xf32>, vector<16x4xf32>, vector<16x4xf32>, vector<16x32xf32>, vector<16x32xf32>, vector<16x16xf32>, vector<16x16xf32>, vector<16x1xf32>, vector<16x1xf32>, vector<16x1xf32>, vector<16x1xf32>, vector<16x16xf32> -> vector<16x128xf32>
    %c0_76 = arith.constant 0 : index
    %c0_77 = arith.constant 0 : index
    %107 = vector.load %arg28[%c0_76, %c0_77] : memref<16x128xf32, #tpu.memory_space<vmem>>, vector<16x128xf32>
    tpu.vector_store %arg28[%c0_76, %c0_77], %106 {strides = array<i32>} : memref<16x128xf32, #tpu.memory_space<vmem>>, vector<16x128xf32>,
    return
  }
  func.func @transform_0(%arg0: i32) -> (i32, i32) {
    %c0_i32 = arith.constant 0 : i32
    %c0_i32_0 = arith.constant 0 : i32
    return %arg0, %c0_i32 : i32, i32
  }
  func.func @transform_1(%arg0: i32) -> (i32, i32) {
    %c0_i32 = arith.constant 0 : i32
    %c0_i32_0 = arith.constant 0 : i32
    return %arg0, %c0_i32 : i32, i32
  }
  func.func @transform_2(%arg0: i32) -> (i32, i32) {
    %c0_i32 = arith.constant 0 : i32
    %c0_i32_0 = arith.constant 0 : i32
    return %arg0, %c0_i32 : i32, i32
  }
  func.func @transform_3(%arg0: i32) -> (i32, i32) {
    %c0_i32 = arith.constant 0 : i32
    %c0_i32_0 = arith.constant 0 : i32
    %c0_i32_1 = arith.constant 0 : i32
    return %c0_i32, %c0_i32_0 : i32, i32
  }
  func.func @transform_4(%arg0: i32) -> (i32, i32) {
    %c0_i32 = arith.constant 0 : i32
    %c0_i32_0 = arith.constant 0 : i32
    %c0_i32_1 = arith.constant 0 : i32
    return %c0_i32, %c0_i32_0 : i32, i32
  }
  func.func @transform_5(%arg0: i32) -> (i32, i32) {
    %c0_i32 = arith.constant 0 : i32
    %c0_i32_0 = arith.constant 0 : i32
    %c0_i32_1 = arith.constant 0 : i32
    return %c0_i32, %c0_i32_0 : i32, i32
  }
  func.func @transform_6(%arg0: i32) -> (i32, i32) {
    %c0_i32 = arith.constant 0 : i32
    %c0_i32_0 = arith.constant 0 : i32
    %c0_i32_1 = arith.constant 0 : i32
    return %c0_i32, %c0_i32_0 : i32, i32
  }
  func.func @transform_7(%arg0: i32) -> (i32, i32) {
    %c0_i32 = arith.constant 0 : i32
    %c0_i32_0 = arith.constant 0 : i32
    %c0_i32_1 = arith.constant 0 : i32
    return %c0_i32, %c0_i32_0 : i32, i32
  }
  func.func @transform_8(%arg0: i32) -> (i32, i32) {
    %c0_i32 = arith.constant 0 : i32
    %c0_i32_0 = arith.constant 0 : i32
    %c0_i32_1 = arith.constant 0 : i32
    return %c0_i32, %c0_i32_0 : i32, i32
  }
  func.func @transform_9(%arg0: i32) -> (i32, i32) {
    %c0_i32 = arith.constant 0 : i32
    %c0_i32_0 = arith.constant 0 : i32
    %c0_i32_1 = arith.constant 0 : i32
    return %c0_i32, %c0_i32_0 : i32, i32
  }
  func.func @transform_10(%arg0: i32) -> (i32, i32) {
    %c0_i32 = arith.constant 0 : i32
    %c0_i32_0 = arith.constant 0 : i32
    %c0_i32_1 = arith.constant 0 : i32
    return %c0_i32, %c0_i32_0 : i32, i32
  }
  func.func @transform_11(%arg0: i32) -> (i32, i32) {
    %c0_i32 = arith.constant 0 : i32
    %c0_i32_0 = arith.constant 0 : i32
    %c0_i32_1 = arith.constant 0 : i32
    return %c0_i32, %c0_i32_0 : i32, i32
  }
  func.func @transform_12(%arg0: i32) -> (i32, i32) {
    %c0_i32 = arith.constant 0 : i32
    %c0_i32_0 = arith.constant 0 : i32
    %c0_i32_1 = arith.constant 0 : i32
    return %c0_i32, %c0_i32_0 : i32, i32
  }
  func.func @transform_13(%arg0: i32) -> (i32, i32) {
    %c0_i32 = arith.constant 0 : i32
    %c0_i32_0 = arith.constant 0 : i32
    %c0_i32_1 = arith.constant 0 : i32
    return %c0_i32, %c0_i32_0 : i32, i32
  }
  func.func @transform_14(%arg0: i32) -> (i32, i32) {
    %c0_i32 = arith.constant 0 : i32
    %c0_i32_0 = arith.constant 0 : i32
    %c0_i32_1 = arith.constant 0 : i32
    return %c0_i32, %c0_i32_0 : i32, i32
  }
  func.func @transform_15(%arg0: i32) -> (i32, i32) {
    %c0_i32 = arith.constant 0 : i32
    %c0_i32_0 = arith.constant 0 : i32
    %c0_i32_1 = arith.constant 0 : i32
    return %c0_i32, %c0_i32_0 : i32, i32
  }
  func.func @transform_16(%arg0: i32) -> (i32, i32) {
    %c0_i32 = arith.constant 0 : i32
    %c0_i32_0 = arith.constant 0 : i32
    %c0_i32_1 = arith.constant 0 : i32
    return %c0_i32, %c0_i32_0 : i32, i32
  }
  func.func @transform_17(%arg0: i32) -> (i32, i32) {
    %c0_i32 = arith.constant 0 : i32
    %c0_i32_0 = arith.constant 0 : i32
    %c0_i32_1 = arith.constant 0 : i32
    return %c0_i32, %c0_i32_0 : i32, i32
  }
  func.func @transform_18(%arg0: i32) -> (i32, i32) {
    %c0_i32 = arith.constant 0 : i32
    %c0_i32_0 = arith.constant 0 : i32
    %c0_i32_1 = arith.constant 0 : i32
    return %c0_i32, %c0_i32_0 : i32, i32
  }
  func.func @transform_19(%arg0: i32) -> (i32, i32) {
    %c0_i32 = arith.constant 0 : i32
    %c0_i32_0 = arith.constant 0 : i32
    %c0_i32_1 = arith.constant 0 : i32
    return %c0_i32, %c0_i32_0 : i32, i32
  }
  func.func @transform_20(%arg0: i32) -> (i32, i32) {
    %c0_i32 = arith.constant 0 : i32
    %c0_i32_0 = arith.constant 0 : i32
    %c0_i32_1 = arith.constant 0 : i32
    return %c0_i32, %c0_i32_0 : i32, i32
  }
  func.func @transform_21(%arg0: i32) -> (i32, i32) {
    %c0_i32 = arith.constant 0 : i32
    %c0_i32_0 = arith.constant 0 : i32
    %c0_i32_1 = arith.constant 0 : i32
    return %c0_i32, %c0_i32_0 : i32, i32
  }
  func.func @transform_22(%arg0: i32) -> (i32, i32) {
    %c0_i32 = arith.constant 0 : i32
    %c0_i32_0 = arith.constant 0 : i32
    %c0_i32_1 = arith.constant 0 : i32
    return %c0_i32, %c0_i32_0 : i32, i32
  }
  func.func @transform_23(%arg0: i32) -> (i32, i32) {
    %c0_i32 = arith.constant 0 : i32
    %c0_i32_0 = arith.constant 0 : i32
    %c0_i32_1 = arith.constant 0 : i32
    return %c0_i32, %c0_i32_0 : i32, i32
  }
  func.func @transform_24(%arg0: i32) -> (i32, i32) {
    %c0_i32 = arith.constant 0 : i32
    %c0_i32_0 = arith.constant 0 : i32
    %c0_i32_1 = arith.constant 0 : i32
    return %c0_i32, %c0_i32_0 : i32, i32
  }
  func.func @transform_25(%arg0: i32) -> (i32, i32) {
    %c0_i32 = arith.constant 0 : i32
    %c0_i32_0 = arith.constant 0 : i32
    %c0_i32_1 = arith.constant 0 : i32
    return %c0_i32, %c0_i32_0 : i32, i32
  }
  func.func @transform_26(%arg0: i32) -> (i32, i32) {
    %c0_i32 = arith.constant 0 : i32
    %c0_i32_0 = arith.constant 0 : i32
    %c0_i32_1 = arith.constant 0 : i32
    return %c0_i32, %c0_i32_0 : i32, i32
  }
  func.func @transform_27(%arg0: i32) -> (i32, i32) {
    %c0_i32 = arith.constant 0 : i32
    %c0_i32_0 = arith.constant 0 : i32
    return %arg0, %c0_i32 : i32, i32
  }
}

</mosaic_0001>

<llo_original>
// kernel: dualvae_forward.2
$region0: #{dualvae_forward.2}
  #allocation0 [shape = 'u32[]', space=smem, size = 0x4, offset = 0x4, fixed_abs, tag = 'smem constant byte address 0x4 - core index']
  #allocation1 [shape = 'u32[144,128]{1,0:T(1,128)}', space=vmem, size = 0x12000, scoped, tag = 'internal scratch']
  %s0 = inlined_call_operand.vmem [shape: f32[64,32], index: 0, kind: input, shape index: {}]
  %s1 = inlined_call_operand.vmem [shape: f32[64,4], index: 1, kind: input, shape index: {}]
  %s2 = inlined_call_operand.vmem [shape: f32[1,32], index: 2, kind: input, shape index: {}]
  %s3 = inlined_call_operand.vmem [shape: f32[32,32], index: 3, kind: input, shape index: {}]
  %s4 = inlined_call_operand.vmem [shape: f32[1,32], index: 4, kind: input, shape index: {}]
  %s5 = inlined_call_operand.vmem [shape: f32[32,8], index: 5, kind: input, shape index: {}]
  %s6 = inlined_call_operand.vmem [shape: f32[1,8], index: 6, kind: input, shape index: {}]
  %s7 = inlined_call_operand.vmem [shape: f32[64,128], index: 7, kind: output, shape index: {}]
  %s8 = sld [smem:[#allocation0]]
  $region61: #{dualvae_forward.2} parent=0
    _
  %s10 = ssub.s32 1, %s8
  %s11 = scalar_select 0, %s10, %s8
  loop: start=0, step=1, limit=6
  $region2: #{dualvae_forward.2} parent=0 // loop_pre_header
    _
  $region3: #{dualvae_forward.2} parent=0 // loop_header
    %s13 = sphi 0, %s17
    %p14 = scmp.ge.s32.totalorder %s13, 6
    %s23 = sphi 0, %s25
    %s26 = sphi 0, %s23
    %s27 = sphi 0, %s26
    %s43 = sphi 0, %s27
    %s49 = sphi 0, %s51
    %s52 = sphi 0, %s49
    %s53 = sphi 0, %s52
    %s69 = sphi 0, %s53
    %s73 = sphi 0, %s73
    %s75 = sphi 0, %s73
    %s76 = sphi 0, %s75
    %s90 = sphi 0, %s76
    %s94 = sphi 0, %s94
    %s96 = sphi 0, %s94
    %s97 = sphi 0, %s96
    %s111 = sphi 0, %s97
    %s115 = sphi 0, %s115
    %s117 = sphi 0, %s115
    %s118 = sphi 0, %s117
    %s132 = sphi 0, %s118
    %s136 = sphi 0, %s136
    %s138 = sphi 0, %s136
    %s139 = sphi 0, %s138
    %s153 = sphi 0, %s139
    %s157 = sphi 0, %s157
    %s159 = sphi 0, %s157
    %s160 = sphi 0, %s159
    %s174 = sphi 0, %s160
    %s180 = sphi 0, %s182
    %s183 = sphi 0, %s180
    %s184 = sphi 0, %s183
    %s200 = sphi 0, %s184
  $region4: #{dualvae_forward.2} parent=0 // loop_header_branch
    %16 = sbr.rel (%p14) target = $region8
  $region5: #{dualvae_forward.2} parent=0 // loop_body
    %s18 = ssub.s32 %s13, 1
    %s19 = ssub.s32 %s13, 2
    %s20 = sadd.s32 %s13, 1
    %s21 = ssub.s32 %s13, %s20
    %p22 = scmp.eq.s32.totalorder %s21, 0
    %s24 = sadd.s32 %s23, 1
    %s25 = scalar_select %p22, %s23, %s24
    %p28 = pneg %p22
    %p29 = scmp.eq.s32.totalorder %s13, 3
    %p30 = por %p28, %p29
    %p31 = scmp.ne.s32.totalorder %s23, %s26
    %p32 = scmp.eq.s32.totalorder %s13, 0
    %p33 = por %p31, %p32
    %p34 = scmp.ne.s32.totalorder %s23, %s26
    %p35 = scmp.eq.s32.totalorder %s18, 3
    %p36 = por %p34, %p35
    %p37 = scmp.ne.s32.totalorder %s26, %s27
    %p38 = scmp.eq.s32.totalorder %s18, 0
    %p39 = por %p37, %p38
    %p40 = scmp.ne.s32.totalorder %s26, %s27
    %p41 = scmp.eq.s32.totalorder %s19, 3
    %p42 = por %p40, %p41
    %p44 = scmp.ne.s32.totalorder %s27, %s43
    %p45 = scmp.eq.s32.totalorder %s19, 0
    %p46 = por %p44, %p45
    %s47 = ssub.s32 %s13, %s20
    %p48 = scmp.eq.s32.totalorder %s47, 0
    %s50 = sadd.s32 %s49, 1
    %s51 = scalar_select %p48, %s49, %s50
    %p54 = pneg %p48
    %p55 = scmp.eq.s32.totalorder %s13, 3
    %p56 = por %p54, %p55
    %p57 = scmp.ne.s32.totalorder %s49, %s52
    %p58 = scmp.eq.s32.totalorder %s13, 0
    %p59 = por %p57, %p58
    %p60 = scmp.ne.s32.totalorder %s49, %s52
    %p61 = scmp.eq.s32.totalorder %s18, 3
    %p62 = por %p60, %p61
    %p63 = scmp.ne.s32.totalorder %s52, %s53
    %p64 = scmp.eq.s32.totalorder %s18, 0
    %p65 = por %p63, %p64
    %p66 = scmp.ne.s32.totalorder %s52, %s53
    %p67 = scmp.eq.s32.totalorder %s19, 3
    %p68 = por %p66, %p67
    %p70 = scmp.ne.s32.totalorder %s53, %s69
    %p71 = scmp.eq.s32.totalorder %s19, 0
    %p72 = por %p70, %p71
    %s74 = sadd.s32 %s73, 1
    %p77 = scmp.eq.s32.totalorder %s13, 3
    %p78 = scmp.ne.s32.totalorder %s73, %s75
    %p79 = scmp.eq.s32.totalorder %s13, 0
    %p80 = por %p78, %p79
    %p81 = scmp.ne.s32.totalorder %s73, %s75
    %p82 = scmp.eq.s32.totalorder %s18, 3
    %p83 = por %p81, %p82
    %p84 = scmp.ne.s32.totalorder %s75, %s76
    %p85 = scmp.eq.s32.totalorder %s18, 0
    %p86 = por %p84, %p85
    %p87 = scmp.ne.s32.totalorder %s75, %s76
    %p88 = scmp.eq.s32.totalorder %s19, 3
    %p89 = por %p87, %p88
    %p91 = scmp.ne.s32.totalorder %s76, %s90
    %p92 = scmp.eq.s32.totalorder %s19, 0
    %p93 = por %p91, %p92
    %s95 = sadd.s32 %s94, 1
    %p98 = scmp.eq.s32.totalorder %s13, 3
    %p99 = scmp.ne.s32.totalorder %s94, %s96
    %p100 = scmp.eq.s32.totalorder %s13, 0
    %p101 = por %p99, %p100
    %p102 = scmp.ne.s32.totalorder %s94, %s96
    %p103 = scmp.eq.s32.totalorder %s18, 3
    %p104 = por %p102, %p103
    %p105 = scmp.ne.s32.totalorder %s96, %s97
    %p106 = scmp.eq.s32.totalorder %s18, 0
    %p107 = por %p105, %p106
    %p108 = scmp.ne.s32.totalorder %s96, %s97
    %p109 = scmp.eq.s32.totalorder %s19, 3
    %p110 = por %p108, %p109
    %p112 = scmp.ne.s32.totalorder %s97, %s111
    %p113 = scmp.eq.s32.totalorder %s19, 0
    %p114 = por %p112, %p113
    %s116 = sadd.s32 %s115, 1
    %p119 = scmp.eq.s32.totalorder %s13, 3
    %p120 = scmp.ne.s32.totalorder %s115, %s117
    %p121 = scmp.eq.s32.totalorder %s13, 0
    %p122 = por %p120, %p121
    %p123 = scmp.ne.s32.totalorder %s115, %s117
    %p124 = scmp.eq.s32.totalorder %s18, 3
    %p125 = por %p123, %p124
    %p126 = scmp.ne.s32.totalorder %s117, %s118
    %p127 = scmp.eq.s32.totalorder %s18, 0
    %p128 = por %p126, %p127
    %p129 = scmp.ne.s32.totalorder %s117, %s118
    %p130 = scmp.eq.s32.totalorder %s19, 3
    %p131 = por %p129, %p130
    %p133 = scmp.ne.s32.totalorder %s118, %s132
    %p134 = scmp.eq.s32.totalorder %s19, 0
    %p135 = por %p133, %p134
    %s137 = sadd.s32 %s136, 1
    %p140 = scmp.eq.s32.totalorder %s13, 3
    %p141 = scmp.ne.s32.totalorder %s136, %s138
    %p142 = scmp.eq.s32.totalorder %s13, 0
    %p143 = por %p141, %p142
    %p144 = scmp.ne.s32.totalorder %s136, %s138
    %p145 = scmp.eq.s32.totalorder %s18, 3
    %p146 = por %p144, %p145
    %p147 = scmp.ne.s32.totalorder %s138, %s139
    %p148 = scmp.eq.s32.totalorder %s18, 0
    %p149 = por %p147, %p148
    %p150 = scmp.ne.s32.totalorder %s138, %s139
    %p151 = scmp.eq.s32.totalorder %s19, 3
    %p152 = por %p150, %p151
    %p154 = scmp.ne.s32.totalorder %s139, %s153
    %p155 = scmp.eq.s32.totalorder %s19, 0
    %p156 = por %p154, %p155
    %s158 = sadd.s32 %s157, 1
    %p161 = scmp.eq.s32.totalorder %s13, 3
    %p162 = scmp.ne.s32.totalorder %s157, %s159
    %p163 = scmp.eq.s32.totalorder %s13, 0
    %p164 = por %p162, %p163
    %p165 = scmp.ne.s32.totalorder %s157, %s159
    %p166 = scmp.eq.s32.totalorder %s18, 3
    %p167 = por %p165, %p166
    %p168 = scmp.ne.s32.totalorder %s159, %s160
    %p169 = scmp.eq.s32.totalorder %s18, 0
    %p170 = por %p168, %p169
    %p171 = scmp.ne.s32.totalorder %s159, %s160
    %p172 = scmp.eq.s32.totalorder %s19, 3
    %p173 = por %p171, %p172
    %p175 = scmp.ne.s32.totalorder %s160, %s174
    %p176 = scmp.eq.s32.totalorder %s19, 0
    %p177 = por %p175, %p176
    %s178 = ssub.s32 %s13, %s20
    %p179 = scmp.eq.s32.totalorder %s178, 0
    %s181 = sadd.s32 %s180, 1
    %s182 = scalar_select %p179, %s180, %s181
    %p185 = pneg %p179
    %p186 = scmp.eq.s32.totalorder %s13, 3
    %p187 = por %p185, %p186
    %p188 = scmp.ne.s32.totalorder %s180, %s183
    %p189 = scmp.eq.s32.totalorder %s13, 0
    %p190 = por %p188, %p189
    %p191 = scmp.ne.s32.totalorder %s180, %s183
    %p192 = scmp.eq.s32.totalorder %s18, 3
    %p193 = por %p191, %p192
    %p194 = scmp.ne.s32.totalorder %s183, %s184
    %p195 = scmp.eq.s32.totalorder %s18, 0
    %p196 = por %p194, %p195
    %p197 = scmp.ne.s32.totalorder %s183, %s184
    %p198 = scmp.eq.s32.totalorder %s19, 3
    %p199 = por %p197, %p198
    %p201 = scmp.ne.s32.totalorder %s184, %s200
    %p202 = scmp.eq.s32.totalorder %s19, 0
    %p203 = por %p201, %p202
    %p204 = scmp.le.s32.totalorder 1, %s13
    %p205 = scmp.lt.s32.totalorder %s13, 5
    %p206 = pnand %p204, %p205
    %p207 = pneg %p206
    // Predicated region
    $region9: #{dualvae_forward.2} parent=5 // pred_check
      _
    $region10: #{dualvae_forward.2} parent=5 // pred_check_branch
      %209 = sbr.rel (%p206) target = $region12
    $region11: #{dualvae_forward.2} parent=5 // pred_region
      %s210 = ssub.s32 %s13, 1
      // Predicated region
      $region13: #{dualvae_forward.2} parent=11 // pred_check
        %p211 = pneg %p86
      $region14: #{dualvae_forward.2} parent=11 // pred_check_branch
        %213 = sbr.rel (%p211) target = $region16
      $region15: #{dualvae_forward.2} parent=11 // pred_region
        _
      $region16: #{dualvae_forward.2} parent=11 // pred_fallthru
        _
      // Predicated region
      $region17: #{dualvae_forward.2} parent=11 // pred_check
        %p214 = pneg %p107
      $region18: #{dualvae_forward.2} parent=11 // pred_check_branch
        %216 = sbr.rel (%p214) target = $region20
      $region19: #{dualvae_forward.2} parent=11 // pred_region
        _
      $region20: #{dualvae_forward.2} parent=11 // pred_fallthru
        _
      // Predicated region
      $region21: #{dualvae_forward.2} parent=11 // pred_check
        %p217 = pneg %p128
      $region22: #{dualvae_forward.2} parent=11 // pred_check_branch
        %219 = sbr.rel (%p217) target = $region24
      $region23: #{dualvae_forward.2} parent=11 // pred_region
        _
      $region24: #{dualvae_forward.2} parent=11 // pred_fallthru
        _
      // Predicated region
      $region25: #{dualvae_forward.2} parent=11 // pred_check
        %p220 = pneg %p149
      $region26: #{dualvae_forward.2} parent=11 // pred_check_branch
        %222 = sbr.rel (%p220) target = $region28
      $region27: #{dualvae_forward.2} parent=11 // pred_region
        _
      $region28: #{dualvae_forward.2} parent=11 // pred_fallthru
        _
      // Predicated region
      $region29: #{dualvae_forward.2} parent=11 // pred_check
        %p223 = pneg %p170
      $region30: #{dualvae_forward.2} parent=11 // pred_check_branch
        %225 = sbr.rel (%p223) target = $region32
      $region31: #{dualvae_forward.2} parent=11 // pred_region
        _
      $region32: #{dualvae_forward.2} parent=11 // pred_fallthru
        _
    $region12: #{dualvae_forward.2} parent=5 // pred_fallthru
      _
    %p226 = scmp.lt.s32.totalorder %s13, 4
    // Predicated region
    $region33: #{dualvae_forward.2} parent=5 // pred_check
      %p227 = pneg %p226
    $region34: #{dualvae_forward.2} parent=5 // pred_check_branch
      %229 = sbr.rel (%p227) target = $region36
    $region35: #{dualvae_forward.2} parent=5 // pred_region
      // Predicated region
      $region37: #{dualvae_forward.2} parent=35 // pred_check
        %p230 = pneg %p33
      $region38: #{dualvae_forward.2} parent=35 // pred_check_branch
        %232 = sbr.rel (%p230) target = $region40
      $region39: #{dualvae_forward.2} parent=35 // pred_region
        %s233 = smul.u32 2, %s13
        %p234 = scmp.lt.s32.totalorder %s233, 7
        %s235 = scalar_select %p234, %s233, 7
        %s236 = smul.addr %s235, 8
        %s237 = scalar_lea.vmem %s0, %s236
        %s238 = smul.u32 2, %s13
      $region40: #{dualvae_forward.2} parent=35 // pred_fallthru
        _
      // Predicated region
      $region41: #{dualvae_forward.2} parent=35 // pred_check
        %p239 = pneg %p59
      $region42: #{dualvae_forward.2} parent=35 // pred_check_branch
        %241 = sbr.rel (%p239) target = $region44
      $region43: #{dualvae_forward.2} parent=35 // pred_region
        %s242 = smul.u32 2, %s13
        %p243 = scmp.lt.s32.totalorder %s242, 7
        %s244 = scalar_select %p243, %s242, 7
        %s245 = smul.addr %s244, 8
        %s246 = scalar_lea.vmem %s1, %s245
        %s247 = smul.u32 2, %s13
      $region44: #{dualvae_forward.2} parent=35 // pred_fallthru
        _
    $region36: #{dualvae_forward.2} parent=5 // pred_fallthru
      _
    %p248 = scmp.le.s32.totalorder 1, %s13
    %p249 = scmp.lt.s32.totalorder %s13, 5
    %p250 = pnand %p248, %p249
    %p251 = pneg %p250
    // Predicated region
    $region45: #{dualvae_forward.2} parent=5 // pred_check
      _
    $region46: #{dualvae_forward.2} parent=5 // pred_check_branch
      %253 = sbr.rel (%p250) target = $region48
    $region47: #{dualvae_forward.2} parent=5 // pred_region
      %s254 = ssub.s32 %s13, 1
      %s255 = smul.u32 2, %s18
      %p256 = scmp.lt.s32.totalorder %s255, 7
      %s257 = scalar_select %p256, %s255, 7
      %s258 = smul.addr %s257, 8
      %s259 = scalar_lea.vmem %s0, %s258
      %p260 = pneg %p39
      %p261 = pneg %p36
      %s262 = smul.u32 2, %s18
      %p263 = scmp.lt.s32.totalorder %s262, 7
      %s264 = scalar_select %p263, %s262, 7
      %s265 = smul.addr %s264, 8
      %s266 = scalar_lea.vmem %s1, %s265
      %p267 = pneg %p65
      %p268 = pneg %p62
      %p269 = pneg %p86
      %p270 = pneg %p83
      %p271 = pneg %p107
      %p272 = pneg %p104
      %p273 = pneg %p128
      %p274 = pneg %p125
      %p275 = pneg %p149
      %p276 = pneg %p146
      %p277 = pneg %p170
      %p278 = pneg %p167
      %p279 = pneg %p196
      %p280 = pneg %p193
      %s281 = smul.u32 2, %s18
      %p282 = scmp.lt.s32.totalorder %s281, 7
      %s283 = scalar_select %p282, %s281, 7
      %s284 = smul.addr %s283, 8
      %s285 = scalar_lea.vmem %s7, %s284
      %s286 = smul.u32 2, %s18
      %p287 = scmp.lt.s32.totalorder %s286, 7
      %s288 = scalar_select %p287, %s286, 7
      %s289 = smul.addr %s288, 8
      %s290 = scalar_lea.vmem %s0, %s289
      %s291 = smul.u32 2, %s18
      %s292 = smul.u32 2, %s18
      %p293 = scmp.lt.s32.totalorder %s292, 7
      %s294 = scalar_select %p293, %s292, 7
      %s295 = smul.addr %s294, 8
      %s296 = scalar_lea.vmem %s1, %s295
      %s297 = smul.u32 2, %s18
      %s298 = smul.u32 2, %s18
      %p299 = scmp.lt.s32.totalorder %s298, 7
      %s300 = scalar_select %p299, %s298, 7
      %s301 = smul.addr %s300, 8
      %s302 = scalar_lea.vmem %s7, %s301
      %s303 = smul.u32 2, %s18
      %v304 = vld [vmem:[%s290] sm:$0xff]
      %v305 = vld [vmem:[%s290 + $0x8] sm:$0xff]
      %v306 = vld [vmem:[%s2] sm:$0x1]
      %v307 = vsub.f32 1.0, %v306
      %v309 = vlaneseq
      %v310 = vshrl.u32 %v309, 7
      %v311 = vsub.s32 0, %v310
      %v312 = vrot.slane %v307, %v311
      %v314 = vmul.f32 %v304, %v312
      %v315 = vmul.f32 %v305, %v312
      %v316 = vld [vmem:[%s3] sm:$0xff]
      %v317 = vld [vmem:[%s3 + $0x8] sm:$0xff]
      %v318 = vld [vmem:[%s3 + $0x10] sm:$0xff]
      %v319 = vld [vmem:[%s3 + $0x18] sm:$0xff]
      %v320 = vld [vmem:[%s4] sm:$0x1]
      %v322 = vlaneseq
      %v323 = vshrl.u32 %v322, 7
      %v324 = vsub.s32 0, %v323
      %v325 = vrot.slane %v320, %v324
      %vm327 = vcmask 261120
      %v329 = vsel %vm327, %v314, 0
      %v332 = vsel %vm327, %v315, 0
      %334 = vmatprep.subr.mxu0 0.0
      %335 = vmatpush1.msra.mxu0 0.0
      %336 = vmatprep.subr.mxu0 0.0
      %337 = vmatpush1.msra.mxu0 0.0
      %338 = vmatprep.subr.mxu0 0.0
      %339 = vmatpush1.msra.mxu0 0.0
      %340 = vmatprep.subr.mxu0 0.0
      %341 = vmatpush1.msra.mxu0 0.0
      %342 = vmatprep.subr.mxu0 0.0
      %343 = vmatpush1.msra.mxu0 0.0
      %344 = vmatprep.subr.mxu0 0.0
      %345 = vmatpush1.msra.mxu0 0.0
      %346 = vmatprep.subr.mxu0 0.0
      %347 = vmatpush1.msra.mxu0 0.0
      %348 = vmatprep.subr.mxu0 0.0
      %349 = vmatpush1.msra.mxu0 0.0
      %350 = vmatprep.subr.mxu0 0.0
      %351 = vmatpush1.msra.mxu0 0.0
      %352 = vmatprep.subr.mxu0 0.0
      %353 = vmatpush1.msra.mxu0 0.0
      %354 = vmatprep.subr.mxu0 0.0
      %355 = vmatpush1.msra.mxu0 0.0
      %356 = vmatprep.subr.mxu0 0.0
      %357 = vmatpush1.msra.mxu0 0.0
      %358 = vmatprep.subr.mxu0 0.0
      %359 = vmatpush1.msra.mxu0 %v319
      %360 = vmatprep.subr.mxu0 0.0
      %361 = vmatpush1.msra.mxu0 %v318
      %362 = vmatprep.subr.mxu0 0.0
      %363 = vmatpush1.msra.mxu0 %v317
      %364 = vmatprep.subr.mxu0 0.0
      %365 = vmatpush1.msra.mxu0 %v316
      %366 = vmatprep.subr.mxu0 0.0
      %367 = vmatpush2.msra.mxu0 0.0
      %368 = vmatprep.subr.mxu0 0.0
      %369 = vmatpush2.msra.mxu0 0.0
      %370 = vmatprep.subr.mxu0 0.0
      %371 = vmatpush2.msra.mxu0 0.0
      %372 = vmatprep.subr.mxu0 0.0
      %373 = vmatpush2.msra.mxu0 0.0
      %374 = vmatprep.subr.mxu0 0.0
      %375 = vmatpush2.msra.mxu0 0.0
      %376 = vmatprep.subr.mxu0 0.0
      %377 = vmatpush2.msra.mxu0 0.0
      %378 = vmatprep.subr.mxu0 0.0
      %379 = vmatpush2.msra.mxu0 0.0
      %380 = vmatprep.subr.mxu0 0.0
      %381 = vmatpush2.msra.mxu0 0.0
      %382 = vmatprep.subr.mxu0 0.0
      %383 = vmatpush2.msra.mxu0 0.0
      %384 = vmatprep.subr.mxu0 0.0
      %385 = vmatpush2.msra.mxu0 0.0
      %386 = vmatprep.subr.mxu0 0.0
      %387 = vmatpush2.msra.mxu0 0.0
      %388 = vmatprep.subr.mxu0 0.0
      %389 = vmatpush2.msra.mxu0 0.0
      %390 = vmatprep.subr.mxu0 0.0
      %391 = vmatpush2.msra.mxu0 0.0
      %392 = vmatprep.subr.mxu0 0.0
      %393 = vmatpush2.msra.mxu0 0.0
      %394 = vmatprep.subr.mxu0 0.0
      %395 = vmatpush2.msra.mxu0 0.0
      %396 = vmatprep.subr.mxu0 0.0
      %397 = vmatpush2.msra.mxu0 0.0
      %398 = vmatprep.mubr.f32.mxu0 0.0
      %399 = vmatmul.mubr.f32.gmra.mxu0 %v329
      %v400 = vpop.f32.mrf.mxu0
      %v401 = vadd.f32 %v325, %v400
      %v402 = vpop.f32.mrf.mxu0
      %403 = vmatprep.mubr.f32.mxu0 0.0
      %404 = vmatmul.mubr.f32.gmra.mxu0 %v332
      %v405 = vpop.f32.mrf.mxu0
      %v406 = vadd.f32 %v325, %v405
      %v407 = vpop.f32.mrf.mxu0
      %408 = vdwg.mxu0
      %v409 = vmul.f32 %v401, 0.999995
      %v410 = vmul.f32 %v406, 0.999995
      %v411 = vmax.f32 %v409, 0.0
      %v412 = vmax.f32 %v410, 0.0
      %v413 = vld [vmem:[%s5] sm:$0xff]
      %v414 = vld [vmem:[%s5 + $0x8] sm:$0xff]
      %v415 = vld [vmem:[%s5 + $0x10] sm:$0xff]
      %v416 = vld [vmem:[%s5 + $0x18] sm:$0xff]
      %v417 = vld [vmem:[%s6] sm:$0x1]
      %v419 = vlaneseq
      %v420 = vshrl.u32 %v419, 7
      %v421 = vsub.s32 0, %v420
      %v422 = vrot.slane %v417, %v421
      %v425 = vsel %vm327, %v411, 0
      %v428 = vsel %vm327, %v412, 0
      %430 = vmatprep.subr.mxu0 0.0
      %431 = vmatpush1.msra.mxu0 0.0
      %432 = vmatprep.subr.mxu0 0.0
      %433 = vmatpush1.msra.mxu0 0.0
      %434 = vmatprep.subr.mxu0 0.0
      %435 = vmatpush1.msra.mxu0 0.0
      %436 = vmatprep.subr.mxu0 0.0
      %437 = vmatpush1.msra.mxu0 0.0
      %438 = vmatprep.subr.mxu0 0.0
      %439 = vmatpush1.msra.mxu0 0.0
      %440 = vmatprep.subr.mxu0 0.0
      %441 = vmatpush1.msra.mxu0 0.0
      %442 = vmatprep.subr.mxu0 0.0
      %443 = vmatpush1.msra.mxu0 0.0
      %444 = vmatprep.subr.mxu0 0.0
      %445 = vmatpush1.msra.mxu0 0.0
      %446 = vmatprep.subr.mxu0 0.0
      %447 = vmatpush1.msra.mxu0 0.0
      %448 = vmatprep.subr.mxu0 0.0
      %449 = vmatpush1.msra.mxu0 0.0
      %450 = vmatprep.subr.mxu0 0.0
      %451 = vmatpush1.msra.mxu0 0.0
      %452 = vmatprep.subr.mxu0 0.0
      %453 = vmatpush1.msra.mxu0 0.0
      %454 = vmatprep.subr.mxu0 0.0
      %455 = vmatpush1.msra.mxu0 %v416
      %456 = vmatprep.subr.mxu0 0.0
      %457 = vmatpush1.msra.mxu0 %v415
      %458 = vmatprep.subr.mxu0 0.0
      %459 = vmatpush1.msra.mxu0 %v414
      %460 = vmatprep.subr.mxu0 0.0
      %461 = vmatpush1.msra.mxu0 %v413
      %462 = vmatprep.subr.mxu0 0.0
      %463 = vmatpush2.msra.mxu0 0.0
      %464 = vmatprep.subr.mxu0 0.0
      %465 = vmatpush2.msra.mxu0 0.0
      %466 = vmatprep.subr.mxu0 0.0
      %467 = vmatpush2.msra.mxu0 0.0
      %468 = vmatprep.subr.mxu0 0.0
      %469 = vmatpush2.msra.mxu0 0.0
      %470 = vmatprep.subr.mxu0 0.0
      %471 = vmatpush2.msra.mxu0 0.0
      %472 = vmatprep.subr.mxu0 0.0
      %473 = vmatpush2.msra.mxu0 0.0
      %474 = vmatprep.subr.mxu0 0.0
      %475 = vmatpush2.msra.mxu0 0.0
      %476 = vmatprep.subr.mxu0 0.0
      %477 = vmatpush2.msra.mxu0 0.0
      %478 = vmatprep.subr.mxu0 0.0
      %479 = vmatpush2.msra.mxu0 0.0
      %480 = vmatprep.subr.mxu0 0.0
      %481 = vmatpush2.msra.mxu0 0.0
      %482 = vmatprep.subr.mxu0 0.0
      %483 = vmatpush2.msra.mxu0 0.0
      %484 = vmatprep.subr.mxu0 0.0
      %485 = vmatpush2.msra.mxu0 0.0
      %486 = vmatprep.subr.mxu0 0.0
      %487 = vmatpush2.msra.mxu0 0.0
      %488 = vmatprep.subr.mxu0 0.0
      %489 = vmatpush2.msra.mxu0 0.0
      %490 = vmatprep.subr.mxu0 0.0
      %491 = vmatpush2.msra.mxu0 0.0
      %492 = vmatprep.subr.mxu0 0.0
      %493 = vmatpush2.msra.mxu0 0.0
      %494 = vmatprep.mubr.f32.mxu0 0.0
      %495 = vmatmul.mubr.f32.gmra.mxu0 %v425
      %v496 = vpop.f32.mrf.mxu0
      %v497 = vadd.f32 %v422, %v496
      %v498 = vpop.f32.mrf.mxu0
      %499 = vmatprep.mubr.f32.mxu0 0.0
      %500 = vmatmul.mubr.f32.gmra.mxu0 %v428
      %v501 = vpop.f32.mrf.mxu0
      %v502 = vadd.f32 %v422, %v501
      %v503 = vpop.f32.mrf.mxu0
      %504 = vdwg.mxu0
      %v505 = vmul.f32 %v497, 0.5
      %v506 = vmul.f32 %v502, 0.5
      %v507 = vmul.f32 %v505, 1.442695
      %v508 = vpow.pop %v507
      %v509 = vmul.f32 %v506, 1.442695
      %v510 = vpow.pop %v509
      %v511 = vmul.f32 %v508, %v508
      %v512 = vmul.f32 %v510, %v510
      %v513 = vld [vmem:[%s296] sm:$0xff]
      %v514 = vld [vmem:[%s296 + $0x8] sm:$0xff]
      %517 = vrot.lane.b32.xlu0 %v513, 4
      %v518 = vpop.permute.xlu0 %517
      %519 = vrot.lane.b32.xlu0 %v514, 4
      %v520 = vpop.permute.xlu0 %519
      %v523 = vmul.f32 %v508, %v518
      %v524 = vmul.f32 %v510, %v520
      %527 = vrot.lane.b32.xlu0 %v523, 124
      %v528 = vpop.permute.xlu0 %527
      %529 = vrot.lane.b32.xlu0 %v524, 124
      %v530 = vpop.permute.xlu0 %529
      %v533 = vadd.f32 %v497, %v528
      %v534 = vadd.f32 %v502, %v530
      %537 = vrot.lane.b32.xlu0 %v533, 8
      %v538 = vpop.permute.xlu0 %537
      %539 = vrot.lane.b32.xlu0 %v534, 8
      %v540 = vpop.permute.xlu0 %539
      %vm543 = vcmask 31744
      %v544 = vsel %vm543, %v497, %v511
      %v545 = vsel %vm543, %v502, %v512
      %vm546 = vcmask 64512
      %v547 = vsel %vm546, %v544, %v538
      %v548 = vsel %vm546, %v545, %v540
      %vm549 = vcmask 97280
      %v550 = vsel %vm549, %v547, 0.0
      %v551 = vsel %vm549, %v548, 0.0
      %552 = vst [vmem:[%s302] sm:$0xff] %v550
      %553 = vst [vmem:[%s302 + $0x8] sm:$0xff] %v551
      %s554 = smul.u32 2, %s18
      %p555 = scmp.lt.s32.totalorder %s554, 7
      %s556 = scalar_select %p555, %s554, 7
      %s557 = smul.addr %s556, 8
      %s558 = scalar_lea.vmem %s7, %s557
      // Predicated region
      $region49: #{dualvae_forward.2} parent=47 // pred_check
        %p559 = pneg %p193
      $region50: #{dualvae_forward.2} parent=47 // pred_check_branch
        %561 = sbr.rel (%p559) target = $region52
      $region51: #{dualvae_forward.2} parent=47 // pred_region
        %s562 = smul.u32 2, %s18
      $region52: #{dualvae_forward.2} parent=47 // pred_fallthru
        _
    $region48: #{dualvae_forward.2} parent=5 // pred_fallthru
      _
    %p563 = scmp.le.s32.totalorder 2, %s13
    // Predicated region
    $region53: #{dualvae_forward.2} parent=5 // pred_check
      %p564 = pneg %p563
    $region54: #{dualvae_forward.2} parent=5 // pred_check_branch
      %566 = sbr.rel (%p564) target = $region56
    $region55: #{dualvae_forward.2} parent=5 // pred_region
      %s567 = ssub.s32 %s13, 2
      // Predicated region
      $region57: #{dualvae_forward.2} parent=55 // pred_check
        %p568 = pneg %p199
      $region58: #{dualvae_forward.2} parent=55 // pred_check_branch
        %570 = sbr.rel (%p568) target = $region60
      $region59: #{dualvae_forward.2} parent=55 // pred_region
        %s571 = smul.u32 2, %s19
        %p572 = scmp.lt.s32.totalorder %s571, 7
        %s573 = scalar_select %p572, %s571, 7
        %s574 = smul.addr %s573, 8
        %s575 = scalar_lea.vmem %s7, %s574
      $region60: #{dualvae_forward.2} parent=55 // pred_fallthru
        _
    $region56: #{dualvae_forward.2} parent=5 // pred_fallthru
      _
  $region6: #{dualvae_forward.2} parent=0 // loop_footer
    %s17 = sadd.s32 1, %s13
  $region7: #{dualvae_forward.2} parent=0 // loop_footer_branch
    %12 = sbr.rel target = $region3
  $region8: #{dualvae_forward.2} parent=0 // loop_exit
    _

// kernel: dualvae_forward.3
$region0: #{dualvae_forward.3}
  #allocation0 [shape = 'u32[]', space=smem, size = 0x4, offset = 0x4, fixed_abs, tag = 'smem constant byte address 0x4 - core index']
  #allocation1 [shape = 'u32[144,128]{1,0:T(1,128)}', space=vmem, size = 0x12000, scoped, tag = 'internal scratch']
  #allocation2 [shape = 'f32[1,1]{1,0:T(1,128)S(1)}', space=vmem, size = 0x200, scoped, tag = 'scoped memory for dualvae_forward.3']
  %s0 = inlined_call_operand.vmem [shape: f32[64,32], index: 0, kind: input, shape index: {}]
  %s1 = inlined_call_operand.vmem [shape: f32[64,4], index: 1, kind: input, shape index: {}]
  %s2 = inlined_call_operand.vmem [shape: f32[64,4], index: 2, kind: input, shape index: {}]
  %s3 = inlined_call_operand.vmem [shape: f32[1,32], index: 3, kind: input, shape index: {}]
  %s4 = inlined_call_operand.vmem [shape: f32[1,32], index: 4, kind: input, shape index: {}]
  %s5 = inlined_call_operand.vmem [shape: f32[32,32], index: 5, kind: input, shape index: {}]
  %s6 = inlined_call_operand.vmem [shape: f32[1,32], index: 6, kind: input, shape index: {}]
  %s7 = inlined_call_operand.vmem [shape: f32[32,8], index: 7, kind: input, shape index: {}]
  %s8 = inlined_call_operand.vmem [shape: f32[1,8], index: 8, kind: input, shape index: {}]
  %s9 = inlined_call_operand.vmem [shape: f32[4,32], index: 9, kind: input, shape index: {}]
  %s10 = inlined_call_operand.vmem [shape: f32[1,32], index: 10, kind: input, shape index: {}]
  %s11 = inlined_call_operand.vmem [shape: f32[32,32], index: 11, kind: input, shape index: {}]
  %s12 = inlined_call_operand.vmem [shape: f32[1,32], index: 12, kind: input, shape index: {}]
  %s13 = inlined_call_operand.vmem [shape: f32[4,32], index: 13, kind: input, shape index: {}]
  %s14 = inlined_call_operand.vmem [shape: f32[1,32], index: 14, kind: input, shape index: {}]
  %s15 = inlined_call_operand.vmem [shape: f32[32,32], index: 15, kind: input, shape index: {}]
  %s16 = inlined_call_operand.vmem [shape: f32[1,32], index: 16, kind: input, shape index: {}]
  %s17 = inlined_call_operand.vmem [shape: f32[4,32], index: 17, kind: input, shape index: {}]
  %s18 = inlined_call_operand.vmem [shape: f32[4,32], index: 18, kind: input, shape index: {}]
  %s19 = inlined_call_operand.vmem [shape: f32[1,32], index: 19, kind: input, shape index: {}]
  %s20 = inlined_call_operand.vmem [shape: f32[32,16], index: 20, kind: input, shape index: {}]
  %s21 = inlined_call_operand.vmem [shape: f32[1,16], index: 21, kind: input, shape index: {}]
  %s22 = inlined_call_operand.vmem [shape: f32[1,16], index: 22, kind: input, shape index: {}]
  %s23 = inlined_call_operand.vmem [shape: f32[16,32], index: 23, kind: input, shape index: {}]
  %s24 = inlined_call_operand.vmem [shape: f32[1,32], index: 24, kind: input, shape index: {}]
  %s25 = inlined_call_operand.vmem [shape: f32[32,1], index: 25, kind: input, shape index: {}]
  %s26 = inlined_call_operand.<no memory space> [shape: f32[1,1], index: 26, kind: input, shape index: {}]
  %s27 = inlined_call_operand.vmem [shape: f32[64,128], index: 27, kind: output, shape index: {}]
  %s28 = sld [smem:[#allocation0]]
  $region141: #{dualvae_forward.3} parent=0
    _
  %s30 = ssub.s32 1, %s28
  %s31 = scalar_select 0, %s30, %s28
  %v32 = vstv %s26
  %33 = vst [vmem:[#allocation2] sm:$0x1] %v32
  loop: start=0, step=1, limit=6
  $region2: #{dualvae_forward.3} parent=0 // loop_pre_header
    _
  $region3: #{dualvae_forward.3} parent=0 // loop_header
    %s35 = sphi 0, %s39
    %p36 = scmp.ge.s32.totalorder %s35, 6
    %s45 = sphi 0, %s47
    %s48 = sphi 0, %s45
    %s49 = sphi 0, %s48
    %s65 = sphi 0, %s49
    %s71 = sphi 0, %s73
    %s74 = sphi 0, %s71
    %s75 = sphi 0, %s74
    %s91 = sphi 0, %s75
    %s97 = sphi 0, %s99
    %s100 = sphi 0, %s97
    %s101 = sphi 0, %s100
    %s117 = sphi 0, %s101
    %s121 = sphi 0, %s121
    %s123 = sphi 0, %s121
    %s124 = sphi 0, %s123
    %s138 = sphi 0, %s124
    %s142 = sphi 0, %s142
    %s144 = sphi 0, %s142
    %s145 = sphi 0, %s144
    %s159 = sphi 0, %s145
    %s163 = sphi 0, %s163
    %s165 = sphi 0, %s163
    %s166 = sphi 0, %s165
    %s180 = sphi 0, %s166
    %s184 = sphi 0, %s184
    %s186 = sphi 0, %s184
    %s187 = sphi 0, %s186
    %s201 = sphi 0, %s187
    %s205 = sphi 0, %s205
    %s207 = sphi 0, %s205
    %s208 = sphi 0, %s207
    %s222 = sphi 0, %s208
    %s226 = sphi 0, %s226
    %s228 = sphi 0, %s226
    %s229 = sphi 0, %s228
    %s243 = sphi 0, %s229
    %s247 = sphi 0, %s247
    %s249 = sphi 0, %s247
    %s250 = sphi 0, %s249
    %s264 = sphi 0, %s250
    %s268 = sphi 0, %s268
    %s270 = sphi 0, %s268
    %s271 = sphi 0, %s270
    %s285 = sphi 0, %s271
    %s289 = sphi 0, %s289
    %s291 = sphi 0, %s289
    %s292 = sphi 0, %s291
    %s306 = sphi 0, %s292
    %s310 = sphi 0, %s310
    %s312 = sphi 0, %s310
    %s313 = sphi 0, %s312
    %s327 = sphi 0, %s313
    %s331 = sphi 0, %s331
    %s333 = sphi 0, %s331
    %s334 = sphi 0, %s333
    %s348 = sphi 0, %s334
    %s352 = sphi 0, %s352
    %s354 = sphi 0, %s352
    %s355 = sphi 0, %s354
    %s369 = sphi 0, %s355
    %s373 = sphi 0, %s373
    %s375 = sphi 0, %s373
    %s376 = sphi 0, %s375
    %s390 = sphi 0, %s376
    %s394 = sphi 0, %s394
    %s396 = sphi 0, %s394
    %s397 = sphi 0, %s396
    %s411 = sphi 0, %s397
    %s415 = sphi 0, %s415
    %s417 = sphi 0, %s415
    %s418 = sphi 0, %s417
    %s432 = sphi 0, %s418
    %s436 = sphi 0, %s436
    %s438 = sphi 0, %s436
    %s439 = sphi 0, %s438
    %s453 = sphi 0, %s439
    %s457 = sphi 0, %s457
    %s459 = sphi 0, %s457
    %s460 = sphi 0, %s459
    %s474 = sphi 0, %s460
    %s478 = sphi 0, %s478
    %s480 = sphi 0, %s478
    %s481 = sphi 0, %s480
    %s495 = sphi 0, %s481
    %s499 = sphi 0, %s499
    %s501 = sphi 0, %s499
    %s502 = sphi 0, %s501
    %s516 = sphi 0, %s502
    %s520 = sphi 0, %s520
    %s522 = sphi 0, %s520
    %s523 = sphi 0, %s522
    %s537 = sphi 0, %s523
    %s541 = sphi 0, %s541
    %s543 = sphi 0, %s541
    %s544 = sphi 0, %s543
    %s558 = sphi 0, %s544
    %s562 = sphi 0, %s562
    %s564 = sphi 0, %s562
    %s565 = sphi 0, %s564
    %s579 = sphi 0, %s565
    %s583 = sphi 0, %s583
    %s585 = sphi 0, %s583
    %s586 = sphi 0, %s585
    %s600 = sphi 0, %s586
    %s604 = sphi 0, %s604
    %s606 = sphi 0, %s604
    %s607 = sphi 0, %s606
    %s621 = sphi 0, %s607
    %s627 = sphi 0, %s629
    %s630 = sphi 0, %s627
    %s631 = sphi 0, %s630
    %s647 = sphi 0, %s631
  $region4: #{dualvae_forward.3} parent=0 // loop_header_branch
    %38 = sbr.rel (%p36) target = $region8
  $region5: #{dualvae_forward.3} parent=0 // loop_body
    %s40 = ssub.s32 %s35, 1
    %s41 = ssub.s32 %s35, 2
    %s42 = sadd.s32 %s35, 1
    %s43 = ssub.s32 %s35, %s42
    %p44 = scmp.eq.s32.totalorder %s43, 0
    %s46 = sadd.s32 %s45, 1
    %s47 = scalar_select %p44, %s45, %s46
    %p50 = pneg %p44
    %p51 = scmp.eq.s32.totalorder %s35, 3
    %p52 = por %p50, %p51
    %p53 = scmp.ne.s32.totalorder %s45, %s48
    %p54 = scmp.eq.s32.totalorder %s35, 0
    %p55 = por %p53, %p54
    %p56 = scmp.ne.s32.totalorder %s45, %s48
    %p57 = scmp.eq.s32.totalorder %s40, 3
    %p58 = por %p56, %p57
    %p59 = scmp.ne.s32.totalorder %s48, %s49
    %p60 = scmp.eq.s32.totalorder %s40, 0
    %p61 = por %p59, %p60
    %p62 = scmp.ne.s32.totalorder %s48, %s49
    %p63 = scmp.eq.s32.totalorder %s41, 3
    %p64 = por %p62, %p63
    %p66 = scmp.ne.s32.totalorder %s49, %s65
    %p67 = scmp.eq.s32.totalorder %s41, 0
    %p68 = por %p66, %p67
    %s69 = ssub.s32 %s35, %s42
    %p70 = scmp.eq.s32.totalorder %s69, 0
    %s72 = sadd.s32 %s71, 1
    %s73 = scalar_select %p70, %s71, %s72
    %p76 = pneg %p70
    %p77 = scmp.eq.s32.totalorder %s35, 3
    %p78 = por %p76, %p77
    %p79 = scmp.ne.s32.totalorder %s71, %s74
    %p80 = scmp.eq.s32.totalorder %s35, 0
    %p81 = por %p79, %p80
    %p82 = scmp.ne.s32.totalorder %s71, %s74
    %p83 = scmp.eq.s32.totalorder %s40, 3
    %p84 = por %p82, %p83
    %p85 = scmp.ne.s32.totalorder %s74, %s75
    %p86 = scmp.eq.s32.totalorder %s40, 0
    %p87 = por %p85, %p86
    %p88 = scmp.ne.s32.totalorder %s74, %s75
    %p89 = scmp.eq.s32.totalorder %s41, 3
    %p90 = por %p88, %p89
    %p92 = scmp.ne.s32.totalorder %s75, %s91
    %p93 = scmp.eq.s32.totalorder %s41, 0
    %p94 = por %p92, %p93
    %s95 = ssub.s32 %s35, %s42
    %p96 = scmp.eq.s32.totalorder %s95, 0
    %s98 = sadd.s32 %s97, 1
    %s99 = scalar_select %p96, %s97, %s98
    %p102 = pneg %p96
    %p103 = scmp.eq.s32.totalorder %s35, 3
    %p104 = por %p102, %p103
    %p105 = scmp.ne.s32.totalorder %s97, %s100
    %p106 = scmp.eq.s32.totalorder %s35, 0
    %p107 = por %p105, %p106
    %p108 = scmp.ne.s32.totalorder %s97, %s100
    %p109 = scmp.eq.s32.totalorder %s40, 3
    %p110 = por %p108, %p109
    %p111 = scmp.ne.s32.totalorder %s100, %s101
    %p112 = scmp.eq.s32.totalorder %s40, 0
    %p113 = por %p111, %p112
    %p114 = scmp.ne.s32.totalorder %s100, %s101
    %p115 = scmp.eq.s32.totalorder %s41, 3
    %p116 = por %p114, %p115
    %p118 = scmp.ne.s32.totalorder %s101, %s117
    %p119 = scmp.eq.s32.totalorder %s41, 0
    %p120 = por %p118, %p119
    %s122 = sadd.s32 %s121, 1
    %p125 = scmp.eq.s32.totalorder %s35, 3
    %p126 = scmp.ne.s32.totalorder %s121, %s123
    %p127 = scmp.eq.s32.totalorder %s35, 0
    %p128 = por %p126, %p127
    %p129 = scmp.ne.s32.totalorder %s121, %s123
    %p130 = scmp.eq.s32.totalorder %s40, 3
    %p131 = por %p129, %p130
    %p132 = scmp.ne.s32.totalorder %s123, %s124
    %p133 = scmp.eq.s32.totalorder %s40, 0
    %p134 = por %p132, %p133
    %p135 = scmp.ne.s32.totalorder %s123, %s124
    %p136 = scmp.eq.s32.totalorder %s41, 3
    %p137 = por %p135, %p136
    %p139 = scmp.ne.s32.totalorder %s124, %s138
    %p140 = scmp.eq.s32.totalorder %s41, 0
    %p141 = por %p139, %p140
    %s143 = sadd.s32 %s142, 1
    %p146 = scmp.eq.s32.totalorder %s35, 3
    %p147 = scmp.ne.s32.totalorder %s142, %s144
    %p148 = scmp.eq.s32.totalorder %s35, 0
    %p149 = por %p147, %p148
    %p150 = scmp.ne.s32.totalorder %s142, %s144
    %p151 = scmp.eq.s32.totalorder %s40, 3
    %p152 = por %p150, %p151
    %p153 = scmp.ne.s32.totalorder %s144, %s145
    %p154 = scmp.eq.s32.totalorder %s40, 0
    %p155 = por %p153, %p154
    %p156 = scmp.ne.s32.totalorder %s144, %s145
    %p157 = scmp.eq.s32.totalorder %s41, 3
    %p158 = por %p156, %p157
    %p160 = scmp.ne.s32.totalorder %s145, %s159
    %p161 = scmp.eq.s32.totalorder %s41, 0
    %p162 = por %p160, %p161
    %s164 = sadd.s32 %s163, 1
    %p167 = scmp.eq.s32.totalorder %s35, 3
    %p168 = scmp.ne.s32.totalorder %s163, %s165
    %p169 = scmp.eq.s32.totalorder %s35, 0
    %p170 = por %p168, %p169
    %p171 = scmp.ne.s32.totalorder %s163, %s165
    %p172 = scmp.eq.s32.totalorder %s40, 3
    %p173 = por %p171, %p172
    %p174 = scmp.ne.s32.totalorder %s165, %s166
    %p175 = scmp.eq.s32.totalorder %s40, 0
    %p176 = por %p174, %p175
    %p177 = scmp.ne.s32.totalorder %s165, %s166
    %p178 = scmp.eq.s32.totalorder %s41, 3
    %p179 = por %p177, %p178
    %p181 = scmp.ne.s32.totalorder %s166, %s180
    %p182 = scmp.eq.s32.totalorder %s41, 0
    %p183 = por %p181, %p182
    %s185 = sadd.s32 %s184, 1
    %p188 = scmp.eq.s32.totalorder %s35, 3
    %p189 = scmp.ne.s32.totalorder %s184, %s186
    %p190 = scmp.eq.s32.totalorder %s35, 0
    %p191 = por %p189, %p190
    %p192 = scmp.ne.s32.totalorder %s184, %s186
    %p193 = scmp.eq.s32.totalorder %s40, 3
    %p194 = por %p192, %p193
    %p195 = scmp.ne.s32.totalorder %s186, %s187
    %p196 = scmp.eq.s32.totalorder %s40, 0
    %p197 = por %p195, %p196
    %p198 = scmp.ne.s32.totalorder %s186, %s187
    %p199 = scmp.eq.s32.totalorder %s41, 3
    %p200 = por %p198, %p199
    %p202 = scmp.ne.s32.totalorder %s187, %s201
    %p203 = scmp.eq.s32.totalorder %s41, 0
    %p204 = por %p202, %p203
    %s206 = sadd.s32 %s205, 1
    %p209 = scmp.eq.s32.totalorder %s35, 3
    %p210 = scmp.ne.s32.totalorder %s205, %s207
    %p211 = scmp.eq.s32.totalorder %s35, 0
    %p212 = por %p210, %p211
    %p213 = scmp.ne.s32.totalorder %s205, %s207
    %p214 = scmp.eq.s32.totalorder %s40, 3
    %p215 = por %p213, %p214
    %p216 = scmp.ne.s32.totalorder %s207, %s208
    %p217 = scmp.eq.s32.totalorder %s40, 0
    %p218 = por %p216, %p217
    %p219 = scmp.ne.s32.totalorder %s207, %s208
    %p220 = scmp.eq.s32.totalorder %s41, 3
    %p221 = por %p219, %p220
    %p223 = scmp.ne.s32.totalorder %s208, %s222
    %p224 = scmp.eq.s32.totalorder %s41, 0
    %p225 = por %p223, %p224
    %s227 = sadd.s32 %s226, 1
    %p230 = scmp.eq.s32.totalorder %s35, 3
    %p231 = scmp.ne.s32.totalorder %s226, %s228
    %p232 = scmp.eq.s32.totalorder %s35, 0
    %p233 = por %p231, %p232
    %p234 = scmp.ne.s32.totalorder %s226, %s228
    %p235 = scmp.eq.s32.totalorder %s40, 3
    %p236 = por %p234, %p235
    %p237 = scmp.ne.s32.totalorder %s228, %s229
    %p238 = scmp.eq.s32.totalorder %s40, 0
    %p239 = por %p237, %p238
    %p240 = scmp.ne.s32.totalorder %s228, %s229
    %p241 = scmp.eq.s32.totalorder %s41, 3
    %p242 = por %p240, %p241
    %p244 = scmp.ne.s32.totalorder %s229, %s243
    %p245 = scmp.eq.s32.totalorder %s41, 0
    %p246 = por %p244, %p245
    %s248 = sadd.s32 %s247, 1
    %p251 = scmp.eq.s32.totalorder %s35, 3
    %p252 = scmp.ne.s32.totalorder %s247, %s249
    %p253 = scmp.eq.s32.totalorder %s35, 0
    %p254 = por %p252, %p253
    %p255 = scmp.ne.s32.totalorder %s247, %s249
    %p256 = scmp.eq.s32.totalorder %s40, 3
    %p257 = por %p255, %p256
    %p258 = scmp.ne.s32.totalorder %s249, %s250
    %p259 = scmp.eq.s32.totalorder %s40, 0
    %p260 = por %p258, %p259
    %p261 = scmp.ne.s32.totalorder %s249, %s250
    %p262 = scmp.eq.s32.totalorder %s41, 3
    %p263 = por %p261, %p262
    %p265 = scmp.ne.s32.totalorder %s250, %s264
    %p266 = scmp.eq.s32.totalorder %s41, 0
    %p267 = por %p265, %p266
    %s269 = sadd.s32 %s268, 1
    %p272 = scmp.eq.s32.totalorder %s35, 3
    %p273 = scmp.ne.s32.totalorder %s268, %s270
    %p274 = scmp.eq.s32.totalorder %s35, 0
    %p275 = por %p273, %p274
    %p276 = scmp.ne.s32.totalorder %s268, %s270
    %p277 = scmp.eq.s32.totalorder %s40, 3
    %p278 = por %p276, %p277
    %p279 = scmp.ne.s32.totalorder %s270, %s271
    %p280 = scmp.eq.s32.totalorder %s40, 0
    %p281 = por %p279, %p280
    %p282 = scmp.ne.s32.totalorder %s270, %s271
    %p283 = scmp.eq.s32.totalorder %s41, 3
    %p284 = por %p282, %p283
    %p286 = scmp.ne.s32.totalorder %s271, %s285
    %p287 = scmp.eq.s32.totalorder %s41, 0
    %p288 = por %p286, %p287
    %s290 = sadd.s32 %s289, 1
    %p293 = scmp.eq.s32.totalorder %s35, 3
    %p294 = scmp.ne.s32.totalorder %s289, %s291
    %p295 = scmp.eq.s32.totalorder %s35, 0
    %p296 = por %p294, %p295
    %p297 = scmp.ne.s32.totalorder %s289, %s291
    %p298 = scmp.eq.s32.totalorder %s40, 3
    %p299 = por %p297, %p298
    %p300 = scmp.ne.s32.totalorder %s291, %s292
    %p301 = scmp.eq.s32.totalorder %s40, 0
    %p302 = por %p300, %p301
    %p303 = scmp.ne.s32.totalorder %s291, %s292
    %p304 = scmp.eq.s32.totalorder %s41, 3
    %p305 = por %p303, %p304
    %p307 = scmp.ne.s32.totalorder %s292, %s306
    %p308 = scmp.eq.s32.totalorder %s41, 0
    %p309 = por %p307, %p308
    %s311 = sadd.s32 %s310, 1
    %p314 = scmp.eq.s32.totalorder %s35, 3
    %p315 = scmp.ne.s32.totalorder %s310, %s312
    %p316 = scmp.eq.s32.totalorder %s35, 0
    %p317 = por %p315, %p316
    %p318 = scmp.ne.s32.totalorder %s310, %s312
    %p319 = scmp.eq.s32.totalorder %s40, 3
    %p320 = por %p318, %p319
    %p321 = scmp.ne.s32.totalorder %s312, %s313
    %p322 = scmp.eq.s32.totalorder %s40, 0
    %p323 = por %p321, %p322
    %p324 = scmp.ne.s32.totalorder %s312, %s313
    %p325 = scmp.eq.s32.totalorder %s41, 3
    %p326 = por %p324, %p325
    %p328 = scmp.ne.s32.totalorder %s313, %s327
    %p329 = scmp.eq.s32.totalorder %s41, 0
    %p330 = por %p328, %p329
    %s332 = sadd.s32 %s331, 1
    %p335 = scmp.eq.s32.totalorder %s35, 3
    %p336 = scmp.ne.s32.totalorder %s331, %s333
    %p337 = scmp.eq.s32.totalorder %s35, 0
    %p338 = por %p336, %p337
    %p339 = scmp.ne.s32.totalorder %s331, %s333
    %p340 = scmp.eq.s32.totalorder %s40, 3
    %p341 = por %p339, %p340
    %p342 = scmp.ne.s32.totalorder %s333, %s334
    %p343 = scmp.eq.s32.totalorder %s40, 0
    %p344 = por %p342, %p343
    %p345 = scmp.ne.s32.totalorder %s333, %s334
    %p346 = scmp.eq.s32.totalorder %s41, 3
    %p347 = por %p345, %p346
    %p349 = scmp.ne.s32.totalorder %s334, %s348
    %p350 = scmp.eq.s32.totalorder %s41, 0
    %p351 = por %p349, %p350
    %s353 = sadd.s32 %s352, 1
    %p356 = scmp.eq.s32.totalorder %s35, 3
    %p357 = scmp.ne.s32.totalorder %s352, %s354
    %p358 = scmp.eq.s32.totalorder %s35, 0
    %p359 = por %p357, %p358
    %p360 = scmp.ne.s32.totalorder %s352, %s354
    %p361 = scmp.eq.s32.totalorder %s40, 3
    %p362 = por %p360, %p361
    %p363 = scmp.ne.s32.totalorder %s354, %s355
    %p364 = scmp.eq.s32.totalorder %s40, 0
    %p365 = por %p363, %p364
    %p366 = scmp.ne.s32.totalorder %s354, %s355
    %p367 = scmp.eq.s32.totalorder %s41, 3
    %p368 = por %p366, %p367
    %p370 = scmp.ne.s32.totalorder %s355, %s369
    %p371 = scmp.eq.s32.totalorder %s41, 0
    %p372 = por %p370, %p371
    %s374 = sadd.s32 %s373, 1
    %p377 = scmp.eq.s32.totalorder %s35, 3
    %p378 = scmp.ne.s32.totalorder %s373, %s375
    %p379 = scmp.eq.s32.totalorder %s35, 0
    %p380 = por %p378, %p379
    %p381 = scmp.ne.s32.totalorder %s373, %s375
    %p382 = scmp.eq.s32.totalorder %s40, 3
    %p383 = por %p381, %p382
    %p384 = scmp.ne.s32.totalorder %s375, %s376
    %p385 = scmp.eq.s32.totalorder %s40, 0
    %p386 = por %p384, %p385
    %p387 = scmp.ne.s32.totalorder %s375, %s376
    %p388 = scmp.eq.s32.totalorder %s41, 3
    %p389 = por %p387, %p388
    %p391 = scmp.ne.s32.totalorder %s376, %s390
    %p392 = scmp.eq.s32.totalorder %s41, 0
    %p393 = por %p391, %p392
    %s395 = sadd.s32 %s394, 1
    %p398 = scmp.eq.s32.totalorder %s35, 3
    %p399 = scmp.ne.s32.totalorder %s394, %s396
    %p400 = scmp.eq.s32.totalorder %s35, 0
    %p401 = por %p399, %p400
    %p402 = scmp.ne.s32.totalorder %s394, %s396
    %p403 = scmp.eq.s32.totalorder %s40, 3
    %p404 = por %p402, %p403
    %p405 = scmp.ne.s32.totalorder %s396, %s397
    %p406 = scmp.eq.s32.totalorder %s40, 0
    %p407 = por %p405, %p406
    %p408 = scmp.ne.s32.totalorder %s396, %s397
    %p409 = scmp.eq.s32.totalorder %s41, 3
    %p410 = por %p408, %p409
    %p412 = scmp.ne.s32.totalorder %s397, %s411
    %p413 = scmp.eq.s32.totalorder %s41, 0
    %p414 = por %p412, %p413
    %s416 = sadd.s32 %s415, 1
    %p419 = scmp.eq.s32.totalorder %s35, 3
    %p420 = scmp.ne.s32.totalorder %s415, %s417
    %p421 = scmp.eq.s32.totalorder %s35, 0
    %p422 = por %p420, %p421
    %p423 = scmp.ne.s32.totalorder %s415, %s417
    %p424 = scmp.eq.s32.totalorder %s40, 3
    %p425 = por %p423, %p424
    %p426 = scmp.ne.s32.totalorder %s417, %s418
    %p427 = scmp.eq.s32.totalorder %s40, 0
    %p428 = por %p426, %p427
    %p429 = scmp.ne.s32.totalorder %s417, %s418
    %p430 = scmp.eq.s32.totalorder %s41, 3
    %p431 = por %p429, %p430
    %p433 = scmp.ne.s32.totalorder %s418, %s432
    %p434 = scmp.eq.s32.totalorder %s41, 0
    %p435 = por %p433, %p434
    %s437 = sadd.s32 %s436, 1
    %p440 = scmp.eq.s32.totalorder %s35, 3
    %p441 = scmp.ne.s32.totalorder %s436, %s438
    %p442 = scmp.eq.s32.totalorder %s35, 0
    %p443 = por %p441, %p442
    %p444 = scmp.ne.s32.totalorder %s436, %s438
    %p445 = scmp.eq.s32.totalorder %s40, 3
    %p446 = por %p444, %p445
    %p447 = scmp.ne.s32.totalorder %s438, %s439
    %p448 = scmp.eq.s32.totalorder %s40, 0
    %p449 = por %p447, %p448
    %p450 = scmp.ne.s32.totalorder %s438, %s439
    %p451 = scmp.eq.s32.totalorder %s41, 3
    %p452 = por %p450, %p451
    %p454 = scmp.ne.s32.totalorder %s439, %s453
    %p455 = scmp.eq.s32.totalorder %s41, 0
    %p456 = por %p454, %p455
    %s458 = sadd.s32 %s457, 1
    %p461 = scmp.eq.s32.totalorder %s35, 3
    %p462 = scmp.ne.s32.totalorder %s457, %s459
    %p463 = scmp.eq.s32.totalorder %s35, 0
    %p464 = por %p462, %p463
    %p465 = scmp.ne.s32.totalorder %s457, %s459
    %p466 = scmp.eq.s32.totalorder %s40, 3
    %p467 = por %p465, %p466
    %p468 = scmp.ne.s32.totalorder %s459, %s460
    %p469 = scmp.eq.s32.totalorder %s40, 0
    %p470 = por %p468, %p469
    %p471 = scmp.ne.s32.totalorder %s459, %s460
    %p472 = scmp.eq.s32.totalorder %s41, 3
    %p473 = por %p471, %p472
    %p475 = scmp.ne.s32.totalorder %s460, %s474
    %p476 = scmp.eq.s32.totalorder %s41, 0
    %p477 = por %p475, %p476
    %s479 = sadd.s32 %s478, 1
    %p482 = scmp.eq.s32.totalorder %s35, 3
    %p483 = scmp.ne.s32.totalorder %s478, %s480
    %p484 = scmp.eq.s32.totalorder %s35, 0
    %p485 = por %p483, %p484
    %p486 = scmp.ne.s32.totalorder %s478, %s480
    %p487 = scmp.eq.s32.totalorder %s40, 3
    %p488 = por %p486, %p487
    %p489 = scmp.ne.s32.totalorder %s480, %s481
    %p490 = scmp.eq.s32.totalorder %s40, 0
    %p491 = por %p489, %p490
    %p492 = scmp.ne.s32.totalorder %s480, %s481
    %p493 = scmp.eq.s32.totalorder %s41, 3
    %p494 = por %p492, %p493
    %p496 = scmp.ne.s32.totalorder %s481, %s495
    %p497 = scmp.eq.s32.totalorder %s41, 0
    %p498 = por %p496, %p497
    %s500 = sadd.s32 %s499, 1
    %p503 = scmp.eq.s32.totalorder %s35, 3
    %p504 = scmp.ne.s32.totalorder %s499, %s501
    %p505 = scmp.eq.s32.totalorder %s35, 0
    %p506 = por %p504, %p505
    %p507 = scmp.ne.s32.totalorder %s499, %s501
    %p508 = scmp.eq.s32.totalorder %s40, 3
    %p509 = por %p507, %p508
    %p510 = scmp.ne.s32.totalorder %s501, %s502
    %p511 = scmp.eq.s32.totalorder %s40, 0
    %p512 = por %p510, %p511
    %p513 = scmp.ne.s32.totalorder %s501, %s502
    %p514 = scmp.eq.s32.totalorder %s41, 3
    %p515 = por %p513, %p514
    %p517 = scmp.ne.s32.totalorder %s502, %s516
    %p518 = scmp.eq.s32.totalorder %s41, 0
    %p519 = por %p517, %p518
    %s521 = sadd.s32 %s520, 1
    %p524 = scmp.eq.s32.totalorder %s35, 3
    %p525 = scmp.ne.s32.totalorder %s520, %s522
    %p526 = scmp.eq.s32.totalorder %s35, 0
    %p527 = por %p525, %p526
    %p528 = scmp.ne.s32.totalorder %s520, %s522
    %p529 = scmp.eq.s32.totalorder %s40, 3
    %p530 = por %p528, %p529
    %p531 = scmp.ne.s32.totalorder %s522, %s523
    %p532 = scmp.eq.s32.totalorder %s40, 0
    %p533 = por %p531, %p532
    %p534 = scmp.ne.s32.totalorder %s522, %s523
    %p535 = scmp.eq.s32.totalorder %s41, 3
    %p536 = por %p534, %p535
    %p538 = scmp.ne.s32.totalorder %s523, %s537
    %p539 = scmp.eq.s32.totalorder %s41, 0
    %p540 = por %p538, %p539
    %s542 = sadd.s32 %s541, 1
    %p545 = scmp.eq.s32.totalorder %s35, 3
    %p546 = scmp.ne.s32.totalorder %s541, %s543
    %p547 = scmp.eq.s32.totalorder %s35, 0
    %p548 = por %p546, %p547
    %p549 = scmp.ne.s32.totalorder %s541, %s543
    %p550 = scmp.eq.s32.totalorder %s40, 3
    %p551 = por %p549, %p550
    %p552 = scmp.ne.s32.totalorder %s543, %s544
    %p553 = scmp.eq.s32.totalorder %s40, 0
    %p554 = por %p552, %p553
    %p555 = scmp.ne.s32.totalorder %s543, %s544
    %p556 = scmp.eq.s32.totalorder %s41, 3
    %p557 = por %p555, %p556
    %p559 = scmp.ne.s32.totalorder %s544, %s558
    %p560 = scmp.eq.s32.totalorder %s41, 0
    %p561 = por %p559, %p560
    %s563 = sadd.s32 %s562, 1
    %p566 = scmp.eq.s32.totalorder %s35, 3
    %p567 = scmp.ne.s32.totalorder %s562, %s564
    %p568 = scmp.eq.s32.totalorder %s35, 0
    %p569 = por %p567, %p568
    %p570 = scmp.ne.s32.totalorder %s562, %s564
    %p571 = scmp.eq.s32.totalorder %s40, 3
    %p572 = por %p570, %p571
    %p573 = scmp.ne.s32.totalorder %s564, %s565
    %p574 = scmp.eq.s32.totalorder %s40, 0
    %p575 = por %p573, %p574
    %p576 = scmp.ne.s32.totalorder %s564, %s565
    %p577 = scmp.eq.s32.totalorder %s41, 3
    %p578 = por %p576, %p577
    %p580 = scmp.ne.s32.totalorder %s565, %s579
    %p581 = scmp.eq.s32.totalorder %s41, 0
    %p582 = por %p580, %p581
    %s584 = sadd.s32 %s583, 1
    %p587 = scmp.eq.s32.totalorder %s35, 3
    %p588 = scmp.ne.s32.totalorder %s583, %s585
    %p589 = scmp.eq.s32.totalorder %s35, 0
    %p590 = por %p588, %p589
    %p591 = scmp.ne.s32.totalorder %s583, %s585
    %p592 = scmp.eq.s32.totalorder %s40, 3
    %p593 = por %p591, %p592
    %p594 = scmp.ne.s32.totalorder %s585, %s586
    %p595 = scmp.eq.s32.totalorder %s40, 0
    %p596 = por %p594, %p595
    %p597 = scmp.ne.s32.totalorder %s585, %s586
    %p598 = scmp.eq.s32.totalorder %s41, 3
    %p599 = por %p597, %p598
    %p601 = scmp.ne.s32.totalorder %s586, %s600
    %p602 = scmp.eq.s32.totalorder %s41, 0
    %p603 = por %p601, %p602
    %s605 = sadd.s32 %s604, 1
    %p608 = scmp.eq.s32.totalorder %s35, 3
    %p609 = scmp.ne.s32.totalorder %s604, %s606
    %p610 = scmp.eq.s32.totalorder %s35, 0
    %p611 = por %p609, %p610
    %p612 = scmp.ne.s32.totalorder %s604, %s606
    %p613 = scmp.eq.s32.totalorder %s40, 3
    %p614 = por %p612, %p613
    %p615 = scmp.ne.s32.totalorder %s606, %s607
    %p616 = scmp.eq.s32.totalorder %s40, 0
    %p617 = por %p615, %p616
    %p618 = scmp.ne.s32.totalorder %s606, %s607
    %p619 = scmp.eq.s32.totalorder %s41, 3
    %p620 = por %p618, %p619
    %p622 = scmp.ne.s32.totalorder %s607, %s621
    %p623 = scmp.eq.s32.totalorder %s41, 0
    %p624 = por %p622, %p623
    %s625 = ssub.s32 %s35, %s42
    %p626 = scmp.eq.s32.totalorder %s625, 0
    %s628 = sadd.s32 %s627, 1
    %s629 = scalar_select %p626, %s627, %s628
    %p632 = pneg %p626
    %p633 = scmp.eq.s32.totalorder %s35, 3
    %p634 = por %p632, %p633
    %p635 = scmp.ne.s32.totalorder %s627, %s630
    %p636 = scmp.eq.s32.totalorder %s35, 0
    %p637 = por %p635, %p636
    %p638 = scmp.ne.s32.totalorder %s627, %s630
    %p639 = scmp.eq.s32.totalorder %s40, 3
    %p640 = por %p638, %p639
    %p641 = scmp.ne.s32.totalorder %s630, %s631
    %p642 = scmp.eq.s32.totalorder %s40, 0
    %p643 = por %p641, %p642
    %p644 = scmp.ne.s32.totalorder %s630, %s631
    %p645 = scmp.eq.s32.totalorder %s41, 3
    %p646 = por %p644, %p645
    %p648 = scmp.ne.s32.totalorder %s631, %s647
    %p649 = scmp.eq.s32.totalorder %s41, 0
    %p650 = por %p648, %p649
    %p651 = scmp.le.s32.totalorder 1, %s35
    %p652 = scmp.lt.s32.totalorder %s35, 5
    %p653 = pnand %p651, %p652
    %p654 = pneg %p653
    // Predicated region
    $region9: #{dualvae_forward.3} parent=5 // pred_check
      _
    $region10: #{dualvae_forward.3} parent=5 // pred_check_branch
      %656 = sbr.rel (%p653) target = $region12
    $region11: #{dualvae_forward.3} parent=5 // pred_region
      %s657 = ssub.s32 %s35, 1
      // Predicated region
      $region13: #{dualvae_forward.3} parent=11 // pred_check
        %p658 = pneg %p134
      $region14: #{dualvae_forward.3} parent=11 // pred_check_branch
        %660 = sbr.rel (%p658) target = $region16
      $region15: #{dualvae_forward.3} parent=11 // pred_region
        _
      $region16: #{dualvae_forward.3} parent=11 // pred_fallthru
        _
      // Predicated region
      $region17: #{dualvae_forward.3} parent=11 // pred_check
        %p661 = pneg %p155
      $region18: #{dualvae_forward.3} parent=11 // pred_check_branch
        %663 = sbr.rel (%p661) target = $region20
      $region19: #{dualvae_forward.3} parent=11 // pred_region
        _
      $region20: #{dualvae_forward.3} parent=11 // pred_fallthru
        _
      // Predicated region
      $region21: #{dualvae_forward.3} parent=11 // pred_check
        %p664 = pneg %p176
      $region22: #{dualvae_forward.3} parent=11 // pred_check_branch
        %666 = sbr.rel (%p664) target = $region24
      $region23: #{dualvae_forward.3} parent=11 // pred_region
        _
      $region24: #{dualvae_forward.3} parent=11 // pred_fallthru
        _
      // Predicated region
      $region25: #{dualvae_forward.3} parent=11 // pred_check
        %p667 = pneg %p197
      $region26: #{dualvae_forward.3} parent=11 // pred_check_branch
        %669 = sbr.rel (%p667) target = $region28
      $region27: #{dualvae_forward.3} parent=11 // pred_region
        _
      $region28: #{dualvae_forward.3} parent=11 // pred_fallthru
        _
      // Predicated region
      $region29: #{dualvae_forward.3} parent=11 // pred_check
        %p670 = pneg %p218
      $region30: #{dualvae_forward.3} parent=11 // pred_check_branch
        %672 = sbr.rel (%p670) target = $region32
      $region31: #{dualvae_forward.3} parent=11 // pred_region
        _
      $region32: #{dualvae_forward.3} parent=11 // pred_fallthru
        _
      // Predicated region
      $region33: #{dualvae_forward.3} parent=11 // pred_check
        %p673 = pneg %p239
      $region34: #{dualvae_forward.3} parent=11 // pred_check_branch
        %675 = sbr.rel (%p673) target = $region36
      $region35: #{dualvae_forward.3} parent=11 // pred_region
        _
      $region36: #{dualvae_forward.3} parent=11 // pred_fallthru
        _
      // Predicated region
      $region37: #{dualvae_forward.3} parent=11 // pred_check
        %p676 = pneg %p260
      $region38: #{dualvae_forward.3} parent=11 // pred_check_branch
        %678 = sbr.rel (%p676) target = $region40
      $region39: #{dualvae_forward.3} parent=11 // pred_region
        _
      $region40: #{dualvae_forward.3} parent=11 // pred_fallthru
        _
      // Predicated region
      $region41: #{dualvae_forward.3} parent=11 // pred_check
        %p679 = pneg %p281
      $region42: #{dualvae_forward.3} parent=11 // pred_check_branch
        %681 = sbr.rel (%p679) target = $region44
      $region43: #{dualvae_forward.3} parent=11 // pred_region
        _
      $region44: #{dualvae_forward.3} parent=11 // pred_fallthru
        _
      // Predicated region
      $region45: #{dualvae_forward.3} parent=11 // pred_check
        %p682 = pneg %p302
      $region46: #{dualvae_forward.3} parent=11 // pred_check_branch
        %684 = sbr.rel (%p682) target = $region48
      $region47: #{dualvae_forward.3} parent=11 // pred_region
        _
      $region48: #{dualvae_forward.3} parent=11 // pred_fallthru
        _
      // Predicated region
      $region49: #{dualvae_forward.3} parent=11 // pred_check
        %p685 = pneg %p323
      $region50: #{dualvae_forward.3} parent=11 // pred_check_branch
        %687 = sbr.rel (%p685) target = $region52
      $region51: #{dualvae_forward.3} parent=11 // pred_region
        _
      $region52: #{dualvae_forward.3} parent=11 // pred_fallthru
        _
      // Predicated region
      $region53: #{dualvae_forward.3} parent=11 // pred_check
        %p688 = pneg %p344
      $region54: #{dualvae_forward.3} parent=11 // pred_check_branch
        %690 = sbr.rel (%p688) target = $region56
      $region55: #{dualvae_forward.3} parent=11 // pred_region
        _
      $region56: #{dualvae_forward.3} parent=11 // pred_fallthru
        _
      // Predicated region
      $region57: #{dualvae_forward.3} parent=11 // pred_check
        %p691 = pneg %p365
      $region58: #{dualvae_forward.3} parent=11 // pred_check_branch
        %693 = sbr.rel (%p691) target = $region60
      $region59: #{dualvae_forward.3} parent=11 // pred_region
        _
      $region60: #{dualvae_forward.3} parent=11 // pred_fallthru
        _
      // Predicated region
      $region61: #{dualvae_forward.3} parent=11 // pred_check
        %p694 = pneg %p386
      $region62: #{dualvae_forward.3} parent=11 // pred_check_branch
        %696 = sbr.rel (%p694) target = $region64
      $region63: #{dualvae_forward.3} parent=11 // pred_region
        _
      $region64: #{dualvae_forward.3} parent=11 // pred_fallthru
        _
      // Predicated region
      $region65: #{dualvae_forward.3} parent=11 // pred_check
        %p697 = pneg %p407
      $region66: #{dualvae_forward.3} parent=11 // pred_check_branch
        %699 = sbr.rel (%p697) target = $region68
      $region67: #{dualvae_forward.3} parent=11 // pred_region
        _
      $region68: #{dualvae_forward.3} parent=11 // pred_fallthru
        _
      // Predicated region
      $region69: #{dualvae_forward.3} parent=11 // pred_check
        %p700 = pneg %p428
      $region70: #{dualvae_forward.3} parent=11 // pred_check_branch
        %702 = sbr.rel (%p700) target = $region72
      $region71: #{dualvae_forward.3} parent=11 // pred_region
        _
      $region72: #{dualvae_forward.3} parent=11 // pred_fallthru
        _
      // Predicated region
      $region73: #{dualvae_forward.3} parent=11 // pred_check
        %p703 = pneg %p449
      $region74: #{dualvae_forward.3} parent=11 // pred_check_branch
        %705 = sbr.rel (%p703) target = $region76
      $region75: #{dualvae_forward.3} parent=11 // pred_region
        _
      $region76: #{dualvae_forward.3} parent=11 // pred_fallthru
        _
      // Predicated region
      $region77: #{dualvae_forward.3} parent=11 // pred_check
        %p706 = pneg %p470
      $region78: #{dualvae_forward.3} parent=11 // pred_check_branch
        %708 = sbr.rel (%p706) target = $region80
      $region79: #{dualvae_forward.3} parent=11 // pred_region
        _
      $region80: #{dualvae_forward.3} parent=11 // pred_fallthru
        _
      // Predicated region
      $region81: #{dualvae_forward.3} parent=11 // pred_check
        %p709 = pneg %p491
      $region82: #{dualvae_forward.3} parent=11 // pred_check_branch
        %711 = sbr.rel (%p709) target = $region84
      $region83: #{dualvae_forward.3} parent=11 // pred_region
        _
      $region84: #{dualvae_forward.3} parent=11 // pred_fallthru
        _
      // Predicated region
      $region85: #{dualvae_forward.3} parent=11 // pred_check
        %p712 = pneg %p512
      $region86: #{dualvae_forward.3} parent=11 // pred_check_branch
        %714 = sbr.rel (%p712) target = $region88
      $region87: #{dualvae_forward.3} parent=11 // pred_region
        _
      $region88: #{dualvae_forward.3} parent=11 // pred_fallthru
        _
      // Predicated region
      $region89: #{dualvae_forward.3} parent=11 // pred_check
        %p715 = pneg %p533
      $region90: #{dualvae_forward.3} parent=11 // pred_check_branch
        %717 = sbr.rel (%p715) target = $region92
      $region91: #{dualvae_forward.3} parent=11 // pred_region
        _
      $region92: #{dualvae_forward.3} parent=11 // pred_fallthru
        _
      // Predicated region
      $region93: #{dualvae_forward.3} parent=11 // pred_check
        %p718 = pneg %p554
      $region94: #{dualvae_forward.3} parent=11 // pred_check_branch
        %720 = sbr.rel (%p718) target = $region96
      $region95: #{dualvae_forward.3} parent=11 // pred_region
        _
      $region96: #{dualvae_forward.3} parent=11 // pred_fallthru
        _
      // Predicated region
      $region97: #{dualvae_forward.3} parent=11 // pred_check
        %p721 = pneg %p575
      $region98: #{dualvae_forward.3} parent=11 // pred_check_branch
        %723 = sbr.rel (%p721) target = $region100
      $region99: #{dualvae_forward.3} parent=11 // pred_region
        _
      $region100: #{dualvae_forward.3} parent=11 // pred_fallthru
        _
      // Predicated region
      $region101: #{dualvae_forward.3} parent=11 // pred_check
        %p724 = pneg %p596
      $region102: #{dualvae_forward.3} parent=11 // pred_check_branch
        %726 = sbr.rel (%p724) target = $region104
      $region103: #{dualvae_forward.3} parent=11 // pred_region
        _
      $region104: #{dualvae_forward.3} parent=11 // pred_fallthru
        _
      // Predicated region
      $region105: #{dualvae_forward.3} parent=11 // pred_check
        %p727 = pneg %p617
      $region106: #{dualvae_forward.3} parent=11 // pred_check_branch
        %729 = sbr.rel (%p727) target = $region108
      $region107: #{dualvae_forward.3} parent=11 // pred_region
        _
      $region108: #{dualvae_forward.3} parent=11 // pred_fallthru
        _
    $region12: #{dualvae_forward.3} parent=5 // pred_fallthru
      _
    %p730 = scmp.lt.s32.totalorder %s35, 4
    // Predicated region
    $region109: #{dualvae_forward.3} parent=5 // pred_check
      %p731 = pneg %p730
    $region110: #{dualvae_forward.3} parent=5 // pred_check_branch
      %733 = sbr.rel (%p731) target = $region112
    $region111: #{dualvae_forward.3} parent=5 // pred_region
      // Predicated region
      $region113: #{dualvae_forward.3} parent=111 // pred_check
        %p734 = pneg %p55
      $region114: #{dualvae_forward.3} parent=111 // pred_check_branch
        %736 = sbr.rel (%p734) target = $region116
      $region115: #{dualvae_forward.3} parent=111 // pred_region
        %s737 = smul.u32 2, %s35
        %p738 = scmp.lt.s32.totalorder %s737, 7
        %s739 = scalar_select %p738, %s737, 7
        %s740 = smul.addr %s739, 8
        %s741 = scalar_lea.vmem %s0, %s740
        %s742 = smul.u32 2, %s35
      $region116: #{dualvae_forward.3} parent=111 // pred_fallthru
        _
      // Predicated region
      $region117: #{dualvae_forward.3} parent=111 // pred_check
        %p743 = pneg %p81
      $region118: #{dualvae_forward.3} parent=111 // pred_check_branch
        %745 = sbr.rel (%p743) target = $region120
      $region119: #{dualvae_forward.3} parent=111 // pred_region
        %s746 = smul.u32 2, %s35
        %p747 = scmp.lt.s32.totalorder %s746, 7
        %s748 = scalar_select %p747, %s746, 7
        %s749 = smul.addr %s748, 8
        %s750 = scalar_lea.vmem %s1, %s749
        %s751 = smul.u32 2, %s35
      $region120: #{dualvae_forward.3} parent=111 // pred_fallthru
        _
      // Predicated region
      $region121: #{dualvae_forward.3} parent=111 // pred_check
        %p752 = pneg %p107
      $region122: #{dualvae_forward.3} parent=111 // pred_check_branch
        %754 = sbr.rel (%p752) target = $region124
      $region123: #{dualvae_forward.3} parent=111 // pred_region
        %s755 = smul.u32 2, %s35
        %p756 = scmp.lt.s32.totalorder %s755, 7
        %s757 = scalar_select %p756, %s755, 7
        %s758 = smul.addr %s757, 8
        %s759 = scalar_lea.vmem %s2, %s758
        %s760 = smul.u32 2, %s35
      $region124: #{dualvae_forward.3} parent=111 // pred_fallthru
        _
    $region112: #{dualvae_forward.3} parent=5 // pred_fallthru
      _
    %p761 = scmp.le.s32.totalorder 1, %s35
    %p762 = scmp.lt.s32.totalorder %s35, 5
    %p763 = pnand %p761, %p762
    %p764 = pneg %p763
    // Predicated region
    $region125: #{dualvae_forward.3} parent=5 // pred_check
      _
    $region126: #{dualvae_forward.3} parent=5 // pred_check_branch
      %766 = sbr.rel (%p763) target = $region128
    $region127: #{dualvae_forward.3} parent=5 // pred_region
      %s767 = ssub.s32 %s35, 1
      %s768 = smul.u32 2, %s40
      %p769 = scmp.lt.s32.totalorder %s768, 7
      %s770 = scalar_select %p769, %s768, 7
      %s771 = smul.addr %s770, 8
      %s772 = scalar_lea.vmem %s0, %s771
      %p773 = pneg %p61
      %p774 = pneg %p58
      %s775 = smul.u32 2, %s40
      %p776 = scmp.lt.s32.totalorder %s775, 7
      %s777 = scalar_select %p776, %s775, 7
      %s778 = smul.addr %s777, 8
      %s779 = scalar_lea.vmem %s1, %s778
      %p780 = pneg %p87
      %p781 = pneg %p84
      %s782 = smul.u32 2, %s40
      %p783 = scmp.lt.s32.totalorder %s782, 7
      %s784 = scalar_select %p783, %s782, 7
      %s785 = smul.addr %s784, 8
      %s786 = scalar_lea.vmem %s2, %s785
      %p787 = pneg %p113
      %p788 = pneg %p110
      %p789 = pneg %p134
      %p790 = pneg %p131
      %p791 = pneg %p155
      %p792 = pneg %p152
      %p793 = pneg %p176
      %p794 = pneg %p173
      %p795 = pneg %p197
      %p796 = pneg %p194
      %p797 = pneg %p218
      %p798 = pneg %p215
      %p799 = pneg %p239
      %p800 = pneg %p236
      %p801 = pneg %p260
      %p802 = pneg %p257
      %p803 = pneg %p281
      %p804 = pneg %p278
      %p805 = pneg %p302
      %p806 = pneg %p299
      %p807 = pneg %p323
      %p808 = pneg %p320
      %p809 = pneg %p344
      %p810 = pneg %p341
      %p811 = pneg %p365
      %p812 = pneg %p362
      %p813 = pneg %p386
      %p814 = pneg %p383
      %p815 = pneg %p407
      %p816 = pneg %p404
      %p817 = pneg %p428
      %p818 = pneg %p425
      %p819 = pneg %p449
      %p820 = pneg %p446
      %p821 = pneg %p470
      %p822 = pneg %p467
      %p823 = pneg %p491
      %p824 = pneg %p488
      %p825 = pneg %p512
      %p826 = pneg %p509
      %p827 = pneg %p533
      %p828 = pneg %p530
      %p829 = pneg %p554
      %p830 = pneg %p551
      %p831 = pneg %p575
      %p832 = pneg %p572
      %p833 = pneg %p596
      %p834 = pneg %p593
      %p835 = pneg %p617
      %p836 = pneg %p614
      %p837 = pneg %p643
      %p838 = pneg %p640
      %s839 = smul.u32 2, %s40
      %p840 = scmp.lt.s32.totalorder %s839, 7
      %s841 = scalar_select %p840, %s839, 7
      %s842 = smul.addr %s841, 8
      %s843 = scalar_lea.vmem %s27, %s842
      %s844 = smul.u32 2, %s40
      %p845 = scmp.lt.s32.totalorder %s844, 7
      %s846 = scalar_select %p845, %s844, 7
      %s847 = smul.addr %s846, 8
      %s848 = scalar_lea.vmem %s0, %s847
      %s849 = smul.u32 2, %s40
      %s850 = smul.u32 2, %s40
      %p851 = scmp.lt.s32.totalorder %s850, 7
      %s852 = scalar_select %p851, %s850, 7
      %s853 = smul.addr %s852, 8
      %s854 = scalar_lea.vmem %s1, %s853
      %s855 = smul.u32 2, %s40
      %s856 = smul.u32 2, %s40
      %p857 = scmp.lt.s32.totalorder %s856, 7
      %s858 = scalar_select %p857, %s856, 7
      %s859 = smul.addr %s858, 8
      %s860 = scalar_lea.vmem %s2, %s859
      %s861 = smul.u32 2, %s40
      %s862 = smul.u32 2, %s40
      %p863 = scmp.lt.s32.totalorder %s862, 7
      %s864 = scalar_select %p863, %s862, 7
      %s865 = smul.addr %s864, 8
      %s866 = scalar_lea.vmem %s27, %s865
      %s867 = smul.u32 2, %s40
      %v868 = vld [vmem:[%s848] sm:$0xff]
      %v869 = vld [vmem:[%s848 + $0x8] sm:$0xff]
      %v870 = vld [vmem:[%s3] sm:$0x1]
      %v872 = vlaneseq
      %v873 = vshrl.u32 %v872, 7
      %v874 = vsub.s32 0, %v873
      %v875 = vrot.slane %v870, %v874
      %v877 = vmul.f32 %v868, %v875
      %v878 = vmul.f32 %v869, %v875
      %v879 = vld [vmem:[%s5] sm:$0xff]
      %v880 = vld [vmem:[%s5 + $0x8] sm:$0xff]
      %v881 = vld [vmem:[%s5 + $0x10] sm:$0xff]
      %v882 = vld [vmem:[%s5 + $0x18] sm:$0xff]
      %v883 = vld [vmem:[%s6] sm:$0x1]
      %v885 = vlaneseq
      %v886 = vshrl.u32 %v885, 7
      %v887 = vsub.s32 0, %v886
      %v888 = vrot.slane %v883, %v887
      %vm890 = vcmask 261120
      %v892 = vsel %vm890, %v877, 0
      %v895 = vsel %vm890, %v878, 0
      %897 = vmatprep.subr.mxu0 0.0
      %898 = vmatpush1.msra.mxu0 0.0
      %899 = vmatprep.subr.mxu0 0.0
      %900 = vmatpush1.msra.mxu0 0.0
      %901 = vmatprep.subr.mxu0 0.0
      %902 = vmatpush1.msra.mxu0 0.0
      %903 = vmatprep.subr.mxu0 0.0
      %904 = vmatpush1.msra.mxu0 0.0
      %905 = vmatprep.subr.mxu0 0.0
      %906 = vmatpush1.msra.mxu0 0.0
      %907 = vmatprep.subr.mxu0 0.0
      %908 = vmatpush1.msra.mxu0 0.0
      %909 = vmatprep.subr.mxu0 0.0
      %910 = vmatpush1.msra.mxu0 0.0
      %911 = vmatprep.subr.mxu0 0.0
      %912 = vmatpush1.msra.mxu0 0.0
      %913 = vmatprep.subr.mxu0 0.0
      %914 = vmatpush1.msra.mxu0 0.0
      %915 = vmatprep.subr.mxu0 0.0
      %916 = vmatpush1.msra.mxu0 0.0
      %917 = vmatprep.subr.mxu0 0.0
      %918 = vmatpush1.msra.mxu0 0.0
      %919 = vmatprep.subr.mxu0 0.0
      %920 = vmatpush1.msra.mxu0 0.0
      %921 = vmatprep.subr.mxu0 0.0
      %922 = vmatpush1.msra.mxu0 %v882
      %923 = vmatprep.subr.mxu0 0.0
      %924 = vmatpush1.msra.mxu0 %v881
      %925 = vmatprep.subr.mxu0 0.0
      %926 = vmatpush1.msra.mxu0 %v880
      %927 = vmatprep.subr.mxu0 0.0
      %928 = vmatpush1.msra.mxu0 %v879
      %929 = vmatprep.subr.mxu0 0.0
      %930 = vmatpush2.msra.mxu0 0.0
      %931 = vmatprep.subr.mxu0 0.0
      %932 = vmatpush2.msra.mxu0 0.0
      %933 = vmatprep.subr.mxu0 0.0
      %934 = vmatpush2.msra.mxu0 0.0
      %935 = vmatprep.subr.mxu0 0.0
      %936 = vmatpush2.msra.mxu0 0.0
      %937 = vmatprep.subr.mxu0 0.0
      %938 = vmatpush2.msra.mxu0 0.0
      %939 = vmatprep.subr.mxu0 0.0
      %940 = vmatpush2.msra.mxu0 0.0
      %941 = vmatprep.subr.mxu0 0.0
      %942 = vmatpush2.msra.mxu0 0.0
      %943 = vmatprep.subr.mxu0 0.0
      %944 = vmatpush2.msra.mxu0 0.0
      %945 = vmatprep.subr.mxu0 0.0
      %946 = vmatpush2.msra.mxu0 0.0
      %947 = vmatprep.subr.mxu0 0.0
      %948 = vmatpush2.msra.mxu0 0.0
      %949 = vmatprep.subr.mxu0 0.0
      %950 = vmatpush2.msra.mxu0 0.0
      %951 = vmatprep.subr.mxu0 0.0
      %952 = vmatpush2.msra.mxu0 0.0
      %953 = vmatprep.subr.mxu0 0.0
      %954 = vmatpush2.msra.mxu0 0.0
      %955 = vmatprep.subr.mxu0 0.0
      %956 = vmatpush2.msra.mxu0 0.0
      %957 = vmatprep.subr.mxu0 0.0
      %958 = vmatpush2.msra.mxu0 0.0
      %959 = vmatprep.subr.mxu0 0.0
      %960 = vmatpush2.msra.mxu0 0.0
      %961 = vmatprep.mubr.f32.mxu0 0.0
      %962 = vmatmul.mubr.f32.gmra.mxu0 %v892
      %v963 = vpop.f32.mrf.mxu0
      %v964 = vadd.f32 %v888, %v963
      %v965 = vpop.f32.mrf.mxu0
      %966 = vmatprep.mubr.f32.mxu0 0.0
      %967 = vmatmul.mubr.f32.gmra.mxu0 %v895
      %v968 = vpop.f32.mrf.mxu0
      %v969 = vadd.f32 %v888, %v968
      %v970 = vpop.f32.mrf.mxu0
      %971 = vdwg.mxu0
      %v972 = vmul.f32 %v964, 0.999995
      %v973 = vmul.f32 %v969, 0.999995
      %v974 = vmax.f32 %v972, 0.0
      %v975 = vmax.f32 %v973, 0.0
      %v976 = vld [vmem:[%s7] sm:$0xff]
      %v977 = vld [vmem:[%s7 + $0x8] sm:$0xff]
      %v978 = vld [vmem:[%s7 + $0x10] sm:$0xff]
      %v979 = vld [vmem:[%s7 + $0x18] sm:$0xff]
      %v980 = vld [vmem:[%s8] sm:$0x1]
      %v982 = vlaneseq
      %v983 = vshrl.u32 %v982, 7
      %v984 = vsub.s32 0, %v983
      %v985 = vrot.slane %v980, %v984
      %v988 = vsel %vm890, %v974, 0
      %v991 = vsel %vm890, %v975, 0
      %993 = vmatprep.subr.mxu0 0.0
      %994 = vmatpush1.msra.mxu0 0.0
      %995 = vmatprep.subr.mxu0 0.0
      %996 = vmatpush1.msra.mxu0 0.0
      %997 = vmatprep.subr.mxu0 0.0
      %998 = vmatpush1.msra.mxu0 0.0
      %999 = vmatprep.subr.mxu0 0.0
      %1000 = vmatpush1.msra.mxu0 0.0
      %1001 = vmatprep.subr.mxu0 0.0
      %1002 = vmatpush1.msra.mxu0 0.0
      %1003 = vmatprep.subr.mxu0 0.0
      %1004 = vmatpush1.msra.mxu0 0.0
      %1005 = vmatprep.subr.mxu0 0.0
      %1006 = vmatpush1.msra.mxu0 0.0
      %1007 = vmatprep.subr.mxu0 0.0
      %1008 = vmatpush1.msra.mxu0 0.0
      %1009 = vmatprep.subr.mxu0 0.0
      %1010 = vmatpush1.msra.mxu0 0.0
      %1011 = vmatprep.subr.mxu0 0.0
      %1012 = vmatpush1.msra.mxu0 0.0
      %1013 = vmatprep.subr.mxu0 0.0
      %1014 = vmatpush1.msra.mxu0 0.0
      %1015 = vmatprep.subr.mxu0 0.0
      %1016 = vmatpush1.msra.mxu0 0.0
      %1017 = vmatprep.subr.mxu0 0.0
      %1018 = vmatpush1.msra.mxu0 %v979
      %1019 = vmatprep.subr.mxu0 0.0
      %1020 = vmatpush1.msra.mxu0 %v978
      %1021 = vmatprep.subr.mxu0 0.0
      %1022 = vmatpush1.msra.mxu0 %v977
      %1023 = vmatprep.subr.mxu0 0.0
      %1024 = vmatpush1.msra.mxu0 %v976
      %1025 = vmatprep.subr.mxu0 0.0
      %1026 = vmatpush2.msra.mxu0 0.0
      %1027 = vmatprep.subr.mxu0 0.0
      %1028 = vmatpush2.msra.mxu0 0.0
      %1029 = vmatprep.subr.mxu0 0.0
      %1030 = vmatpush2.msra.mxu0 0.0
      %1031 = vmatprep.subr.mxu0 0.0
      %1032 = vmatpush2.msra.mxu0 0.0
      %1033 = vmatprep.subr.mxu0 0.0
      %1034 = vmatpush2.msra.mxu0 0.0
      %1035 = vmatprep.subr.mxu0 0.0
      %1036 = vmatpush2.msra.mxu0 0.0
      %1037 = vmatprep.subr.mxu0 0.0
      %1038 = vmatpush2.msra.mxu0 0.0
      %1039 = vmatprep.subr.mxu0 0.0
      %1040 = vmatpush2.msra.mxu0 0.0
      %1041 = vmatprep.subr.mxu0 0.0
      %1042 = vmatpush2.msra.mxu0 0.0
      %1043 = vmatprep.subr.mxu0 0.0
      %1044 = vmatpush2.msra.mxu0 0.0
      %1045 = vmatprep.subr.mxu0 0.0
      %1046 = vmatpush2.msra.mxu0 0.0
      %1047 = vmatprep.subr.mxu0 0.0
      %1048 = vmatpush2.msra.mxu0 0.0
      %1049 = vmatprep.subr.mxu0 0.0
      %1050 = vmatpush2.msra.mxu0 0.0
      %1051 = vmatprep.subr.mxu0 0.0
      %1052 = vmatpush2.msra.mxu0 0.0
      %1053 = vmatprep.subr.mxu0 0.0
      %1054 = vmatpush2.msra.mxu0 0.0
      %1055 = vmatprep.subr.mxu0 0.0
      %1056 = vmatpush2.msra.mxu0 0.0
      %1057 = vmatprep.mubr.f32.mxu0 0.0
      %1058 = vmatmul.mubr.f32.gmra.mxu0 %v988
      %v1059 = vpop.f32.mrf.mxu0
      %v1060 = vadd.f32 %v985, %v1059
      %v1061 = vpop.f32.mrf.mxu0
      %1062 = vmatprep.mubr.f32.mxu0 0.0
      %1063 = vmatmul.mubr.f32.gmra.mxu0 %v991
      %v1064 = vpop.f32.mrf.mxu0
      %v1065 = vadd.f32 %v985, %v1064
      %v1066 = vpop.f32.mrf.mxu0
      %1067 = vdwg.mxu0
      %v1068 = vmul.f32 %v1060, 0.5
      %v1069 = vmul.f32 %v1065, 0.5
      %v1070 = vmul.f32 %v1068, 1.442695
      %v1071 = vpow.pop %v1070
      %v1072 = vmul.f32 %v1069, 1.442695
      %v1073 = vpow.pop %v1072
      %v1074 = vmul.f32 %v1071, %v1071
      %v1075 = vmul.f32 %v1073, %v1073
      %v1076 = vld [vmem:[%s854] sm:$0xff]
      %v1077 = vld [vmem:[%s854 + $0x8] sm:$0xff]
      %1080 = vrot.lane.b32.xlu0 %v1076, 4
      %v1081 = vpop.permute.xlu0 %1080
      %1082 = vrot.lane.b32.xlu0 %v1077, 4
      %v1083 = vpop.permute.xlu0 %1082
      %v1086 = vmul.f32 %v1071, %v1081
      %v1087 = vmul.f32 %v1073, %v1083
      %1090 = vrot.lane.b32.xlu0 %v1086, 124
      %v1091 = vpop.permute.xlu0 %1090
      %1092 = vrot.lane.b32.xlu0 %v1087, 124
      %v1093 = vpop.permute.xlu0 %1092
      %v1096 = vadd.f32 %v1060, %v1091
      %v1097 = vadd.f32 %v1065, %v1093
      %v1098 = vld [vmem:[%s9] sm:$0xf]
      %v1099 = vld [vmem:[%s10] sm:$0x1]
      %v1101 = vlaneseq
      %v1102 = vshrl.u32 %v1101, 7
      %v1103 = vsub.s32 0, %v1102
      %v1104 = vrot.slane %v1099, %v1103
      %vm1106 = vcmask 31744
      %v1108 = vsel %vm1106, %v1096, 0
      %v1111 = vsel %vm1106, %v1097, 0
      %vm1113 = vcmask 1043456
      %v1115 = vsel %vm1113, %v1098, 0
      %1117 = vmatprep.subr.mxu0 0.0
      %1118 = vmatpush1.msra.mxu0 0.0
      %1119 = vmatprep.subr.mxu0 0.0
      %1120 = vmatpush1.msra.mxu0 0.0
      %1121 = vmatprep.subr.mxu0 0.0
      %1122 = vmatpush1.msra.mxu0 0.0
      %1123 = vmatprep.subr.mxu0 0.0
      %1124 = vmatpush1.msra.mxu0 0.0
      %1125 = vmatprep.subr.mxu0 0.0
      %1126 = vmatpush1.msra.mxu0 0.0
      %1127 = vmatprep.subr.mxu0 0.0
      %1128 = vmatpush1.msra.mxu0 0.0
      %1129 = vmatprep.subr.mxu0 0.0
      %1130 = vmatpush1.msra.mxu0 0.0
      %1131 = vmatprep.subr.mxu0 0.0
      %1132 = vmatpush1.msra.mxu0 0.0
      %1133 = vmatprep.subr.mxu0 0.0
      %1134 = vmatpush1.msra.mxu0 0.0
      %1135 = vmatprep.subr.mxu0 0.0
      %1136 = vmatpush1.msra.mxu0 0.0
      %1137 = vmatprep.subr.mxu0 0.0
      %1138 = vmatpush1.msra.mxu0 0.0
      %1139 = vmatprep.subr.mxu0 0.0
      %1140 = vmatpush1.msra.mxu0 0.0
      %1141 = vmatprep.subr.mxu0 0.0
      %1142 = vmatpush1.msra.mxu0 0.0
      %1143 = vmatprep.subr.mxu0 0.0
      %1144 = vmatpush1.msra.mxu0 0.0
      %1145 = vmatprep.subr.mxu0 0.0
      %1146 = vmatpush1.msra.mxu0 0.0
      %1147 = vmatprep.subr.mxu0 0.0
      %1148 = vmatpush1.msra.mxu0 %v1115
      %1149 = vmatprep.subr.mxu0 0.0
      %1150 = vmatpush2.msra.mxu0 0.0
      %1151 = vmatprep.subr.mxu0 0.0
      %1152 = vmatpush2.msra.mxu0 0.0
      %1153 = vmatprep.subr.mxu0 0.0
      %1154 = vmatpush2.msra.mxu0 0.0
      %1155 = vmatprep.subr.mxu0 0.0
      %1156 = vmatpush2.msra.mxu0 0.0
      %1157 = vmatprep.subr.mxu0 0.0
      %1158 = vmatpush2.msra.mxu0 0.0
      %1159 = vmatprep.subr.mxu0 0.0
      %1160 = vmatpush2.msra.mxu0 0.0
      %1161 = vmatprep.subr.mxu0 0.0
      %1162 = vmatpush2.msra.mxu0 0.0
      %1163 = vmatprep.subr.mxu0 0.0
      %1164 = vmatpush2.msra.mxu0 0.0
      %1165 = vmatprep.subr.mxu0 0.0
      %1166 = vmatpush2.msra.mxu0 0.0
      %1167 = vmatprep.subr.mxu0 0.0
      %1168 = vmatpush2.msra.mxu0 0.0
      %1169 = vmatprep.subr.mxu0 0.0
      %1170 = vmatpush2.msra.mxu0 0.0
      %1171 = vmatprep.subr.mxu0 0.0
      %1172 = vmatpush2.msra.mxu0 0.0
      %1173 = vmatprep.subr.mxu0 0.0
      %1174 = vmatpush2.msra.mxu0 0.0
      %1175 = vmatprep.subr.mxu0 0.0
      %1176 = vmatpush2.msra.mxu0 0.0
      %1177 = vmatprep.subr.mxu0 0.0
      %1178 = vmatpush2.msra.mxu0 0.0
      %1179 = vmatprep.subr.mxu0 0.0
      %1180 = vmatpush2.msra.mxu0 0.0
      %1181 = vmatprep.mubr.f32.mxu0 0.0
      %1182 = vmatmul.mubr.f32.gmra.mxu0 %v1108
      %v1183 = vpop.f32.mrf.mxu0
      %v1184 = vadd.f32 %v1104, %v1183
      %v1185 = vpop.f32.mrf.mxu0
      %1186 = vmatprep.mubr.f32.mxu0 0.0
      %1187 = vmatmul.mubr.f32.gmra.mxu0 %v1111
      %v1188 = vpop.f32.mrf.mxu0
      %v1189 = vadd.f32 %v1104, %v1188
      %v1190 = vpop.f32.mrf.mxu0
      %1191 = vdwg.mxu0
      %v1192 = vmul.f32 %v1184, 0.999995
      %v1193 = vmul.f32 %v1189, 0.999995
      %v1194 = vmax.f32 %v1192, 0.0
      %v1195 = vmax.f32 %v1193, 0.0
      %v1196 = vld [vmem:[%s11] sm:$0xff]
      %v1197 = vld [vmem:[%s11 + $0x8] sm:$0xff]
      %v1198 = vld [vmem:[%s11 + $0x10] sm:$0xff]
      %v1199 = vld [vmem:[%s11 + $0x18] sm:$0xff]
      %v1200 = vld [vmem:[%s12] sm:$0x1]
      %v1202 = vlaneseq
      %v1203 = vshrl.u32 %v1202, 7
      %v1204 = vsub.s32 0, %v1203
      %v1205 = vrot.slane %v1200, %v1204
      %v1208 = vsel %vm890, %v1194, 0
      %v1211 = vsel %vm890, %v1195, 0
      %1213 = vmatprep.subr.mxu0 0.0
      %1214 = vmatpush1.msra.mxu0 0.0
      %1215 = vmatprep.subr.mxu0 0.0
      %1216 = vmatpush1.msra.mxu0 0.0
      %1217 = vmatprep.subr.mxu0 0.0
      %1218 = vmatpush1.msra.mxu0 0.0
      %1219 = vmatprep.subr.mxu0 0.0
      %1220 = vmatpush1.msra.mxu0 0.0
      %1221 = vmatprep.subr.mxu0 0.0
      %1222 = vmatpush1.msra.mxu0 0.0
      %1223 = vmatprep.subr.mxu0 0.0
      %1224 = vmatpush1.msra.mxu0 0.0
      %1225 = vmatprep.subr.mxu0 0.0
      %1226 = vmatpush1.msra.mxu0 0.0
      %1227 = vmatprep.subr.mxu0 0.0
      %1228 = vmatpush1.msra.mxu0 0.0
      %1229 = vmatprep.subr.mxu0 0.0
      %1230 = vmatpush1.msra.mxu0 0.0
      %1231 = vmatprep.subr.mxu0 0.0
      %1232 = vmatpush1.msra.mxu0 0.0
      %1233 = vmatprep.subr.mxu0 0.0
      %1234 = vmatpush1.msra.mxu0 0.0
      %1235 = vmatprep.subr.mxu0 0.0
      %1236 = vmatpush1.msra.mxu0 0.0
      %1237 = vmatprep.subr.mxu0 0.0
      %1238 = vmatpush1.msra.mxu0 %v1199
      %1239 = vmatprep.subr.mxu0 0.0
      %1240 = vmatpush1.msra.mxu0 %v1198
      %1241 = vmatprep.subr.mxu0 0.0
      %1242 = vmatpush1.msra.mxu0 %v1197
      %1243 = vmatprep.subr.mxu0 0.0
      %1244 = vmatpush1.msra.mxu0 %v1196
      %1245 = vmatprep.subr.mxu0 0.0
      %1246 = vmatpush2.msra.mxu0 0.0
      %1247 = vmatprep.subr.mxu0 0.0
      %1248 = vmatpush2.msra.mxu0 0.0
      %1249 = vmatprep.subr.mxu0 0.0
      %1250 = vmatpush2.msra.mxu0 0.0
      %1251 = vmatprep.subr.mxu0 0.0
      %1252 = vmatpush2.msra.mxu0 0.0
      %1253 = vmatprep.subr.mxu0 0.0
      %1254 = vmatpush2.msra.mxu0 0.0
      %1255 = vmatprep.subr.mxu0 0.0
      %1256 = vmatpush2.msra.mxu0 0.0
      %1257 = vmatprep.subr.mxu0 0.0
      %1258 = vmatpush2.msra.mxu0 0.0
      %1259 = vmatprep.subr.mxu0 0.0
      %1260 = vmatpush2.msra.mxu0 0.0
      %1261 = vmatprep.subr.mxu0 0.0
      %1262 = vmatpush2.msra.mxu0 0.0
      %1263 = vmatprep.subr.mxu0 0.0
      %1264 = vmatpush2.msra.mxu0 0.0
      %1265 = vmatprep.subr.mxu0 0.0
      %1266 = vmatpush2.msra.mxu0 0.0
      %1267 = vmatprep.subr.mxu0 0.0
      %1268 = vmatpush2.msra.mxu0 0.0
      %1269 = vmatprep.subr.mxu0 0.0
      %1270 = vmatpush2.msra.mxu0 0.0
      %1271 = vmatprep.subr.mxu0 0.0
      %1272 = vmatpush2.msra.mxu0 0.0
      %1273 = vmatprep.subr.mxu0 0.0
      %1274 = vmatpush2.msra.mxu0 0.0
      %1275 = vmatprep.subr.mxu0 0.0
      %1276 = vmatpush2.msra.mxu0 0.0
      %1277 = vmatprep.mubr.f32.mxu0 0.0
      %1278 = vmatmul.mubr.f32.gmra.mxu0 %v1208
      %v1279 = vpop.f32.mrf.mxu0
      %v1280 = vadd.f32 %v1205, %v1279
      %v1281 = vpop.f32.mrf.mxu0
      %1282 = vmatprep.mubr.f32.mxu0 0.0
      %1283 = vmatmul.mubr.f32.gmra.mxu0 %v1211
      %v1284 = vpop.f32.mrf.mxu0
      %v1285 = vadd.f32 %v1205, %v1284
      %v1286 = vpop.f32.mrf.mxu0
      %1287 = vdwg.mxu0
      %v1288 = vld [vmem:[%s860] sm:$0xff]
      %v1289 = vld [vmem:[%s860 + $0x8] sm:$0xff]
      %v1290 = vld [vmem:[%s13] sm:$0xf]
      %v1291 = vld [vmem:[%s14] sm:$0x1]
      %v1293 = vlaneseq
      %v1294 = vshrl.u32 %v1293, 7
      %v1295 = vsub.s32 0, %v1294
      %v1296 = vrot.slane %v1291, %v1295
      %v1299 = vsel %vm1106, %v1288, 0
      %v1302 = vsel %vm1106, %v1289, 0
      %v1305 = vsel %vm1113, %v1290, 0
      %1307 = vmatprep.subr.mxu0 0.0
      %1308 = vmatpush1.msra.mxu0 0.0
      %1309 = vmatprep.subr.mxu0 0.0
      %1310 = vmatpush1.msra.mxu0 0.0
      %1311 = vmatprep.subr.mxu0 0.0
      %1312 = vmatpush1.msra.mxu0 0.0
      %1313 = vmatprep.subr.mxu0 0.0
      %1314 = vmatpush1.msra.mxu0 0.0
      %1315 = vmatprep.subr.mxu0 0.0
      %1316 = vmatpush1.msra.mxu0 0.0
      %1317 = vmatprep.subr.mxu0 0.0
      %1318 = vmatpush1.msra.mxu0 0.0
      %1319 = vmatprep.subr.mxu0 0.0
      %1320 = vmatpush1.msra.mxu0 0.0
      %1321 = vmatprep.subr.mxu0 0.0
      %1322 = vmatpush1.msra.mxu0 0.0
      %1323 = vmatprep.subr.mxu0 0.0
      %1324 = vmatpush1.msra.mxu0 0.0
      %1325 = vmatprep.subr.mxu0 0.0
      %1326 = vmatpush1.msra.mxu0 0.0
      %1327 = vmatprep.subr.mxu0 0.0
      %1328 = vmatpush1.msra.mxu0 0.0
      %1329 = vmatprep.subr.mxu0 0.0
      %1330 = vmatpush1.msra.mxu0 0.0
      %1331 = vmatprep.subr.mxu0 0.0
      %1332 = vmatpush1.msra.mxu0 0.0
      %1333 = vmatprep.subr.mxu0 0.0
      %1334 = vmatpush1.msra.mxu0 0.0
      %1335 = vmatprep.subr.mxu0 0.0
      %1336 = vmatpush1.msra.mxu0 0.0
      %1337 = vmatprep.subr.mxu0 0.0
      %1338 = vmatpush1.msra.mxu0 %v1305
      %1339 = vmatprep.subr.mxu0 0.0
      %1340 = vmatpush2.msra.mxu0 0.0
      %1341 = vmatprep.subr.mxu0 0.0
      %1342 = vmatpush2.msra.mxu0 0.0
      %1343 = vmatprep.subr.mxu0 0.0
      %1344 = vmatpush2.msra.mxu0 0.0
      %1345 = vmatprep.subr.mxu0 0.0
      %1346 = vmatpush2.msra.mxu0 0.0
      %1347 = vmatprep.subr.mxu0 0.0
      %1348 = vmatpush2.msra.mxu0 0.0
      %1349 = vmatprep.subr.mxu0 0.0
      %1350 = vmatpush2.msra.mxu0 0.0
      %1351 = vmatprep.subr.mxu0 0.0
      %1352 = vmatpush2.msra.mxu0 0.0
      %1353 = vmatprep.subr.mxu0 0.0
      %1354 = vmatpush2.msra.mxu0 0.0
      %1355 = vmatprep.subr.mxu0 0.0
      %1356 = vmatpush2.msra.mxu0 0.0
      %1357 = vmatprep.subr.mxu0 0.0
      %1358 = vmatpush2.msra.mxu0 0.0
      %1359 = vmatprep.subr.mxu0 0.0
      %1360 = vmatpush2.msra.mxu0 0.0
      %1361 = vmatprep.subr.mxu0 0.0
      %1362 = vmatpush2.msra.mxu0 0.0
      %1363 = vmatprep.subr.mxu0 0.0
      %1364 = vmatpush2.msra.mxu0 0.0
      %1365 = vmatprep.subr.mxu0 0.0
      %1366 = vmatpush2.msra.mxu0 0.0
      %1367 = vmatprep.subr.mxu0 0.0
      %1368 = vmatpush2.msra.mxu0 0.0
      %1369 = vmatprep.subr.mxu0 0.0
      %1370 = vmatpush2.msra.mxu0 0.0
      %1371 = vmatprep.mubr.f32.mxu0 0.0
      %1372 = vmatmul.mubr.f32.gmra.mxu0 %v1299
      %v1373 = vpop.f32.mrf.mxu0
      %v1374 = vadd.f32 %v1296, %v1373
      %v1375 = vpop.f32.mrf.mxu0
      %1376 = vmatprep.mubr.f32.mxu0 0.0
      %1377 = vmatmul.mubr.f32.gmra.mxu0 %v1302
      %v1378 = vpop.f32.mrf.mxu0
      %v1379 = vadd.f32 %v1296, %v1378
      %v1380 = vpop.f32.mrf.mxu0
      %1381 = vdwg.mxu0
      %v1382 = vmul.f32 %v1374, 0.999995
      %v1383 = vmul.f32 %v1379, 0.999995
      %v1384 = vmax.f32 %v1382, 0.0
      %v1385 = vmax.f32 %v1383, 0.0
      %v1386 = vld [vmem:[%s15] sm:$0xff]
      %v1387 = vld [vmem:[%s15 + $0x8] sm:$0xff]
      %v1388 = vld [vmem:[%s15 + $0x10] sm:$0xff]
      %v1389 = vld [vmem:[%s15 + $0x18] sm:$0xff]
      %v1390 = vld [vmem:[%s16] sm:$0x1]
      %v1392 = vlaneseq
      %v1393 = vshrl.u32 %v1392, 7
      %v1394 = vsub.s32 0, %v1393
      %v1395 = vrot.slane %v1390, %v1394
      %v1398 = vsel %vm890, %v1384, 0
      %v1401 = vsel %vm890, %v1385, 0
      %1403 = vmatprep.subr.mxu0 0.0
      %1404 = vmatpush1.msra.mxu0 0.0
      %1405 = vmatprep.subr.mxu0 0.0
      %1406 = vmatpush1.msra.mxu0 0.0
      %1407 = vmatprep.subr.mxu0 0.0
      %1408 = vmatpush1.msra.mxu0 0.0
      %1409 = vmatprep.subr.mxu0 0.0
      %1410 = vmatpush1.msra.mxu0 0.0
      %1411 = vmatprep.subr.mxu0 0.0
      %1412 = vmatpush1.msra.mxu0 0.0
      %1413 = vmatprep.subr.mxu0 0.0
      %1414 = vmatpush1.msra.mxu0 0.0
      %1415 = vmatprep.subr.mxu0 0.0
      %1416 = vmatpush1.msra.mxu0 0.0
      %1417 = vmatprep.subr.mxu0 0.0
      %1418 = vmatpush1.msra.mxu0 0.0
      %1419 = vmatprep.subr.mxu0 0.0
      %1420 = vmatpush1.msra.mxu0 0.0
      %1421 = vmatprep.subr.mxu0 0.0
      %1422 = vmatpush1.msra.mxu0 0.0
      %1423 = vmatprep.subr.mxu0 0.0
      %1424 = vmatpush1.msra.mxu0 0.0
      %1425 = vmatprep.subr.mxu0 0.0
      %1426 = vmatpush1.msra.mxu0 0.0
      %1427 = vmatprep.subr.mxu0 0.0
      %1428 = vmatpush1.msra.mxu0 %v1389
      %1429 = vmatprep.subr.mxu0 0.0
      %1430 = vmatpush1.msra.mxu0 %v1388
      %1431 = vmatprep.subr.mxu0 0.0
      %1432 = vmatpush1.msra.mxu0 %v1387
      %1433 = vmatprep.subr.mxu0 0.0
      %1434 = vmatpush1.msra.mxu0 %v1386
      %1435 = vmatprep.subr.mxu0 0.0
      %1436 = vmatpush2.msra.mxu0 0.0
      %1437 = vmatprep.subr.mxu0 0.0
      %1438 = vmatpush2.msra.mxu0 0.0
      %1439 = vmatprep.subr.mxu0 0.0
      %1440 = vmatpush2.msra.mxu0 0.0
      %1441 = vmatprep.subr.mxu0 0.0
      %1442 = vmatpush2.msra.mxu0 0.0
      %1443 = vmatprep.subr.mxu0 0.0
      %1444 = vmatpush2.msra.mxu0 0.0
      %1445 = vmatprep.subr.mxu0 0.0
      %1446 = vmatpush2.msra.mxu0 0.0
      %1447 = vmatprep.subr.mxu0 0.0
      %1448 = vmatpush2.msra.mxu0 0.0
      %1449 = vmatprep.subr.mxu0 0.0
      %1450 = vmatpush2.msra.mxu0 0.0
      %1451 = vmatprep.subr.mxu0 0.0
      %1452 = vmatpush2.msra.mxu0 0.0
      %1453 = vmatprep.subr.mxu0 0.0
      %1454 = vmatpush2.msra.mxu0 0.0
      %1455 = vmatprep.subr.mxu0 0.0
      %1456 = vmatpush2.msra.mxu0 0.0
      %1457 = vmatprep.subr.mxu0 0.0
      %1458 = vmatpush2.msra.mxu0 0.0
      %1459 = vmatprep.subr.mxu0 0.0
      %1460 = vmatpush2.msra.mxu0 0.0
      %1461 = vmatprep.subr.mxu0 0.0
      %1462 = vmatpush2.msra.mxu0 0.0
      %1463 = vmatprep.subr.mxu0 0.0
      %1464 = vmatpush2.msra.mxu0 0.0
      %1465 = vmatprep.subr.mxu0 0.0
      %1466 = vmatpush2.msra.mxu0 0.0
      %1467 = vmatprep.mubr.f32.mxu0 0.0
      %1468 = vmatmul.mubr.f32.gmra.mxu0 %v1398
      %v1469 = vpop.f32.mrf.mxu0
      %v1470 = vadd.f32 %v1395, %v1469
      %v1471 = vpop.f32.mrf.mxu0
      %1472 = vmatprep.mubr.f32.mxu0 0.0
      %1473 = vmatmul.mubr.f32.gmra.mxu0 %v1401
      %v1474 = vpop.f32.mrf.mxu0
      %v1475 = vadd.f32 %v1395, %v1474
      %v1476 = vpop.f32.mrf.mxu0
      %1477 = vdwg.mxu0
      %v1478 = vld [vmem:[%s17] sm:$0xf]
      %v1480 = vsel %vm1113, %v1478, 0
      %1482 = vmatprep.subr.mxu0 0.0
      %1483 = vmatpush1.msra.mxu0 0.0
      %1484 = vmatprep.subr.mxu0 0.0
      %1485 = vmatpush1.msra.mxu0 0.0
      %1486 = vmatprep.subr.mxu0 0.0
      %1487 = vmatpush1.msra.mxu0 0.0
      %1488 = vmatprep.subr.mxu0 0.0
      %1489 = vmatpush1.msra.mxu0 0.0
      %1490 = vmatprep.subr.mxu0 0.0
      %1491 = vmatpush1.msra.mxu0 0.0
      %1492 = vmatprep.subr.mxu0 0.0
      %1493 = vmatpush1.msra.mxu0 0.0
      %1494 = vmatprep.subr.mxu0 0.0
      %1495 = vmatpush1.msra.mxu0 0.0
      %1496 = vmatprep.subr.mxu0 0.0
      %1497 = vmatpush1.msra.mxu0 0.0
      %1498 = vmatprep.subr.mxu0 0.0
      %1499 = vmatpush1.msra.mxu0 0.0
      %1500 = vmatprep.subr.mxu0 0.0
      %1501 = vmatpush1.msra.mxu0 0.0
      %1502 = vmatprep.subr.mxu0 0.0
      %1503 = vmatpush1.msra.mxu0 0.0
      %1504 = vmatprep.subr.mxu0 0.0
      %1505 = vmatpush1.msra.mxu0 0.0
      %1506 = vmatprep.subr.mxu0 0.0
      %1507 = vmatpush1.msra.mxu0 0.0
      %1508 = vmatprep.subr.mxu0 0.0
      %1509 = vmatpush1.msra.mxu0 0.0
      %1510 = vmatprep.subr.mxu0 0.0
      %1511 = vmatpush1.msra.mxu0 0.0
      %1512 = vmatprep.subr.mxu0 0.0
      %1513 = vmatpush1.msra.mxu0 %v1480
      %1514 = vmatprep.subr.mxu0 0.0
      %1515 = vmatpush2.msra.mxu0 0.0
      %1516 = vmatprep.subr.mxu0 0.0
      %1517 = vmatpush2.msra.mxu0 0.0
      %1518 = vmatprep.subr.mxu0 0.0
      %1519 = vmatpush2.msra.mxu0 0.0
      %1520 = vmatprep.subr.mxu0 0.0
      %1521 = vmatpush2.msra.mxu0 0.0
      %1522 = vmatprep.subr.mxu0 0.0
      %1523 = vmatpush2.msra.mxu0 0.0
      %1524 = vmatprep.subr.mxu0 0.0
      %1525 = vmatpush2.msra.mxu0 0.0
      %1526 = vmatprep.subr.mxu0 0.0
      %1527 = vmatpush2.msra.mxu0 0.0
      %1528 = vmatprep.subr.mxu0 0.0
      %1529 = vmatpush2.msra.mxu0 0.0
      %1530 = vmatprep.subr.mxu0 0.0
      %1531 = vmatpush2.msra.mxu0 0.0
      %1532 = vmatprep.subr.mxu0 0.0
      %1533 = vmatpush2.msra.mxu0 0.0
      %1534 = vmatprep.subr.mxu0 0.0
      %1535 = vmatpush2.msra.mxu0 0.0
      %1536 = vmatprep.subr.mxu0 0.0
      %1537 = vmatpush2.msra.mxu0 0.0
      %1538 = vmatprep.subr.mxu0 0.0
      %1539 = vmatpush2.msra.mxu0 0.0
      %1540 = vmatprep.subr.mxu0 0.0
      %1541 = vmatpush2.msra.mxu0 0.0
      %1542 = vmatprep.subr.mxu0 0.0
      %1543 = vmatpush2.msra.mxu0 0.0
      %1544 = vmatprep.subr.mxu0 0.0
      %1545 = vmatpush2.msra.mxu0 0.0
      %1546 = vmatprep.mubr.f32.mxu0 0.0
      %1547 = vmatmul.mubr.f32.gmra.mxu0 %v1108
      %v1548 = vpop.f32.mrf.mxu0
      %v1549 = vadd.f32 0.0, %v1548
      %v1550 = vpop.f32.mrf.mxu0
      %1551 = vmatprep.mubr.f32.mxu0 0.0
      %1552 = vmatmul.mubr.f32.gmra.mxu0 %v1111
      %v1553 = vpop.f32.mrf.mxu0
      %v1554 = vadd.f32 0.0, %v1553
      %v1555 = vpop.f32.mrf.mxu0
      %1556 = vdwg.mxu0
      %v1557 = vld [vmem:[%s18] sm:$0xf]
      %v1559 = vsel %vm1113, %v1557, 0
      %1561 = vmatprep.subr.mxu0 0.0
      %1562 = vmatpush1.msra.mxu0 0.0
      %1563 = vmatprep.subr.mxu0 0.0
      %1564 = vmatpush1.msra.mxu0 0.0
      %1565 = vmatprep.subr.mxu0 0.0
      %1566 = vmatpush1.msra.mxu0 0.0
      %1567 = vmatprep.subr.mxu0 0.0
      %1568 = vmatpush1.msra.mxu0 0.0
      %1569 = vmatprep.subr.mxu0 0.0
      %1570 = vmatpush1.msra.mxu0 0.0
      %1571 = vmatprep.subr.mxu0 0.0
      %1572 = vmatpush1.msra.mxu0 0.0
      %1573 = vmatprep.subr.mxu0 0.0
      %1574 = vmatpush1.msra.mxu0 0.0
      %1575 = vmatprep.subr.mxu0 0.0
      %1576 = vmatpush1.msra.mxu0 0.0
      %1577 = vmatprep.subr.mxu0 0.0
      %1578 = vmatpush1.msra.mxu0 0.0
      %1579 = vmatprep.subr.mxu0 0.0
      %1580 = vmatpush1.msra.mxu0 0.0
      %1581 = vmatprep.subr.mxu0 0.0
      %1582 = vmatpush1.msra.mxu0 0.0
      %1583 = vmatprep.subr.mxu0 0.0
      %1584 = vmatpush1.msra.mxu0 0.0
      %1585 = vmatprep.subr.mxu0 0.0
      %1586 = vmatpush1.msra.mxu0 0.0
      %1587 = vmatprep.subr.mxu0 0.0
      %1588 = vmatpush1.msra.mxu0 0.0
      %1589 = vmatprep.subr.mxu0 0.0
      %1590 = vmatpush1.msra.mxu0 0.0
      %1591 = vmatprep.subr.mxu0 0.0
      %1592 = vmatpush1.msra.mxu0 %v1559
      %1593 = vmatprep.subr.mxu0 0.0
      %1594 = vmatpush2.msra.mxu0 0.0
      %1595 = vmatprep.subr.mxu0 0.0
      %1596 = vmatpush2.msra.mxu0 0.0
      %1597 = vmatprep.subr.mxu0 0.0
      %1598 = vmatpush2.msra.mxu0 0.0
      %1599 = vmatprep.subr.mxu0 0.0
      %1600 = vmatpush2.msra.mxu0 0.0
      %1601 = vmatprep.subr.mxu0 0.0
      %1602 = vmatpush2.msra.mxu0 0.0
      %1603 = vmatprep.subr.mxu0 0.0
      %1604 = vmatpush2.msra.mxu0 0.0
      %1605 = vmatprep.subr.mxu0 0.0
      %1606 = vmatpush2.msra.mxu0 0.0
      %1607 = vmatprep.subr.mxu0 0.0
      %1608 = vmatpush2.msra.mxu0 0.0
      %1609 = vmatprep.subr.mxu0 0.0
      %1610 = vmatpush2.msra.mxu0 0.0
      %1611 = vmatprep.subr.mxu0 0.0
      %1612 = vmatpush2.msra.mxu0 0.0
      %1613 = vmatprep.subr.mxu0 0.0
      %1614 = vmatpush2.msra.mxu0 0.0
      %1615 = vmatprep.subr.mxu0 0.0
      %1616 = vmatpush2.msra.mxu0 0.0
      %1617 = vmatprep.subr.mxu0 0.0
      %1618 = vmatpush2.msra.mxu0 0.0
      %1619 = vmatprep.subr.mxu0 0.0
      %1620 = vmatpush2.msra.mxu0 0.0
      %1621 = vmatprep.subr.mxu0 0.0
      %1622 = vmatpush2.msra.mxu0 0.0
      %1623 = vmatprep.subr.mxu0 0.0
      %1624 = vmatpush2.msra.mxu0 0.0
      %1625 = vmatprep.mubr.f32.mxu0 0.0
      %1626 = vmatmul.mubr.f32.gmra.mxu0 %v1299
      %v1627 = vpop.f32.mrf.mxu0
      %v1628 = vadd.f32 0.0, %v1627
      %v1629 = vpop.f32.mrf.mxu0
      %1630 = vmatprep.mubr.f32.mxu0 0.0
      %1631 = vmatmul.mubr.f32.gmra.mxu0 %v1302
      %v1632 = vpop.f32.mrf.mxu0
      %v1633 = vadd.f32 0.0, %v1632
      %v1634 = vpop.f32.mrf.mxu0
      %1635 = vdwg.mxu0
      %v1636 = vadd.f32 %v1549, %v1628
      %v1637 = vadd.f32 %v1554, %v1633
      %v1638 = vld [vmem:[%s19] sm:$0x1]
      %v1640 = vlaneseq
      %v1641 = vshrl.u32 %v1640, 7
      %v1642 = vsub.s32 0, %v1641
      %v1643 = vrot.slane %v1638, %v1642
      %v1645 = vadd.f32 %v1636, %v1643
      %v1646 = vadd.f32 %v1637, %v1643
      %v1647 = vld [vmem:[%s4] sm:$0x1]
      %v1649 = vlaneseq
      %v1650 = vshrl.u32 %v1649, 7
      %v1651 = vsub.s32 0, %v1650
      %v1652 = vrot.slane %v1647, %v1651
      %v1654 = vadd.f32 %v1549, %v1652
      %v1655 = vadd.f32 %v1554, %v1652
      %v1656 = vmul.f32 %v1645, 0.999995
      %v1657 = vmul.f32 %v1646, 0.999995
      %v1658 = vmul.f32 %v1654, 0.999995
      %v1659 = vmul.f32 %v1655, 0.999995
      %v1660 = vmax.f32 %v1656, 0.0
      %v1661 = vmax.f32 %v1657, 0.0
      %v1662 = vmax.f32 %v1658, 0.0
      %v1663 = vmax.f32 %v1659, 0.0
      %v1664 = vld [vmem:[%s20] sm:$0xff]
      %v1665 = vld [vmem:[%s20 + $0x8] sm:$0xff]
      %v1666 = vld [vmem:[%s20 + $0x10] sm:$0xff]
      %v1667 = vld [vmem:[%s20 + $0x18] sm:$0xff]
      %v1668 = vld [vmem:[%s21] sm:$0x1]
      %v1670 = vlaneseq
      %v1671 = vshrl.u32 %v1670, 7
      %v1672 = vsub.s32 0, %v1671
      %v1673 = vrot.slane %v1668, %v1672
      %v1676 = vsel %vm890, %v1660, 0
      %v1679 = vsel %vm890, %v1661, 0
      %v1682 = vsel %vm890, %v1662, 0
      %v1685 = vsel %vm890, %v1663, 0
      %1687 = vmatprep.subr.mxu0 0.0
      %1688 = vmatpush1.msra.mxu0 0.0
      %1689 = vmatprep.subr.mxu0 0.0
      %1690 = vmatpush1.msra.mxu0 0.0
      %1691 = vmatprep.subr.mxu0 0.0
      %1692 = vmatpush1.msra.mxu0 0.0
      %1693 = vmatprep.subr.mxu0 0.0
      %1694 = vmatpush1.msra.mxu0 0.0
      %1695 = vmatprep.subr.mxu0 0.0
      %1696 = vmatpush1.msra.mxu0 0.0
      %1697 = vmatprep.subr.mxu0 0.0
      %1698 = vmatpush1.msra.mxu0 0.0
      %1699 = vmatprep.subr.mxu0 0.0
      %1700 = vmatpush1.msra.mxu0 0.0
      %1701 = vmatprep.subr.mxu0 0.0
      %1702 = vmatpush1.msra.mxu0 0.0
      %1703 = vmatprep.subr.mxu0 0.0
      %1704 = vmatpush1.msra.mxu0 0.0
      %1705 = vmatprep.subr.mxu0 0.0
      %1706 = vmatpush1.msra.mxu0 0.0
      %1707 = vmatprep.subr.mxu0 0.0
      %1708 = vmatpush1.msra.mxu0 0.0
      %1709 = vmatprep.subr.mxu0 0.0
      %1710 = vmatpush1.msra.mxu0 0.0
      %1711 = vmatprep.subr.mxu0 0.0
      %1712 = vmatpush1.msra.mxu0 %v1667
      %1713 = vmatprep.subr.mxu0 0.0
      %1714 = vmatpush1.msra.mxu0 %v1666
      %1715 = vmatprep.subr.mxu0 0.0
      %1716 = vmatpush1.msra.mxu0 %v1665
      %1717 = vmatprep.subr.mxu0 0.0
      %1718 = vmatpush1.msra.mxu0 %v1664
      %1719 = vmatprep.subr.mxu0 0.0
      %1720 = vmatpush2.msra.mxu0 0.0
      %1721 = vmatprep.subr.mxu0 0.0
      %1722 = vmatpush2.msra.mxu0 0.0
      %1723 = vmatprep.subr.mxu0 0.0
      %1724 = vmatpush2.msra.mxu0 0.0
      %1725 = vmatprep.subr.mxu0 0.0
      %1726 = vmatpush2.msra.mxu0 0.0
      %1727 = vmatprep.subr.mxu0 0.0
      %1728 = vmatpush2.msra.mxu0 0.0
      %1729 = vmatprep.subr.mxu0 0.0
      %1730 = vmatpush2.msra.mxu0 0.0
      %1731 = vmatprep.subr.mxu0 0.0
      %1732 = vmatpush2.msra.mxu0 0.0
      %1733 = vmatprep.subr.mxu0 0.0
      %1734 = vmatpush2.msra.mxu0 0.0
      %1735 = vmatprep.subr.mxu0 0.0
      %1736 = vmatpush2.msra.mxu0 0.0
      %1737 = vmatprep.subr.mxu0 0.0
      %1738 = vmatpush2.msra.mxu0 0.0
      %1739 = vmatprep.subr.mxu0 0.0
      %1740 = vmatpush2.msra.mxu0 0.0
      %1741 = vmatprep.subr.mxu0 0.0
      %1742 = vmatpush2.msra.mxu0 0.0
      %1743 = vmatprep.subr.mxu0 0.0
      %1744 = vmatpush2.msra.mxu0 0.0
      %1745 = vmatprep.subr.mxu0 0.0
      %1746 = vmatpush2.msra.mxu0 0.0
      %1747 = vmatprep.subr.mxu0 0.0
      %1748 = vmatpush2.msra.mxu0 0.0
      %1749 = vmatprep.subr.mxu0 0.0
      %1750 = vmatpush2.msra.mxu0 0.0
      %1751 = vmatprep.mubr.f32.mxu0 0.0
      %1752 = vmatmul.mubr.f32.gmra.mxu0 %v1676
      %v1753 = vpop.f32.mrf.mxu0
      %v1754 = vadd.f32 %v1673, %v1753
      %v1755 = vpop.f32.mrf.mxu0
      %1756 = vmatprep.mubr.f32.mxu0 0.0
      %1757 = vmatmul.mubr.f32.gmra.mxu0 %v1679
      %v1758 = vpop.f32.mrf.mxu0
      %v1759 = vadd.f32 %v1673, %v1758
      %v1760 = vpop.f32.mrf.mxu0
      %1761 = vmatprep.mubr.f32.mxu0 0.0
      %1762 = vmatmul.mubr.f32.gmra.mxu0 %v1682
      %v1763 = vpop.f32.mrf.mxu0
      %v1764 = vadd.f32 %v1673, %v1763
      %v1765 = vpop.f32.mrf.mxu0
      %1766 = vmatprep.mubr.f32.mxu0 0.0
      %1767 = vmatmul.mubr.f32.gmra.mxu0 %v1685
      %v1768 = vpop.f32.mrf.mxu0
      %v1769 = vadd.f32 %v1673, %v1768
      %v1770 = vpop.f32.mrf.mxu0
      %1771 = vdwg.mxu0
      %v1772 = vld [vmem:[%s22] sm:$0x1]
      %v1774 = vlaneseq
      %v1775 = vshrl.u32 %v1774, 7
      %v1776 = vsub.s32 0, %v1775
      %v1777 = vrot.slane %v1772, %v1776
      %v1779 = vmul.f32 %v1754, %v1777
      %v1780 = vmul.f32 %v1759, %v1777
      %v1781 = vmul.f32 %v1764, %v1777
      %v1782 = vmul.f32 %v1769, %v1777
      %v1783 = vld [vmem:[%s23] sm:$0xff]
      %v1784 = vld [vmem:[%s23 + $0x8] sm:$0xff]
      %v1785 = vld [vmem:[%s24] sm:$0x1]
      %v1787 = vlaneseq
      %v1788 = vshrl.u32 %v1787, 7
      %v1789 = vsub.s32 0, %v1788
      %v1790 = vrot.slane %v1785, %v1789
      %vm1792 = vcmask 130048
      %v1794 = vsel %vm1792, %v1779, 0
      %v1797 = vsel %vm1792, %v1780, 0
      %v1800 = vsel %vm1792, %v1781, 0
      %v1803 = vsel %vm1792, %v1782, 0
      %1805 = vmatprep.subr.mxu0 0.0
      %1806 = vmatpush1.msra.mxu0 0.0
      %1807 = vmatprep.subr.mxu0 0.0
      %1808 = vmatpush1.msra.mxu0 0.0
      %1809 = vmatprep.subr.mxu0 0.0
      %1810 = vmatpush1.msra.mxu0 0.0
      %1811 = vmatprep.subr.mxu0 0.0
      %1812 = vmatpush1.msra.mxu0 0.0
      %1813 = vmatprep.subr.mxu0 0.0
      %1814 = vmatpush1.msra.mxu0 0.0
      %1815 = vmatprep.subr.mxu0 0.0
      %1816 = vmatpush1.msra.mxu0 0.0
      %1817 = vmatprep.subr.mxu0 0.0
      %1818 = vmatpush1.msra.mxu0 0.0
      %1819 = vmatprep.subr.mxu0 0.0
      %1820 = vmatpush1.msra.mxu0 0.0
      %1821 = vmatprep.subr.mxu0 0.0
      %1822 = vmatpush1.msra.mxu0 0.0
      %1823 = vmatprep.subr.mxu0 0.0
      %1824 = vmatpush1.msra.mxu0 0.0
      %1825 = vmatprep.subr.mxu0 0.0
      %1826 = vmatpush1.msra.mxu0 0.0
      %1827 = vmatprep.subr.mxu0 0.0
      %1828 = vmatpush1.msra.mxu0 0.0
      %1829 = vmatprep.subr.mxu0 0.0
      %1830 = vmatpush1.msra.mxu0 0.0
      %1831 = vmatprep.subr.mxu0 0.0
      %1832 = vmatpush1.msra.mxu0 0.0
      %1833 = vmatprep.subr.mxu0 0.0
      %1834 = vmatpush1.msra.mxu0 %v1784
      %1835 = vmatprep.subr.mxu0 0.0
      %1836 = vmatpush1.msra.mxu0 %v1783
      %1837 = vmatprep.subr.mxu0 0.0
      %1838 = vmatpush2.msra.mxu0 0.0
      %1839 = vmatprep.subr.mxu0 0.0
      %1840 = vmatpush2.msra.mxu0 0.0
      %1841 = vmatprep.subr.mxu0 0.0
      %1842 = vmatpush2.msra.mxu0 0.0
      %1843 = vmatprep.subr.mxu0 0.0
      %1844 = vmatpush2.msra.mxu0 0.0
      %1845 = vmatprep.subr.mxu0 0.0
      %1846 = vmatpush2.msra.mxu0 0.0
      %1847 = vmatprep.subr.mxu0 0.0
      %1848 = vmatpush2.msra.mxu0 0.0
      %1849 = vmatprep.subr.mxu0 0.0
      %1850 = vmatpush2.msra.mxu0 0.0
      %1851 = vmatprep.subr.mxu0 0.0
      %1852 = vmatpush2.msra.mxu0 0.0
      %1853 = vmatprep.subr.mxu0 0.0
      %1854 = vmatpush2.msra.mxu0 0.0
      %1855 = vmatprep.subr.mxu0 0.0
      %1856 = vmatpush2.msra.mxu0 0.0
      %1857 = vmatprep.subr.mxu0 0.0
      %1858 = vmatpush2.msra.mxu0 0.0
      %1859 = vmatprep.subr.mxu0 0.0
      %1860 = vmatpush2.msra.mxu0 0.0
      %1861 = vmatprep.subr.mxu0 0.0
      %1862 = vmatpush2.msra.mxu0 0.0
      %1863 = vmatprep.subr.mxu0 0.0
      %1864 = vmatpush2.msra.mxu0 0.0
      %1865 = vmatprep.subr.mxu0 0.0
      %1866 = vmatpush2.msra.mxu0 0.0
      %1867 = vmatprep.subr.mxu0 0.0
      %1868 = vmatpush2.msra.mxu0 0.0
      %1869 = vmatprep.mubr.f32.mxu0 0.0
      %1870 = vmatmul.mubr.f32.gmra.mxu0 %v1794
      %v1871 = vpop.f32.mrf.mxu0
      %v1872 = vadd.f32 %v1790, %v1871
      %v1873 = vpop.f32.mrf.mxu0
      %1874 = vmatprep.mubr.f32.mxu0 0.0
      %1875 = vmatmul.mubr.f32.gmra.mxu0 %v1797
      %v1876 = vpop.f32.mrf.mxu0
      %v1877 = vadd.f32 %v1790, %v1876
      %v1878 = vpop.f32.mrf.mxu0
      %1879 = vmatprep.mubr.f32.mxu0 0.0
      %1880 = vmatmul.mubr.f32.gmra.mxu0 %v1800
      %v1881 = vpop.f32.mrf.mxu0
      %v1882 = vadd.f32 %v1790, %v1881
      %v1883 = vpop.f32.mrf.mxu0
      %1884 = vmatprep.mubr.f32.mxu0 0.0
      %1885 = vmatmul.mubr.f32.gmra.mxu0 %v1803
      %v1886 = vpop.f32.mrf.mxu0
      %v1887 = vadd.f32 %v1790, %v1886
      %v1888 = vpop.f32.mrf.mxu0
      %1889 = vdwg.mxu0
      %v1890 = vmul.f32 %v1872, 0.999995
      %v1891 = vmul.f32 %v1877, 0.999995
      %v1892 = vmul.f32 %v1882, 0.999995
      %v1893 = vmul.f32 %v1887, 0.999995
      %v1894 = vmax.f32 %v1890, 0.0
      %v1895 = vmax.f32 %v1891, 0.0
      %v1896 = vmax.f32 %v1892, 0.0
      %v1897 = vmax.f32 %v1893, 0.0
      %v1898 = vld [vmem:[%s25] sm:$0xff]
      %v1899 = vld [vmem:[%s25 + $0x8] sm:$0xff]
      %v1900 = vld [vmem:[%s25 + $0x10] sm:$0xff]
      %v1901 = vld [vmem:[%s25 + $0x18] sm:$0xff]
      %v1902 = vld [vmem:[#allocation2] sm:$0x1]
      %v1904 = vlaneseq
      %v1905 = vshrl.u32 %v1904, 7
      %v1906 = vsub.s32 0, %v1905
      %v1907 = vrot.slane %v1902, %v1906
      %v1910 = vsel %vm890, %v1894, 0
      %v1913 = vsel %vm890, %v1895, 0
      %v1916 = vsel %vm890, %v1896, 0
      %v1919 = vsel %vm890, %v1897, 0
      %1921 = vmatprep.subr.mxu0 0.0
      %1922 = vmatpush1.msra.mxu0 0.0
      %1923 = vmatprep.subr.mxu0 0.0
      %1924 = vmatpush1.msra.mxu0 0.0
      %1925 = vmatprep.subr.mxu0 0.0
      %1926 = vmatpush1.msra.mxu0 0.0
      %1927 = vmatprep.subr.mxu0 0.0
      %1928 = vmatpush1.msra.mxu0 0.0
      %1929 = vmatprep.subr.mxu0 0.0
      %1930 = vmatpush1.msra.mxu0 0.0
      %1931 = vmatprep.subr.mxu0 0.0
      %1932 = vmatpush1.msra.mxu0 0.0
      %1933 = vmatprep.subr.mxu0 0.0
      %1934 = vmatpush1.msra.mxu0 0.0
      %1935 = vmatprep.subr.mxu0 0.0
      %1936 = vmatpush1.msra.mxu0 0.0
      %1937 = vmatprep.subr.mxu0 0.0
      %1938 = vmatpush1.msra.mxu0 0.0
      %1939 = vmatprep.subr.mxu0 0.0
      %1940 = vmatpush1.msra.mxu0 0.0
      %1941 = vmatprep.subr.mxu0 0.0
      %1942 = vmatpush1.msra.mxu0 0.0
      %1943 = vmatprep.subr.mxu0 0.0
      %1944 = vmatpush1.msra.mxu0 0.0
      %1945 = vmatprep.subr.mxu0 0.0
      %1946 = vmatpush1.msra.mxu0 %v1901
      %1947 = vmatprep.subr.mxu0 0.0
      %1948 = vmatpush1.msra.mxu0 %v1900
      %1949 = vmatprep.subr.mxu0 0.0
      %1950 = vmatpush1.msra.mxu0 %v1899
      %1951 = vmatprep.subr.mxu0 0.0
      %1952 = vmatpush1.msra.mxu0 %v1898
      %1953 = vmatprep.subr.mxu0 0.0
      %1954 = vmatpush2.msra.mxu0 0.0
      %1955 = vmatprep.subr.mxu0 0.0
      %1956 = vmatpush2.msra.mxu0 0.0
      %1957 = vmatprep.subr.mxu0 0.0
      %1958 = vmatpush2.msra.mxu0 0.0
      %1959 = vmatprep.subr.mxu0 0.0
      %1960 = vmatpush2.msra.mxu0 0.0
      %1961 = vmatprep.subr.mxu0 0.0
      %1962 = vmatpush2.msra.mxu0 0.0
      %1963 = vmatprep.subr.mxu0 0.0
      %1964 = vmatpush2.msra.mxu0 0.0
      %1965 = vmatprep.subr.mxu0 0.0
      %1966 = vmatpush2.msra.mxu0 0.0
      %1967 = vmatprep.subr.mxu0 0.0
      %1968 = vmatpush2.msra.mxu0 0.0
      %1969 = vmatprep.subr.mxu0 0.0
      %1970 = vmatpush2.msra.mxu0 0.0
      %1971 = vmatprep.subr.mxu0 0.0
      %1972 = vmatpush2.msra.mxu0 0.0
      %1973 = vmatprep.subr.mxu0 0.0
      %1974 = vmatpush2.msra.mxu0 0.0
      %1975 = vmatprep.subr.mxu0 0.0
      %1976 = vmatpush2.msra.mxu0 0.0
      %1977 = vmatprep.subr.mxu0 0.0
      %1978 = vmatpush2.msra.mxu0 0.0
      %1979 = vmatprep.subr.mxu0 0.0
      %1980 = vmatpush2.msra.mxu0 0.0
      %1981 = vmatprep.subr.mxu0 0.0
      %1982 = vmatpush2.msra.mxu0 0.0
      %1983 = vmatprep.subr.mxu0 0.0
      %1984 = vmatpush2.msra.mxu0 0.0
      %1985 = vmatprep.mubr.f32.mxu0 0.0
      %1986 = vmatmul.mubr.f32.gmra.mxu0 %v1910
      %v1987 = vpop.f32.mrf.mxu0
      %v1988 = vadd.f32 %v1907, %v1987
      %v1989 = vpop.f32.mrf.mxu0
      %1990 = vmatprep.mubr.f32.mxu0 0.0
      %1991 = vmatmul.mubr.f32.gmra.mxu0 %v1913
      %v1992 = vpop.f32.mrf.mxu0
      %v1993 = vadd.f32 %v1907, %v1992
      %v1994 = vpop.f32.mrf.mxu0
      %1995 = vmatprep.mubr.f32.mxu0 0.0
      %1996 = vmatmul.mubr.f32.gmra.mxu0 %v1916
      %v1997 = vpop.f32.mrf.mxu0
      %v1998 = vadd.f32 %v1907, %v1997
      %v1999 = vpop.f32.mrf.mxu0
      %2000 = vmatprep.mubr.f32.mxu0 0.0
      %2001 = vmatmul.mubr.f32.gmra.mxu0 %v1919
      %v2002 = vpop.f32.mrf.mxu0
      %v2003 = vadd.f32 %v1907, %v2002
      %v2004 = vpop.f32.mrf.mxu0
      %2005 = vdwg.mxu0
      %v2006 = vxor.u32 %v1988, 2147483648
      %v2007 = vxor.u32 %v1993, 2147483648
      %v2008 = vxor.u32 %v1998, 2147483648
      %v2009 = vxor.u32 %v2003, 2147483648
      %v2010 = vmul.f32 %v2006, 1.442695
      %v2011 = vpow.pop %v2010
      %v2012 = vmul.f32 %v2007, 1.442695
      %v2013 = vpow.pop %v2012
      %v2014 = vmul.f32 %v2008, 1.442695
      %v2015 = vpow.pop %v2014
      %v2016 = vmul.f32 %v2009, 1.442695
      %v2017 = vpow.pop %v2016
      %v2018 = vadd.f32 %v2011, 1.0
      %v2019 = vadd.f32 %v2013, 1.0
      %v2020 = vadd.f32 %v2015, 1.0
      %v2021 = vadd.f32 %v2017, 1.0
      %v2022 = vrcp.pop %v2018
      %v2023 = vmul.f32 1.0, %v2022
      %v2024 = vrcp.pop %v2019
      %v2025 = vmul.f32 1.0, %v2024
      %v2026 = vrcp.pop %v2020
      %v2027 = vmul.f32 1.0, %v2026
      %v2028 = vrcp.pop %v2021
      %v2029 = vmul.f32 1.0, %v2028
      %2030 = vrot.lane.b32.xlu0 %v1096, 8
      %v2031 = vpop.permute.xlu0 %2030
      %2032 = vrot.lane.b32.xlu0 %v1097, 8
      %v2033 = vpop.permute.xlu0 %2032
      %2038 = vrot.lane.b32.xlu0 %v1280, 12
      %v2039 = vpop.permute.xlu0 %2038
      %2040 = vrot.lane.b32.xlu0 %v1285, 12
      %v2041 = vpop.permute.xlu0 %2040
      %2046 = vrot.lane.b32.xlu0 %v1470, 44
      %v2047 = vpop.permute.xlu0 %2046
      %2048 = vrot.lane.b32.xlu0 %v1475, 44
      %v2049 = vpop.permute.xlu0 %2048
      %2054 = vrot.lane.b32.xlu0 %v1754, 76
      %v2055 = vpop.permute.xlu0 %2054
      %2056 = vrot.lane.b32.xlu0 %v1759, 76
      %v2057 = vpop.permute.xlu0 %2056
      %2062 = vrot.lane.b32.xlu0 %v1764, 92
      %v2063 = vpop.permute.xlu0 %2062
      %2064 = vrot.lane.b32.xlu0 %v1769, 92
      %v2065 = vpop.permute.xlu0 %2064
      %2070 = vrot.lane.b32.xlu0 %v1988, 108
      %v2071 = vpop.permute.xlu0 %2070
      %2072 = vrot.lane.b32.xlu0 %v1993, 108
      %v2073 = vpop.permute.xlu0 %2072
      %2078 = vrot.lane.b32.xlu0 %v2023, 109
      %v2079 = vpop.permute.xlu0 %2078
      %2080 = vrot.lane.b32.xlu0 %v2025, 109
      %v2081 = vpop.permute.xlu0 %2080
      %2086 = vrot.lane.b32.xlu0 %v1998, 110
      %v2087 = vpop.permute.xlu0 %2086
      %2088 = vrot.lane.b32.xlu0 %v2003, 110
      %v2089 = vpop.permute.xlu0 %2088
      %2094 = vrot.lane.b32.xlu0 %v2027, 111
      %v2095 = vpop.permute.xlu0 %2094
      %2096 = vrot.lane.b32.xlu0 %v2029, 111
      %v2097 = vpop.permute.xlu0 %2096
      %v2100 = vsel %vm1106, %v1060, %v1074
      %v2101 = vsel %vm1106, %v1065, %v1075
      %vm2102 = vcmask 64512
      %v2103 = vsel %vm2102, %v2100, %v2031
      %v2104 = vsel %vm2102, %v2101, %v2033
      %vm2105 = vcmask 97280
      %v2106 = vsel %vm2105, %v2103, %v2039
      %v2107 = vsel %vm2105, %v2104, %v2041
      %vm2108 = vcmask 359424
      %v2109 = vsel %vm2108, %v2106, %v2047
      %v2110 = vsel %vm2108, %v2107, %v2049
      %vm2111 = vcmask 621568
      %v2112 = vsel %vm2111, %v2109, %v2055
      %v2113 = vsel %vm2111, %v2110, %v2057
      %vm2114 = vcmask 752640
      %v2115 = vsel %vm2114, %v2112, %v2063
      %v2116 = vsel %vm2114, %v2113, %v2065
      %vm2117 = vcmask 883712
      %v2118 = vsel %vm2117, %v2115, %v2071
      %v2119 = vsel %vm2117, %v2116, %v2073
      %vm2120 = vcmask 891904
      %v2121 = vsel %vm2120, %v2118, %v2079
      %v2122 = vsel %vm2120, %v2119, %v2081
      %vm2123 = vcmask 900096
      %v2124 = vsel %vm2123, %v2121, %v2087
      %v2125 = vsel %vm2123, %v2122, %v2089
      %vm2126 = vcmask 908288
      %v2127 = vsel %vm2126, %v2124, %v2095
      %v2128 = vsel %vm2126, %v2125, %v2097
      %vm2129 = vcmask 916480
      %v2130 = vsel %vm2129, %v2127, 0.0
      %v2131 = vsel %vm2129, %v2128, 0.0
      %2132 = vst [vmem:[%s866] sm:$0xff] %v2130
      %2133 = vst [vmem:[%s866 + $0x8] sm:$0xff] %v2131
      %s2134 = smul.u32 2, %s40
      %p2135 = scmp.lt.s32.totalorder %s2134, 7
      %s2136 = scalar_select %p2135, %s2134, 7
      %s2137 = smul.addr %s2136, 8
      %s2138 = scalar_lea.vmem %s27, %s2137
      // Predicated region
      $region129: #{dualvae_forward.3} parent=127 // pred_check
        %p2139 = pneg %p640
      $region130: #{dualvae_forward.3} parent=127 // pred_check_branch
        %2141 = sbr.rel (%p2139) target = $region132
      $region131: #{dualvae_forward.3} parent=127 // pred_region
        %s2142 = smul.u32 2, %s40
      $region132: #{dualvae_forward.3} parent=127 // pred_fallthru
        _
    $region128: #{dualvae_forward.3} parent=5 // pred_fallthru
      _
    %p2143 = scmp.le.s32.totalorder 2, %s35
    // Predicated region
    $region133: #{dualvae_forward.3} parent=5 // pred_check
      %p2144 = pneg %p2143
    $region134: #{dualvae_forward.3} parent=5 // pred_check_branch
      %2146 = sbr.rel (%p2144) target = $region136
    $region135: #{dualvae_forward.3} parent=5 // pred_region
      %s2147 = ssub.s32 %s35, 2
      // Predicated region
      $region137: #{dualvae_forward.3} parent=135 // pred_check
        %p2148 = pneg %p646
      $region138: #{dualvae_forward.3} parent=135 // pred_check_branch
        %2150 = sbr.rel (%p2148) target = $region140
      $region139: #{dualvae_forward.3} parent=135 // pred_region
        %s2151 = smul.u32 2, %s41
        %p2152 = scmp.lt.s32.totalorder %s2151, 7
        %s2153 = scalar_select %p2152, %s2151, 7
        %s2154 = smul.addr %s2153, 8
        %s2155 = scalar_lea.vmem %s27, %s2154
      $region140: #{dualvae_forward.3} parent=135 // pred_fallthru
        _
    $region136: #{dualvae_forward.3} parent=5 // pred_fallthru
      _
  $region6: #{dualvae_forward.3} parent=0 // loop_footer
    %s39 = sadd.s32 1, %s35
  $region7: #{dualvae_forward.3} parent=0 // loop_footer_branch
    %34 = sbr.rel target = $region3
  $region8: #{dualvae_forward.3} parent=0 // loop_exit
    _

</llo_original>
